<compile_context>
chip_gen: v7x
topology: tpu7x:2x2x1
jax: 0.10.0
libtpu: 0.0.40
codegen_flags: <defaults>
</compile_context>

<pallas_src>
import functools
import numpy as np

import jax
import jax.numpy as jnp
from jax.experimental import pallas as pl
from jax.experimental.pallas import tpu as pltpu


# ----------------------------------------------------------------------------
# Parameter construction (mirrors DoG.__init__ / MultiKernelConv2D.__init__)
# ----------------------------------------------------------------------------
def gaussian_kernel(sigma, size, norm=False):
    coords = np.arange(size) - size // 2
    xx, yy = np.meshgrid(coords, coords)
    k = np.exp(-(xx ** 2 + yy ** 2) / (2.0 * float(sigma) ** 2))
    if norm:
        k = k / k.sum()
    return k.astype(np.float32)


def build_dog_params(in_channels, p_channels, m_channels, kernel_size,
                     r_c, r_s, opponency, with_light_adapt):
    """Returns (per-conv input-channel index tuples, per-conv weight arrays)."""
    num_conv = bool(p_channels) + bool(m_channels)
    assert r_c.shape[0] == r_s.shape[0] == num_conv
    assert opponency.shape[0] == p_channels + m_channels

    multi_conv_in = ([np.arange(in_channels)] * bool(p_channels) +
                     [np.arange(in_channels, in_channels * 2)] * bool(m_channels))
    if (bool(m_channels) and not with_light_adapt) or p_channels == 0:
        multi_conv_in[-1] = np.arange(in_channels)

    out_ch = [p_channels] * bool(p_channels) + [m_channels] * bool(m_channels)
    weights = [np.zeros((oc, in_channels, kernel_size[c], kernel_size[c]), np.float32)
               for c, oc in enumerate(out_ch)]

    for i in range(p_channels + m_channels):
        # Robust version of the original `i // p_channels` / `i % p_channels`
        # (guards p_channels == 0 and m_channels > p_channels; identical otherwise).
        if p_channels and i < p_channels:
            conv_i, filter_i = 0, i
        else:
            conv_i, filter_i = int(bool(p_channels)), i - p_channels
        center = gaussian_kernel(sigma=r_c[conv_i] / np.sqrt(2),
                                 size=kernel_size[conv_i], norm=False)
        surround = gaussian_kernel(sigma=r_s[conv_i] / np.sqrt(2),
                                   size=kernel_size[conv_i], norm=False)
        filt = np.stack([c * center + s * surround
                         for c, s in zip(opponency[i][0], opponency[i][1])], axis=0)
        filt = filt / np.abs(filt.sum())
        weights[conv_i][filter_i] = filt

    in_idx = [tuple(int(v) for v in idx) for idx in multi_conv_in]
    return in_idx, weights


# ----------------------------------------------------------------------------
# Fused Pallas kernel: all convs, all output channels, one image per grid step
# ----------------------------------------------------------------------------
def _dog_fused_kernel(x_ref, w_ref, o_ref, *, conv_specs, TH, WL):
    # x_ref: (1, Cx, TH + 2*P, WL)  VMEM  - one reflect+lane-padded image
    # w_ref: (total_taps,)          SMEM  - all conv weights, flattened 1-D
    # o_ref: (1, Cout, TH, WL)      VMEM  - all fused output channels, lane-dense
    for (in_idx, k, off, out_base, out_cnt, w_base) in conv_specs:
        n_in = len(in_idx)
        accs = [jnp.zeros((TH, WL), jnp.float32) for _ in range(out_cnt)]
        for ci_pos, ci in enumerate(in_idx):
            for dy in range(k):
                # Hoist one (TH, WL) full-lane row block per (ci, dy); reused for
                # every dx tap and every output channel of this conv.
                row = x_ref[0, ci, off + dy:off + dy + TH, :]
                for dx in range(k):
                    shift = off + dx
                    # XLU lane rotate instead of a lane-unaligned slice. For every
                    # kept output column j < W we have j + off + dx < W + 2P <= WL,
                    # so the wrapped lanes only end up in the discarded padding.
                    shifted = row if shift == 0 else pltpu.roll(row, WL - shift, 1)
                    for co in range(out_cnt):
                        w = w_ref[w_base + ((co * n_in + ci_pos) * k + dy) * k + dx]
                        accs[co] = accs[co] + w * shifted
        for co in range(out_cnt):
            o_ref[0, out_base + co, :, :] = accs[co].astype(o_ref.dtype)


def dog_forward(x, in_idx, weights):
    """Fused DoG forward.  x: (N, Cx, H, W) f32 -> (N, sum(out_ch), H, W) f32."""
    N, Cx, H, W = x.shape
    ks = [int(w.shape[-1]) for w in weights]
    assert all(k % 2 == 1 for k in ks)
    kmax = max(ks)
    P = kmax // 2
    assert H > P and W > P, "reflect padding needs spatial dims > pad"

    # Reflect 'same' padding (glue), then zero-pad W so the last dim is a multiple
    # of 128 (lane-dense, unmasked loads/stores inside the kernel).
    xp = jnp.pad(x, ((0, 0), (0, 0), (P, P), (P, P)), mode="reflect")
    Wp = W + 2 * P
    WL = int(pl.cdiv(Wp, 128)) * 128
    xp = jnp.pad(xp, ((0, 0), (0, 0), (0, 0), (0, WL - Wp)))
    Hp = H + 2 * P

    # Flatten all conv weights into one 1-D SMEM table with static offsets.
    conv_specs, w_parts = [], []
    out_base, w_base = 0, 0
    for idx, w in zip(in_idx, weights):
        oc, cin, k, _ = w.shape
        assert cin == len(idx)
        conv_specs.append((tuple(idx), int(k), (kmax - k) // 2, out_base, int(oc), w_base))
        w_parts.append(np.asarray(w, np.float32).reshape(-1))
        out_base += int(oc)
        w_base += int(w.size)
    Cout = out_base
    w_flat = jnp.asarray(np.concatenate(w_parts))

    kernel = functools.partial(_dog_fused_kernel,
                               conv_specs=tuple(conv_specs), TH=H, WL=WL)

    y = pl.pallas_call(
        kernel,
        out_shape=jax.ShapeDtypeStruct((N, Cout, H, WL), x.dtype),
        grid=(N,),
        in_specs=[
            pl.BlockSpec((1, Cx, Hp, WL), lambda n: (n, 0, 0, 0)),
            pl.BlockSpec(memory_space=pltpu.MemorySpace.SMEM),
        ],
        out_specs=pl.BlockSpec((1, Cout, H, WL), lambda n: (n, 0, 0, 0)),
        compiler_params=pltpu.CompilerParams(
            dimension_semantics=("parallel",),
            vmem_limit_bytes=32 * 1024 * 1024),
    )(xp, w_flat)

    # Drop the lane padding.
    return y[..., :W]


# ----------------------------------------------------------------------------
# Pure numpy reference (sanity check)
# ----------------------------------------------------------------------------
def ref_conv2d_reflect(x, w):
    N, Cin, H, W = x.shape
    Cout, _, k, _ = w.shape
    pad = k // 2
    xp = np.pad(x, ((0, 0), (0, 0), (pad, pad), (pad, pad)), mode="reflect")
    out = np.zeros((N, Cout, H, W), np.float32)
    for n in range(N):
        for co in range(Cout):
            for ci in range(Cin):
                for dy in range(k):
                    for dx in range(k):
                        out[n, co] += w[co, ci, dy, dx] * xp[n, ci, dy:dy + H, dx:dx + W]
    return out


def ref_dog_forward(x_np, in_idx, weights):
    return np.concatenate(
        [ref_conv2d_reflect(x_np[:, np.asarray(idx)], np.asarray(w))
         for idx, w in zip(in_idx, weights)], axis=1)


if __name__ == "__main__":
    # Small DoG configuration (parvo + magno, with light adaptation).
    in_channels, p_channels, m_channels = 3, 4, 2
    kernel_size = [5, 3]
    with_light_adapt = True
    r_c = np.array([0.8, 1.2], np.float32)
    r_s = np.array([2.0, 3.0], np.float32)
    opponency = np.array(
        [
            [[1.0, -1.0, 0.0], [-0.5, 0.5, 0.0]],
            [[-1.0, 1.0, 0.0], [0.5, -0.5, 0.0]],
            [[0.0, 1.0, -1.0], [0.0, -0.5, 0.5]],
            [[1.0, 1.0, 1.0], [-0.3, -0.3, -0.3]],
            [[1.0, 1.0, 1.0], [-1.0, -1.0, -1.0]],
            [[0.5, 0.5, 0.5], [-0.2, -0.2, -0.2]],
        ],
        np.float32,
    )

    in_idx, weights = build_dog_params(
        in_channels, p_channels, m_channels, kernel_size,
        r_c, r_s, opponency, with_light_adapt)

    # Input: (N, 2*in_channels, H, W) -- parvo reads channels 0:3, magno reads 3:6.
    N, H, W = 2, 16, 16
    key = jax.random.PRNGKey(0)
    x = jax.random.normal(key, (N, 2 * in_channels, H, W), dtype=jnp.float32)

    y = dog_forward(x, in_idx, weights)
    y = jax.block_until_ready(y)
    assert y.shape == (N, p_channels + m_channels, H, W), y.shape

    # Sanity check against numpy reference (per-conv, reflect 'same' padding, concat).
    ref = ref_dog_forward(np.asarray(x), in_idx, weights)
    np.testing.assert_allclose(np.asarray(y), ref, rtol=1e-3, atol=1e-3)

    print("KERNEL_OK")
</pallas_src>

<mosaic_0001>
module attributes {stable_mosaic.version = 11 : i64} {
  func.func @_dog_fused_kernel(%arg0: i32, %arg1: memref<1x6x20x128xf32, #tpu.memory_space<vmem>>, %arg2: memref<354xf32, #tpu.memory_space<smem>>, %arg3: memref<1x6x16x128xf32, #tpu.memory_space<vmem>>) attributes {dimension_semantics = [#tpu.dimension_semantics<parallel>], iteration_bounds = array<i64: 2>, scalar_prefetch = 0 : i64, scratch_operands = 0 : i64, tpu.core_type = #tpu.core_type<tc>, window_params = [{transform_indices = @transform_0, window_bounds = array<i64: 1, 6, 20, 128>}, {transform_indices = @transform_1, window_bounds = array<i64: 354>}, {transform_indices = @transform_2, window_bounds = array<i64: 1, 6, 16, 128>}]} {
    %cst = arith.constant 0.000000e+00 : f32
    %0 = vector.broadcast %cst : f32 to vector<16x128xf32>
    %cst_0 = arith.constant 0.000000e+00 : f32
    %1 = vector.broadcast %cst_0 : f32 to vector<16x128xf32>
    %cst_1 = arith.constant 0.000000e+00 : f32
    %2 = vector.broadcast %cst_1 : f32 to vector<16x128xf32>
    %cst_2 = arith.constant 0.000000e+00 : f32
    %3 = vector.broadcast %cst_2 : f32 to vector<16x128xf32>
    %c0 = arith.constant 0 : index
    %c0_3 = arith.constant 0 : index
    %c0_4 = arith.constant 0 : index
    %c0_5 = arith.constant 0 : index
    %4 = vector.load %arg1[%c0, %c0_3, %c0_4, %c0_5] : memref<1x6x20x128xf32, #tpu.memory_space<vmem>>, vector<1x1x16x128xf32>
    %5 = vector.shape_cast %4 : vector<1x1x16x128xf32> to vector<16x128xf32>
    %c0_6 = arith.constant 0 : index
    %6 = memref.load %arg2[%c0_6] : memref<354xf32, #tpu.memory_space<smem>>
    %7 = vector.broadcast %6 : f32 to vector<16x128xf32>
    %8 = arith.mulf %7, %5 : vector<16x128xf32>
    %9 = arith.addf %0, %8 : vector<16x128xf32>
    %c75 = arith.constant 75 : index
    %10 = memref.load %arg2[%c75] : memref<354xf32, #tpu.memory_space<smem>>
    %11 = vector.broadcast %10 : f32 to vector<16x128xf32>
    %12 = arith.mulf %11, %5 : vector<16x128xf32>
    %13 = arith.addf %1, %12 : vector<16x128xf32>
    %c150 = arith.constant 150 : index
    %14 = memref.load %arg2[%c150] : memref<354xf32, #tpu.memory_space<smem>>
    %15 = vector.broadcast %14 : f32 to vector<16x128xf32>
    %16 = arith.mulf %15, %5 : vector<16x128xf32>
    %17 = arith.addf %2, %16 : vector<16x128xf32>
    %c225 = arith.constant 225 : index
    %18 = memref.load %arg2[%c225] : memref<354xf32, #tpu.memory_space<smem>>
    %19 = vector.broadcast %18 : f32 to vector<16x128xf32>
    %20 = arith.mulf %19, %5 : vector<16x128xf32>
    %21 = arith.addf %3, %20 : vector<16x128xf32>
    %c127_i32 = arith.constant 127 : i32
    %22 = tpu.dynamic_rotate %5 by %c127_i32 dim 1 : vector<16x128xf32>, i32 -> vector<16x128xf32>
    %c1 = arith.constant 1 : index
    %23 = memref.load %arg2[%c1] : memref<354xf32, #tpu.memory_space<smem>>
    %24 = vector.broadcast %23 : f32 to vector<16x128xf32>
    %25 = arith.mulf %24, %22 : vector<16x128xf32>
    %26 = arith.addf %9, %25 : vector<16x128xf32>
    %c76 = arith.constant 76 : index
    %27 = memref.load %arg2[%c76] : memref<354xf32, #tpu.memory_space<smem>>
    %28 = vector.broadcast %27 : f32 to vector<16x128xf32>
    %29 = arith.mulf %28, %22 : vector<16x128xf32>
    %30 = arith.addf %13, %29 : vector<16x128xf32>
    %c151 = arith.constant 151 : index
    %31 = memref.load %arg2[%c151] : memref<354xf32, #tpu.memory_space<smem>>
    %32 = vector.broadcast %31 : f32 to vector<16x128xf32>
    %33 = arith.mulf %32, %22 : vector<16x128xf32>
    %34 = arith.addf %17, %33 : vector<16x128xf32>
    %c226 = arith.constant 226 : index
    %35 = memref.load %arg2[%c226] : memref<354xf32, #tpu.memory_space<smem>>
    %36 = vector.broadcast %35 : f32 to vector<16x128xf32>
    %37 = arith.mulf %36, %22 : vector<16x128xf32>
    %38 = arith.addf %21, %37 : vector<16x128xf32>
    %c126_i32 = arith.constant 126 : i32
    %39 = tpu.dynamic_rotate %5 by %c126_i32 dim 1 : vector<16x128xf32>, i32 -> vector<16x128xf32>
    %c2 = arith.constant 2 : index
    %40 = memref.load %arg2[%c2] : memref<354xf32, #tpu.memory_space<smem>>
    %41 = vector.broadcast %40 : f32 to vector<16x128xf32>
    %42 = arith.mulf %41, %39 : vector<16x128xf32>
    %43 = arith.addf %26, %42 : vector<16x128xf32>
    %c77 = arith.constant 77 : index
    %44 = memref.load %arg2[%c77] : memref<354xf32, #tpu.memory_space<smem>>
    %45 = vector.broadcast %44 : f32 to vector<16x128xf32>
    %46 = arith.mulf %45, %39 : vector<16x128xf32>
    %47 = arith.addf %30, %46 : vector<16x128xf32>
    %c152 = arith.constant 152 : index
    %48 = memref.load %arg2[%c152] : memref<354xf32, #tpu.memory_space<smem>>
    %49 = vector.broadcast %48 : f32 to vector<16x128xf32>
    %50 = arith.mulf %49, %39 : vector<16x128xf32>
    %51 = arith.addf %34, %50 : vector<16x128xf32>
    %c227 = arith.constant 227 : index
    %52 = memref.load %arg2[%c227] : memref<354xf32, #tpu.memory_space<smem>>
    %53 = vector.broadcast %52 : f32 to vector<16x128xf32>
    %54 = arith.mulf %53, %39 : vector<16x128xf32>
    %55 = arith.addf %38, %54 : vector<16x128xf32>
    %c125_i32 = arith.constant 125 : i32
    %56 = tpu.dynamic_rotate %5 by %c125_i32 dim 1 : vector<16x128xf32>, i32 -> vector<16x128xf32>
    %c3 = arith.constant 3 : index
    %57 = memref.load %arg2[%c3] : memref<354xf32, #tpu.memory_space<smem>>
    %58 = vector.broadcast %57 : f32 to vector<16x128xf32>
    %59 = arith.mulf %58, %56 : vector<16x128xf32>
    %60 = arith.addf %43, %59 : vector<16x128xf32>
    %c78 = arith.constant 78 : index
    %61 = memref.load %arg2[%c78] : memref<354xf32, #tpu.memory_space<smem>>
    %62 = vector.broadcast %61 : f32 to vector<16x128xf32>
    %63 = arith.mulf %62, %56 : vector<16x128xf32>
    %64 = arith.addf %47, %63 : vector<16x128xf32>
    %c153 = arith.constant 153 : index
    %65 = memref.load %arg2[%c153] : memref<354xf32, #tpu.memory_space<smem>>
    %66 = vector.broadcast %65 : f32 to vector<16x128xf32>
    %67 = arith.mulf %66, %56 : vector<16x128xf32>
    %68 = arith.addf %51, %67 : vector<16x128xf32>
    %c228 = arith.constant 228 : index
    %69 = memref.load %arg2[%c228] : memref<354xf32, #tpu.memory_space<smem>>
    %70 = vector.broadcast %69 : f32 to vector<16x128xf32>
    %71 = arith.mulf %70, %56 : vector<16x128xf32>
    %72 = arith.addf %55, %71 : vector<16x128xf32>
    %c124_i32 = arith.constant 124 : i32
    %73 = tpu.dynamic_rotate %5 by %c124_i32 dim 1 : vector<16x128xf32>, i32 -> vector<16x128xf32>
    %c4 = arith.constant 4 : index
    %74 = memref.load %arg2[%c4] : memref<354xf32, #tpu.memory_space<smem>>
    %75 = vector.broadcast %74 : f32 to vector<16x128xf32>
    %76 = arith.mulf %75, %73 : vector<16x128xf32>
    %77 = arith.addf %60, %76 : vector<16x128xf32>
    %c79 = arith.constant 79 : index
    %78 = memref.load %arg2[%c79] : memref<354xf32, #tpu.memory_space<smem>>
    %79 = vector.broadcast %78 : f32 to vector<16x128xf32>
    %80 = arith.mulf %79, %73 : vector<16x128xf32>
    %81 = arith.addf %64, %80 : vector<16x128xf32>
    %c154 = arith.constant 154 : index
    %82 = memref.load %arg2[%c154] : memref<354xf32, #tpu.memory_space<smem>>
    %83 = vector.broadcast %82 : f32 to vector<16x128xf32>
    %84 = arith.mulf %83, %73 : vector<16x128xf32>
    %85 = arith.addf %68, %84 : vector<16x128xf32>
    %c229 = arith.constant 229 : index
    %86 = memref.load %arg2[%c229] : memref<354xf32, #tpu.memory_space<smem>>
    %87 = vector.broadcast %86 : f32 to vector<16x128xf32>
    %88 = arith.mulf %87, %73 : vector<16x128xf32>
    %89 = arith.addf %72, %88 : vector<16x128xf32>
    %c0_7 = arith.constant 0 : index
    %c0_8 = arith.constant 0 : index
    %c1_9 = arith.constant 1 : index
    %c0_10 = arith.constant 0 : index
    %90 = vector.load %arg1[%c0_7, %c0_8, %c1_9, %c0_10] : memref<1x6x20x128xf32, #tpu.memory_space<vmem>>, vector<1x1x16x128xf32>
    %91 = vector.shape_cast %90 : vector<1x1x16x128xf32> to vector<16x128xf32>
    %c5 = arith.constant 5 : index
    %92 = memref.load %arg2[%c5] : memref<354xf32, #tpu.memory_space<smem>>
    %93 = vector.broadcast %92 : f32 to vector<16x128xf32>
    %94 = arith.mulf %93, %91 : vector<16x128xf32>
    %95 = arith.addf %77, %94 : vector<16x128xf32>
    %c80 = arith.constant 80 : index
    %96 = memref.load %arg2[%c80] : memref<354xf32, #tpu.memory_space<smem>>
    %97 = vector.broadcast %96 : f32 to vector<16x128xf32>
    %98 = arith.mulf %97, %91 : vector<16x128xf32>
    %99 = arith.addf %81, %98 : vector<16x128xf32>
    %c155 = arith.constant 155 : index
    %100 = memref.load %arg2[%c155] : memref<354xf32, #tpu.memory_space<smem>>
    %101 = vector.broadcast %100 : f32 to vector<16x128xf32>
    %102 = arith.mulf %101, %91 : vector<16x128xf32>
    %103 = arith.addf %85, %102 : vector<16x128xf32>
    %c230 = arith.constant 230 : index
    %104 = memref.load %arg2[%c230] : memref<354xf32, #tpu.memory_space<smem>>
    %105 = vector.broadcast %104 : f32 to vector<16x128xf32>
    %106 = arith.mulf %105, %91 : vector<16x128xf32>
    %107 = arith.addf %89, %106 : vector<16x128xf32>
    %c127_i32_11 = arith.constant 127 : i32
    %108 = tpu.dynamic_rotate %91 by %c127_i32_11 dim 1 : vector<16x128xf32>, i32 -> vector<16x128xf32>
    %c6 = arith.constant 6 : index
    %109 = memref.load %arg2[%c6] : memref<354xf32, #tpu.memory_space<smem>>
    %110 = vector.broadcast %109 : f32 to vector<16x128xf32>
    %111 = arith.mulf %110, %108 : vector<16x128xf32>
    %112 = arith.addf %95, %111 : vector<16x128xf32>
    %c81 = arith.constant 81 : index
    %113 = memref.load %arg2[%c81] : memref<354xf32, #tpu.memory_space<smem>>
    %114 = vector.broadcast %113 : f32 to vector<16x128xf32>
    %115 = arith.mulf %114, %108 : vector<16x128xf32>
    %116 = arith.addf %99, %115 : vector<16x128xf32>
    %c156 = arith.constant 156 : index
    %117 = memref.load %arg2[%c156] : memref<354xf32, #tpu.memory_space<smem>>
    %118 = vector.broadcast %117 : f32 to vector<16x128xf32>
    %119 = arith.mulf %118, %108 : vector<16x128xf32>
    %120 = arith.addf %103, %119 : vector<16x128xf32>
    %c231 = arith.constant 231 : index
    %121 = memref.load %arg2[%c231] : memref<354xf32, #tpu.memory_space<smem>>
    %122 = vector.broadcast %121 : f32 to vector<16x128xf32>
    %123 = arith.mulf %122, %108 : vector<16x128xf32>
    %124 = arith.addf %107, %123 : vector<16x128xf32>
    %c126_i32_12 = arith.constant 126 : i32
    %125 = tpu.dynamic_rotate %91 by %c126_i32_12 dim 1 : vector<16x128xf32>, i32 -> vector<16x128xf32>
    %c7 = arith.constant 7 : index
    %126 = memref.load %arg2[%c7] : memref<354xf32, #tpu.memory_space<smem>>
    %127 = vector.broadcast %126 : f32 to vector<16x128xf32>
    %128 = arith.mulf %127, %125 : vector<16x128xf32>
    %129 = arith.addf %112, %128 : vector<16x128xf32>
    %c82 = arith.constant 82 : index
    %130 = memref.load %arg2[%c82] : memref<354xf32, #tpu.memory_space<smem>>
    %131 = vector.broadcast %130 : f32 to vector<16x128xf32>
    %132 = arith.mulf %131, %125 : vector<16x128xf32>
    %133 = arith.addf %116, %132 : vector<16x128xf32>
    %c157 = arith.constant 157 : index
    %134 = memref.load %arg2[%c157] : memref<354xf32, #tpu.memory_space<smem>>
    %135 = vector.broadcast %134 : f32 to vector<16x128xf32>
    %136 = arith.mulf %135, %125 : vector<16x128xf32>
    %137 = arith.addf %120, %136 : vector<16x128xf32>
    %c232 = arith.constant 232 : index
    %138 = memref.load %arg2[%c232] : memref<354xf32, #tpu.memory_space<smem>>
    %139 = vector.broadcast %138 : f32 to vector<16x128xf32>
    %140 = arith.mulf %139, %125 : vector<16x128xf32>
    %141 = arith.addf %124, %140 : vector<16x128xf32>
    %c125_i32_13 = arith.constant 125 : i32
    %142 = tpu.dynamic_rotate %91 by %c125_i32_13 dim 1 : vector<16x128xf32>, i32 -> vector<16x128xf32>
    %c8 = arith.constant 8 : index
    %143 = memref.load %arg2[%c8] : memref<354xf32, #tpu.memory_space<smem>>
    %144 = vector.broadcast %143 : f32 to vector<16x128xf32>
    %145 = arith.mulf %144, %142 : vector<16x128xf32>
    %146 = arith.addf %129, %145 : vector<16x128xf32>
    %c83 = arith.constant 83 : index
    %147 = memref.load %arg2[%c83] : memref<354xf32, #tpu.memory_space<smem>>
    %148 = vector.broadcast %147 : f32 to vector<16x128xf32>
    %149 = arith.mulf %148, %142 : vector<16x128xf32>
    %150 = arith.addf %133, %149 : vector<16x128xf32>
    %c158 = arith.constant 158 : index
    %151 = memref.load %arg2[%c158] : memref<354xf32, #tpu.memory_space<smem>>
    %152 = vector.broadcast %151 : f32 to vector<16x128xf32>
    %153 = arith.mulf %152, %142 : vector<16x128xf32>
    %154 = arith.addf %137, %153 : vector<16x128xf32>
    %c233 = arith.constant 233 : index
    %155 = memref.load %arg2[%c233] : memref<354xf32, #tpu.memory_space<smem>>
    %156 = vector.broadcast %155 : f32 to vector<16x128xf32>
    %157 = arith.mulf %156, %142 : vector<16x128xf32>
    %158 = arith.addf %141, %157 : vector<16x128xf32>
    %c124_i32_14 = arith.constant 124 : i32
    %159 = tpu.dynamic_rotate %91 by %c124_i32_14 dim 1 : vector<16x128xf32>, i32 -> vector<16x128xf32>
    %c9 = arith.constant 9 : index
    %160 = memref.load %arg2[%c9] : memref<354xf32, #tpu.memory_space<smem>>
    %161 = vector.broadcast %160 : f32 to vector<16x128xf32>
    %162 = arith.mulf %161, %159 : vector<16x128xf32>
    %163 = arith.addf %146, %162 : vector<16x128xf32>
    %c84 = arith.constant 84 : index
    %164 = memref.load %arg2[%c84] : memref<354xf32, #tpu.memory_space<smem>>
    %165 = vector.broadcast %164 : f32 to vector<16x128xf32>
    %166 = arith.mulf %165, %159 : vector<16x128xf32>
    %167 = arith.addf %150, %166 : vector<16x128xf32>
    %c159 = arith.constant 159 : index
    %168 = memref.load %arg2[%c159] : memref<354xf32, #tpu.memory_space<smem>>
    %169 = vector.broadcast %168 : f32 to vector<16x128xf32>
    %170 = arith.mulf %169, %159 : vector<16x128xf32>
    %171 = arith.addf %154, %170 : vector<16x128xf32>
    %c234 = arith.constant 234 : index
    %172 = memref.load %arg2[%c234] : memref<354xf32, #tpu.memory_space<smem>>
    %173 = vector.broadcast %172 : f32 to vector<16x128xf32>
    %174 = arith.mulf %173, %159 : vector<16x128xf32>
    %175 = arith.addf %158, %174 : vector<16x128xf32>
    %c0_15 = arith.constant 0 : index
    %c0_16 = arith.constant 0 : index
    %c2_17 = arith.constant 2 : index
    %c0_18 = arith.constant 0 : index
    %176 = vector.load %arg1[%c0_15, %c0_16, %c2_17, %c0_18] : memref<1x6x20x128xf32, #tpu.memory_space<vmem>>, vector<1x1x16x128xf32>
    %177 = vector.shape_cast %176 : vector<1x1x16x128xf32> to vector<16x128xf32>
    %c10 = arith.constant 10 : index
    %178 = memref.load %arg2[%c10] : memref<354xf32, #tpu.memory_space<smem>>
    %179 = vector.broadcast %178 : f32 to vector<16x128xf32>
    %180 = arith.mulf %179, %177 : vector<16x128xf32>
    %181 = arith.addf %163, %180 : vector<16x128xf32>
    %c85 = arith.constant 85 : index
    %182 = memref.load %arg2[%c85] : memref<354xf32, #tpu.memory_space<smem>>
    %183 = vector.broadcast %182 : f32 to vector<16x128xf32>
    %184 = arith.mulf %183, %177 : vector<16x128xf32>
    %185 = arith.addf %167, %184 : vector<16x128xf32>
    %c160 = arith.constant 160 : index
    %186 = memref.load %arg2[%c160] : memref<354xf32, #tpu.memory_space<smem>>
    %187 = vector.broadcast %186 : f32 to vector<16x128xf32>
    %188 = arith.mulf %187, %177 : vector<16x128xf32>
    %189 = arith.addf %171, %188 : vector<16x128xf32>
    %c235 = arith.constant 235 : index
    %190 = memref.load %arg2[%c235] : memref<354xf32, #tpu.memory_space<smem>>
    %191 = vector.broadcast %190 : f32 to vector<16x128xf32>
    %192 = arith.mulf %191, %177 : vector<16x128xf32>
    %193 = arith.addf %175, %192 : vector<16x128xf32>
    %c127_i32_19 = arith.constant 127 : i32
    %194 = tpu.dynamic_rotate %177 by %c127_i32_19 dim 1 : vector<16x128xf32>, i32 -> vector<16x128xf32>
    %c11 = arith.constant 11 : index
    %195 = memref.load %arg2[%c11] : memref<354xf32, #tpu.memory_space<smem>>
    %196 = vector.broadcast %195 : f32 to vector<16x128xf32>
    %197 = arith.mulf %196, %194 : vector<16x128xf32>
    %198 = arith.addf %181, %197 : vector<16x128xf32>
    %c86 = arith.constant 86 : index
    %199 = memref.load %arg2[%c86] : memref<354xf32, #tpu.memory_space<smem>>
    %200 = vector.broadcast %199 : f32 to vector<16x128xf32>
    %201 = arith.mulf %200, %194 : vector<16x128xf32>
    %202 = arith.addf %185, %201 : vector<16x128xf32>
    %c161 = arith.constant 161 : index
    %203 = memref.load %arg2[%c161] : memref<354xf32, #tpu.memory_space<smem>>
    %204 = vector.broadcast %203 : f32 to vector<16x128xf32>
    %205 = arith.mulf %204, %194 : vector<16x128xf32>
    %206 = arith.addf %189, %205 : vector<16x128xf32>
    %c236 = arith.constant 236 : index
    %207 = memref.load %arg2[%c236] : memref<354xf32, #tpu.memory_space<smem>>
    %208 = vector.broadcast %207 : f32 to vector<16x128xf32>
    %209 = arith.mulf %208, %194 : vector<16x128xf32>
    %210 = arith.addf %193, %209 : vector<16x128xf32>
    %c126_i32_20 = arith.constant 126 : i32
    %211 = tpu.dynamic_rotate %177 by %c126_i32_20 dim 1 : vector<16x128xf32>, i32 -> vector<16x128xf32>
    %c12 = arith.constant 12 : index
    %212 = memref.load %arg2[%c12] : memref<354xf32, #tpu.memory_space<smem>>
    %213 = vector.broadcast %212 : f32 to vector<16x128xf32>
    %214 = arith.mulf %213, %211 : vector<16x128xf32>
    %215 = arith.addf %198, %214 : vector<16x128xf32>
    %c87 = arith.constant 87 : index
    %216 = memref.load %arg2[%c87] : memref<354xf32, #tpu.memory_space<smem>>
    %217 = vector.broadcast %216 : f32 to vector<16x128xf32>
    %218 = arith.mulf %217, %211 : vector<16x128xf32>
    %219 = arith.addf %202, %218 : vector<16x128xf32>
    %c162 = arith.constant 162 : index
    %220 = memref.load %arg2[%c162] : memref<354xf32, #tpu.memory_space<smem>>
    %221 = vector.broadcast %220 : f32 to vector<16x128xf32>
    %222 = arith.mulf %221, %211 : vector<16x128xf32>
    %223 = arith.addf %206, %222 : vector<16x128xf32>
    %c237 = arith.constant 237 : index
    %224 = memref.load %arg2[%c237] : memref<354xf32, #tpu.memory_space<smem>>
    %225 = vector.broadcast %224 : f32 to vector<16x128xf32>
    %226 = arith.mulf %225, %211 : vector<16x128xf32>
    %227 = arith.addf %210, %226 : vector<16x128xf32>
    %c125_i32_21 = arith.constant 125 : i32
    %228 = tpu.dynamic_rotate %177 by %c125_i32_21 dim 1 : vector<16x128xf32>, i32 -> vector<16x128xf32>
    %c13 = arith.constant 13 : index
    %229 = memref.load %arg2[%c13] : memref<354xf32, #tpu.memory_space<smem>>
    %230 = vector.broadcast %229 : f32 to vector<16x128xf32>
    %231 = arith.mulf %230, %228 : vector<16x128xf32>
    %232 = arith.addf %215, %231 : vector<16x128xf32>
    %c88 = arith.constant 88 : index
    %233 = memref.load %arg2[%c88] : memref<354xf32, #tpu.memory_space<smem>>
    %234 = vector.broadcast %233 : f32 to vector<16x128xf32>
    %235 = arith.mulf %234, %228 : vector<16x128xf32>
    %236 = arith.addf %219, %235 : vector<16x128xf32>
    %c163 = arith.constant 163 : index
    %237 = memref.load %arg2[%c163] : memref<354xf32, #tpu.memory_space<smem>>
    %238 = vector.broadcast %237 : f32 to vector<16x128xf32>
    %239 = arith.mulf %238, %228 : vector<16x128xf32>
    %240 = arith.addf %223, %239 : vector<16x128xf32>
    %c238 = arith.constant 238 : index
    %241 = memref.load %arg2[%c238] : memref<354xf32, #tpu.memory_space<smem>>
    %242 = vector.broadcast %241 : f32 to vector<16x128xf32>
    %243 = arith.mulf %242, %228 : vector<16x128xf32>
    %244 = arith.addf %227, %243 : vector<16x128xf32>
    %c124_i32_22 = arith.constant 124 : i32
    %245 = tpu.dynamic_rotate %177 by %c124_i32_22 dim 1 : vector<16x128xf32>, i32 -> vector<16x128xf32>
    %c14 = arith.constant 14 : index
    %246 = memref.load %arg2[%c14] : memref<354xf32, #tpu.memory_space<smem>>
    %247 = vector.broadcast %246 : f32 to vector<16x128xf32>
    %248 = arith.mulf %247, %245 : vector<16x128xf32>
    %249 = arith.addf %232, %248 : vector<16x128xf32>
    %c89 = arith.constant 89 : index
    %250 = memref.load %arg2[%c89] : memref<354xf32, #tpu.memory_space<smem>>
    %251 = vector.broadcast %250 : f32 to vector<16x128xf32>
    %252 = arith.mulf %251, %245 : vector<16x128xf32>
    %253 = arith.addf %236, %252 : vector<16x128xf32>
    %c164 = arith.constant 164 : index
    %254 = memref.load %arg2[%c164] : memref<354xf32, #tpu.memory_space<smem>>
    %255 = vector.broadcast %254 : f32 to vector<16x128xf32>
    %256 = arith.mulf %255, %245 : vector<16x128xf32>
    %257 = arith.addf %240, %256 : vector<16x128xf32>
    %c239 = arith.constant 239 : index
    %258 = memref.load %arg2[%c239] : memref<354xf32, #tpu.memory_space<smem>>
    %259 = vector.broadcast %258 : f32 to vector<16x128xf32>
    %260 = arith.mulf %259, %245 : vector<16x128xf32>
    %261 = arith.addf %244, %260 : vector<16x128xf32>
    %c0_23 = arith.constant 0 : index
    %c0_24 = arith.constant 0 : index
    %c3_25 = arith.constant 3 : index
    %c0_26 = arith.constant 0 : index
    %262 = vector.load %arg1[%c0_23, %c0_24, %c3_25, %c0_26] : memref<1x6x20x128xf32, #tpu.memory_space<vmem>>, vector<1x1x16x128xf32>
    %263 = vector.shape_cast %262 : vector<1x1x16x128xf32> to vector<16x128xf32>
    %c15 = arith.constant 15 : index
    %264 = memref.load %arg2[%c15] : memref<354xf32, #tpu.memory_space<smem>>
    %265 = vector.broadcast %264 : f32 to vector<16x128xf32>
    %266 = arith.mulf %265, %263 : vector<16x128xf32>
    %267 = arith.addf %249, %266 : vector<16x128xf32>
    %c90 = arith.constant 90 : index
    %268 = memref.load %arg2[%c90] : memref<354xf32, #tpu.memory_space<smem>>
    %269 = vector.broadcast %268 : f32 to vector<16x128xf32>
    %270 = arith.mulf %269, %263 : vector<16x128xf32>
    %271 = arith.addf %253, %270 : vector<16x128xf32>
    %c165 = arith.constant 165 : index
    %272 = memref.load %arg2[%c165] : memref<354xf32, #tpu.memory_space<smem>>
    %273 = vector.broadcast %272 : f32 to vector<16x128xf32>
    %274 = arith.mulf %273, %263 : vector<16x128xf32>
    %275 = arith.addf %257, %274 : vector<16x128xf32>
    %c240 = arith.constant 240 : index
    %276 = memref.load %arg2[%c240] : memref<354xf32, #tpu.memory_space<smem>>
    %277 = vector.broadcast %276 : f32 to vector<16x128xf32>
    %278 = arith.mulf %277, %263 : vector<16x128xf32>
    %279 = arith.addf %261, %278 : vector<16x128xf32>
    %c127_i32_27 = arith.constant 127 : i32
    %280 = tpu.dynamic_rotate %263 by %c127_i32_27 dim 1 : vector<16x128xf32>, i32 -> vector<16x128xf32>
    %c16 = arith.constant 16 : index
    %281 = memref.load %arg2[%c16] : memref<354xf32, #tpu.memory_space<smem>>
    %282 = vector.broadcast %281 : f32 to vector<16x128xf32>
    %283 = arith.mulf %282, %280 : vector<16x128xf32>
    %284 = arith.addf %267, %283 : vector<16x128xf32>
    %c91 = arith.constant 91 : index
    %285 = memref.load %arg2[%c91] : memref<354xf32, #tpu.memory_space<smem>>
    %286 = vector.broadcast %285 : f32 to vector<16x128xf32>
    %287 = arith.mulf %286, %280 : vector<16x128xf32>
    %288 = arith.addf %271, %287 : vector<16x128xf32>
    %c166 = arith.constant 166 : index
    %289 = memref.load %arg2[%c166] : memref<354xf32, #tpu.memory_space<smem>>
    %290 = vector.broadcast %289 : f32 to vector<16x128xf32>
    %291 = arith.mulf %290, %280 : vector<16x128xf32>
    %292 = arith.addf %275, %291 : vector<16x128xf32>
    %c241 = arith.constant 241 : index
    %293 = memref.load %arg2[%c241] : memref<354xf32, #tpu.memory_space<smem>>
    %294 = vector.broadcast %293 : f32 to vector<16x128xf32>
    %295 = arith.mulf %294, %280 : vector<16x128xf32>
    %296 = arith.addf %279, %295 : vector<16x128xf32>
    %c126_i32_28 = arith.constant 126 : i32
    %297 = tpu.dynamic_rotate %263 by %c126_i32_28 dim 1 : vector<16x128xf32>, i32 -> vector<16x128xf32>
    %c17 = arith.constant 17 : index
    %298 = memref.load %arg2[%c17] : memref<354xf32, #tpu.memory_space<smem>>
    %299 = vector.broadcast %298 : f32 to vector<16x128xf32>
    %300 = arith.mulf %299, %297 : vector<16x128xf32>
    %301 = arith.addf %284, %300 : vector<16x128xf32>
    %c92 = arith.constant 92 : index
    %302 = memref.load %arg2[%c92] : memref<354xf32, #tpu.memory_space<smem>>
    %303 = vector.broadcast %302 : f32 to vector<16x128xf32>
    %304 = arith.mulf %303, %297 : vector<16x128xf32>
    %305 = arith.addf %288, %304 : vector<16x128xf32>
    %c167 = arith.constant 167 : index
    %306 = memref.load %arg2[%c167] : memref<354xf32, #tpu.memory_space<smem>>
    %307 = vector.broadcast %306 : f32 to vector<16x128xf32>
    %308 = arith.mulf %307, %297 : vector<16x128xf32>
    %309 = arith.addf %292, %308 : vector<16x128xf32>
    %c242 = arith.constant 242 : index
    %310 = memref.load %arg2[%c242] : memref<354xf32, #tpu.memory_space<smem>>
    %311 = vector.broadcast %310 : f32 to vector<16x128xf32>
    %312 = arith.mulf %311, %297 : vector<16x128xf32>
    %313 = arith.addf %296, %312 : vector<16x128xf32>
    %c125_i32_29 = arith.constant 125 : i32
    %314 = tpu.dynamic_rotate %263 by %c125_i32_29 dim 1 : vector<16x128xf32>, i32 -> vector<16x128xf32>
    %c18 = arith.constant 18 : index
    %315 = memref.load %arg2[%c18] : memref<354xf32, #tpu.memory_space<smem>>
    %316 = vector.broadcast %315 : f32 to vector<16x128xf32>
    %317 = arith.mulf %316, %314 : vector<16x128xf32>
    %318 = arith.addf %301, %317 : vector<16x128xf32>
    %c93 = arith.constant 93 : index
    %319 = memref.load %arg2[%c93] : memref<354xf32, #tpu.memory_space<smem>>
    %320 = vector.broadcast %319 : f32 to vector<16x128xf32>
    %321 = arith.mulf %320, %314 : vector<16x128xf32>
    %322 = arith.addf %305, %321 : vector<16x128xf32>
    %c168 = arith.constant 168 : index
    %323 = memref.load %arg2[%c168] : memref<354xf32, #tpu.memory_space<smem>>
    %324 = vector.broadcast %323 : f32 to vector<16x128xf32>
    %325 = arith.mulf %324, %314 : vector<16x128xf32>
    %326 = arith.addf %309, %325 : vector<16x128xf32>
    %c243 = arith.constant 243 : index
    %327 = memref.load %arg2[%c243] : memref<354xf32, #tpu.memory_space<smem>>
    %328 = vector.broadcast %327 : f32 to vector<16x128xf32>
    %329 = arith.mulf %328, %314 : vector<16x128xf32>
    %330 = arith.addf %313, %329 : vector<16x128xf32>
    %c124_i32_30 = arith.constant 124 : i32
    %331 = tpu.dynamic_rotate %263 by %c124_i32_30 dim 1 : vector<16x128xf32>, i32 -> vector<16x128xf32>
    %c19 = arith.constant 19 : index
    %332 = memref.load %arg2[%c19] : memref<354xf32, #tpu.memory_space<smem>>
    %333 = vector.broadcast %332 : f32 to vector<16x128xf32>
    %334 = arith.mulf %333, %331 : vector<16x128xf32>
    %335 = arith.addf %318, %334 : vector<16x128xf32>
    %c94 = arith.constant 94 : index
    %336 = memref.load %arg2[%c94] : memref<354xf32, #tpu.memory_space<smem>>
    %337 = vector.broadcast %336 : f32 to vector<16x128xf32>
    %338 = arith.mulf %337, %331 : vector<16x128xf32>
    %339 = arith.addf %322, %338 : vector<16x128xf32>
    %c169 = arith.constant 169 : index
    %340 = memref.load %arg2[%c169] : memref<354xf32, #tpu.memory_space<smem>>
    %341 = vector.broadcast %340 : f32 to vector<16x128xf32>
    %342 = arith.mulf %341, %331 : vector<16x128xf32>
    %343 = arith.addf %326, %342 : vector<16x128xf32>
    %c244 = arith.constant 244 : index
    %344 = memref.load %arg2[%c244] : memref<354xf32, #tpu.memory_space<smem>>
    %345 = vector.broadcast %344 : f32 to vector<16x128xf32>
    %346 = arith.mulf %345, %331 : vector<16x128xf32>
    %347 = arith.addf %330, %346 : vector<16x128xf32>
    %c0_31 = arith.constant 0 : index
    %c0_32 = arith.constant 0 : index
    %c4_33 = arith.constant 4 : index
    %c0_34 = arith.constant 0 : index
    %348 = vector.load %arg1[%c0_31, %c0_32, %c4_33, %c0_34] : memref<1x6x20x128xf32, #tpu.memory_space<vmem>>, vector<1x1x16x128xf32>
    %349 = vector.shape_cast %348 : vector<1x1x16x128xf32> to vector<16x128xf32>
    %c20 = arith.constant 20 : index
    %350 = memref.load %arg2[%c20] : memref<354xf32, #tpu.memory_space<smem>>
    %351 = vector.broadcast %350 : f32 to vector<16x128xf32>
    %352 = arith.mulf %351, %349 : vector<16x128xf32>
    %353 = arith.addf %335, %352 : vector<16x128xf32>
    %c95 = arith.constant 95 : index
    %354 = memref.load %arg2[%c95] : memref<354xf32, #tpu.memory_space<smem>>
    %355 = vector.broadcast %354 : f32 to vector<16x128xf32>
    %356 = arith.mulf %355, %349 : vector<16x128xf32>
    %357 = arith.addf %339, %356 : vector<16x128xf32>
    %c170 = arith.constant 170 : index
    %358 = memref.load %arg2[%c170] : memref<354xf32, #tpu.memory_space<smem>>
    %359 = vector.broadcast %358 : f32 to vector<16x128xf32>
    %360 = arith.mulf %359, %349 : vector<16x128xf32>
    %361 = arith.addf %343, %360 : vector<16x128xf32>
    %c245 = arith.constant 245 : index
    %362 = memref.load %arg2[%c245] : memref<354xf32, #tpu.memory_space<smem>>
    %363 = vector.broadcast %362 : f32 to vector<16x128xf32>
    %364 = arith.mulf %363, %349 : vector<16x128xf32>
    %365 = arith.addf %347, %364 : vector<16x128xf32>
    %c127_i32_35 = arith.constant 127 : i32
    %366 = tpu.dynamic_rotate %349 by %c127_i32_35 dim 1 : vector<16x128xf32>, i32 -> vector<16x128xf32>
    %c21 = arith.constant 21 : index
    %367 = memref.load %arg2[%c21] : memref<354xf32, #tpu.memory_space<smem>>
    %368 = vector.broadcast %367 : f32 to vector<16x128xf32>
    %369 = arith.mulf %368, %366 : vector<16x128xf32>
    %370 = arith.addf %353, %369 : vector<16x128xf32>
    %c96 = arith.constant 96 : index
    %371 = memref.load %arg2[%c96] : memref<354xf32, #tpu.memory_space<smem>>
    %372 = vector.broadcast %371 : f32 to vector<16x128xf32>
    %373 = arith.mulf %372, %366 : vector<16x128xf32>
    %374 = arith.addf %357, %373 : vector<16x128xf32>
    %c171 = arith.constant 171 : index
    %375 = memref.load %arg2[%c171] : memref<354xf32, #tpu.memory_space<smem>>
    %376 = vector.broadcast %375 : f32 to vector<16x128xf32>
    %377 = arith.mulf %376, %366 : vector<16x128xf32>
    %378 = arith.addf %361, %377 : vector<16x128xf32>
    %c246 = arith.constant 246 : index
    %379 = memref.load %arg2[%c246] : memref<354xf32, #tpu.memory_space<smem>>
    %380 = vector.broadcast %379 : f32 to vector<16x128xf32>
    %381 = arith.mulf %380, %366 : vector<16x128xf32>
    %382 = arith.addf %365, %381 : vector<16x128xf32>
    %c126_i32_36 = arith.constant 126 : i32
    %383 = tpu.dynamic_rotate %349 by %c126_i32_36 dim 1 : vector<16x128xf32>, i32 -> vector<16x128xf32>
    %c22 = arith.constant 22 : index
    %384 = memref.load %arg2[%c22] : memref<354xf32, #tpu.memory_space<smem>>
    %385 = vector.broadcast %384 : f32 to vector<16x128xf32>
    %386 = arith.mulf %385, %383 : vector<16x128xf32>
    %387 = arith.addf %370, %386 : vector<16x128xf32>
    %c97 = arith.constant 97 : index
    %388 = memref.load %arg2[%c97] : memref<354xf32, #tpu.memory_space<smem>>
    %389 = vector.broadcast %388 : f32 to vector<16x128xf32>
    %390 = arith.mulf %389, %383 : vector<16x128xf32>
    %391 = arith.addf %374, %390 : vector<16x128xf32>
    %c172 = arith.constant 172 : index
    %392 = memref.load %arg2[%c172] : memref<354xf32, #tpu.memory_space<smem>>
    %393 = vector.broadcast %392 : f32 to vector<16x128xf32>
    %394 = arith.mulf %393, %383 : vector<16x128xf32>
    %395 = arith.addf %378, %394 : vector<16x128xf32>
    %c247 = arith.constant 247 : index
    %396 = memref.load %arg2[%c247] : memref<354xf32, #tpu.memory_space<smem>>
    %397 = vector.broadcast %396 : f32 to vector<16x128xf32>
    %398 = arith.mulf %397, %383 : vector<16x128xf32>
    %399 = arith.addf %382, %398 : vector<16x128xf32>
    %c125_i32_37 = arith.constant 125 : i32
    %400 = tpu.dynamic_rotate %349 by %c125_i32_37 dim 1 : vector<16x128xf32>, i32 -> vector<16x128xf32>
    %c23 = arith.constant 23 : index
    %401 = memref.load %arg2[%c23] : memref<354xf32, #tpu.memory_space<smem>>
    %402 = vector.broadcast %401 : f32 to vector<16x128xf32>
    %403 = arith.mulf %402, %400 : vector<16x128xf32>
    %404 = arith.addf %387, %403 : vector<16x128xf32>
    %c98 = arith.constant 98 : index
    %405 = memref.load %arg2[%c98] : memref<354xf32, #tpu.memory_space<smem>>
    %406 = vector.broadcast %405 : f32 to vector<16x128xf32>
    %407 = arith.mulf %406, %400 : vector<16x128xf32>
    %408 = arith.addf %391, %407 : vector<16x128xf32>
    %c173 = arith.constant 173 : index
    %409 = memref.load %arg2[%c173] : memref<354xf32, #tpu.memory_space<smem>>
    %410 = vector.broadcast %409 : f32 to vector<16x128xf32>
    %411 = arith.mulf %410, %400 : vector<16x128xf32>
    %412 = arith.addf %395, %411 : vector<16x128xf32>
    %c248 = arith.constant 248 : index
    %413 = memref.load %arg2[%c248] : memref<354xf32, #tpu.memory_space<smem>>
    %414 = vector.broadcast %413 : f32 to vector<16x128xf32>
    %415 = arith.mulf %414, %400 : vector<16x128xf32>
    %416 = arith.addf %399, %415 : vector<16x128xf32>
    %c124_i32_38 = arith.constant 124 : i32
    %417 = tpu.dynamic_rotate %349 by %c124_i32_38 dim 1 : vector<16x128xf32>, i32 -> vector<16x128xf32>
    %c24 = arith.constant 24 : index
    %418 = memref.load %arg2[%c24] : memref<354xf32, #tpu.memory_space<smem>>
    %419 = vector.broadcast %418 : f32 to vector<16x128xf32>
    %420 = arith.mulf %419, %417 : vector<16x128xf32>
    %421 = arith.addf %404, %420 : vector<16x128xf32>
    %c99 = arith.constant 99 : index
    %422 = memref.load %arg2[%c99] : memref<354xf32, #tpu.memory_space<smem>>
    %423 = vector.broadcast %422 : f32 to vector<16x128xf32>
    %424 = arith.mulf %423, %417 : vector<16x128xf32>
    %425 = arith.addf %408, %424 : vector<16x128xf32>
    %c174 = arith.constant 174 : index
    %426 = memref.load %arg2[%c174] : memref<354xf32, #tpu.memory_space<smem>>
    %427 = vector.broadcast %426 : f32 to vector<16x128xf32>
    %428 = arith.mulf %427, %417 : vector<16x128xf32>
    %429 = arith.addf %412, %428 : vector<16x128xf32>
    %c249 = arith.constant 249 : index
    %430 = memref.load %arg2[%c249] : memref<354xf32, #tpu.memory_space<smem>>
    %431 = vector.broadcast %430 : f32 to vector<16x128xf32>
    %432 = arith.mulf %431, %417 : vector<16x128xf32>
    %433 = arith.addf %416, %432 : vector<16x128xf32>
    %c0_39 = arith.constant 0 : index
    %c1_40 = arith.constant 1 : index
    %c0_41 = arith.constant 0 : index
    %c0_42 = arith.constant 0 : index
    %434 = vector.load %arg1[%c0_39, %c1_40, %c0_41, %c0_42] : memref<1x6x20x128xf32, #tpu.memory_space<vmem>>, vector<1x1x16x128xf32>
    %435 = vector.shape_cast %434 : vector<1x1x16x128xf32> to vector<16x128xf32>
    %c25 = arith.constant 25 : index
    %436 = memref.load %arg2[%c25] : memref<354xf32, #tpu.memory_space<smem>>
    %437 = vector.broadcast %436 : f32 to vector<16x128xf32>
    %438 = arith.mulf %437, %435 : vector<16x128xf32>
    %439 = arith.addf %421, %438 : vector<16x128xf32>
    %c100 = arith.constant 100 : index
    %440 = memref.load %arg2[%c100] : memref<354xf32, #tpu.memory_space<smem>>
    %441 = vector.broadcast %440 : f32 to vector<16x128xf32>
    %442 = arith.mulf %441, %435 : vector<16x128xf32>
    %443 = arith.addf %425, %442 : vector<16x128xf32>
    %c175 = arith.constant 175 : index
    %444 = memref.load %arg2[%c175] : memref<354xf32, #tpu.memory_space<smem>>
    %445 = vector.broadcast %444 : f32 to vector<16x128xf32>
    %446 = arith.mulf %445, %435 : vector<16x128xf32>
    %447 = arith.addf %429, %446 : vector<16x128xf32>
    %c250 = arith.constant 250 : index
    %448 = memref.load %arg2[%c250] : memref<354xf32, #tpu.memory_space<smem>>
    %449 = vector.broadcast %448 : f32 to vector<16x128xf32>
    %450 = arith.mulf %449, %435 : vector<16x128xf32>
    %451 = arith.addf %433, %450 : vector<16x128xf32>
    %c127_i32_43 = arith.constant 127 : i32
    %452 = tpu.dynamic_rotate %435 by %c127_i32_43 dim 1 : vector<16x128xf32>, i32 -> vector<16x128xf32>
    %c26 = arith.constant 26 : index
    %453 = memref.load %arg2[%c26] : memref<354xf32, #tpu.memory_space<smem>>
    %454 = vector.broadcast %453 : f32 to vector<16x128xf32>
    %455 = arith.mulf %454, %452 : vector<16x128xf32>
    %456 = arith.addf %439, %455 : vector<16x128xf32>
    %c101 = arith.constant 101 : index
    %457 = memref.load %arg2[%c101] : memref<354xf32, #tpu.memory_space<smem>>
    %458 = vector.broadcast %457 : f32 to vector<16x128xf32>
    %459 = arith.mulf %458, %452 : vector<16x128xf32>
    %460 = arith.addf %443, %459 : vector<16x128xf32>
    %c176 = arith.constant 176 : index
    %461 = memref.load %arg2[%c176] : memref<354xf32, #tpu.memory_space<smem>>
    %462 = vector.broadcast %461 : f32 to vector<16x128xf32>
    %463 = arith.mulf %462, %452 : vector<16x128xf32>
    %464 = arith.addf %447, %463 : vector<16x128xf32>
    %c251 = arith.constant 251 : index
    %465 = memref.load %arg2[%c251] : memref<354xf32, #tpu.memory_space<smem>>
    %466 = vector.broadcast %465 : f32 to vector<16x128xf32>
    %467 = arith.mulf %466, %452 : vector<16x128xf32>
    %468 = arith.addf %451, %467 : vector<16x128xf32>
    %c126_i32_44 = arith.constant 126 : i32
    %469 = tpu.dynamic_rotate %435 by %c126_i32_44 dim 1 : vector<16x128xf32>, i32 -> vector<16x128xf32>
    %c27 = arith.constant 27 : index
    %470 = memref.load %arg2[%c27] : memref<354xf32, #tpu.memory_space<smem>>
    %471 = vector.broadcast %470 : f32 to vector<16x128xf32>
    %472 = arith.mulf %471, %469 : vector<16x128xf32>
    %473 = arith.addf %456, %472 : vector<16x128xf32>
    %c102 = arith.constant 102 : index
    %474 = memref.load %arg2[%c102] : memref<354xf32, #tpu.memory_space<smem>>
    %475 = vector.broadcast %474 : f32 to vector<16x128xf32>
    %476 = arith.mulf %475, %469 : vector<16x128xf32>
    %477 = arith.addf %460, %476 : vector<16x128xf32>
    %c177 = arith.constant 177 : index
    %478 = memref.load %arg2[%c177] : memref<354xf32, #tpu.memory_space<smem>>
    %479 = vector.broadcast %478 : f32 to vector<16x128xf32>
    %480 = arith.mulf %479, %469 : vector<16x128xf32>
    %481 = arith.addf %464, %480 : vector<16x128xf32>
    %c252 = arith.constant 252 : index
    %482 = memref.load %arg2[%c252] : memref<354xf32, #tpu.memory_space<smem>>
    %483 = vector.broadcast %482 : f32 to vector<16x128xf32>
    %484 = arith.mulf %483, %469 : vector<16x128xf32>
    %485 = arith.addf %468, %484 : vector<16x128xf32>
    %c125_i32_45 = arith.constant 125 : i32
    %486 = tpu.dynamic_rotate %435 by %c125_i32_45 dim 1 : vector<16x128xf32>, i32 -> vector<16x128xf32>
    %c28 = arith.constant 28 : index
    %487 = memref.load %arg2[%c28] : memref<354xf32, #tpu.memory_space<smem>>
    %488 = vector.broadcast %487 : f32 to vector<16x128xf32>
    %489 = arith.mulf %488, %486 : vector<16x128xf32>
    %490 = arith.addf %473, %489 : vector<16x128xf32>
    %c103 = arith.constant 103 : index
    %491 = memref.load %arg2[%c103] : memref<354xf32, #tpu.memory_space<smem>>
    %492 = vector.broadcast %491 : f32 to vector<16x128xf32>
    %493 = arith.mulf %492, %486 : vector<16x128xf32>
    %494 = arith.addf %477, %493 : vector<16x128xf32>
    %c178 = arith.constant 178 : index
    %495 = memref.load %arg2[%c178] : memref<354xf32, #tpu.memory_space<smem>>
    %496 = vector.broadcast %495 : f32 to vector<16x128xf32>
    %497 = arith.mulf %496, %486 : vector<16x128xf32>
    %498 = arith.addf %481, %497 : vector<16x128xf32>
    %c253 = arith.constant 253 : index
    %499 = memref.load %arg2[%c253] : memref<354xf32, #tpu.memory_space<smem>>
    %500 = vector.broadcast %499 : f32 to vector<16x128xf32>
    %501 = arith.mulf %500, %486 : vector<16x128xf32>
    %502 = arith.addf %485, %501 : vector<16x128xf32>
    %c124_i32_46 = arith.constant 124 : i32
    %503 = tpu.dynamic_rotate %435 by %c124_i32_46 dim 1 : vector<16x128xf32>, i32 -> vector<16x128xf32>
    %c29 = arith.constant 29 : index
    %504 = memref.load %arg2[%c29] : memref<354xf32, #tpu.memory_space<smem>>
    %505 = vector.broadcast %504 : f32 to vector<16x128xf32>
    %506 = arith.mulf %505, %503 : vector<16x128xf32>
    %507 = arith.addf %490, %506 : vector<16x128xf32>
    %c104 = arith.constant 104 : index
    %508 = memref.load %arg2[%c104] : memref<354xf32, #tpu.memory_space<smem>>
    %509 = vector.broadcast %508 : f32 to vector<16x128xf32>
    %510 = arith.mulf %509, %503 : vector<16x128xf32>
    %511 = arith.addf %494, %510 : vector<16x128xf32>
    %c179 = arith.constant 179 : index
    %512 = memref.load %arg2[%c179] : memref<354xf32, #tpu.memory_space<smem>>
    %513 = vector.broadcast %512 : f32 to vector<16x128xf32>
    %514 = arith.mulf %513, %503 : vector<16x128xf32>
    %515 = arith.addf %498, %514 : vector<16x128xf32>
    %c254 = arith.constant 254 : index
    %516 = memref.load %arg2[%c254] : memref<354xf32, #tpu.memory_space<smem>>
    %517 = vector.broadcast %516 : f32 to vector<16x128xf32>
    %518 = arith.mulf %517, %503 : vector<16x128xf32>
    %519 = arith.addf %502, %518 : vector<16x128xf32>
    %c0_47 = arith.constant 0 : index
    %c1_48 = arith.constant 1 : index
    %c1_49 = arith.constant 1 : index
    %c0_50 = arith.constant 0 : index
    %520 = vector.load %arg1[%c0_47, %c1_48, %c1_49, %c0_50] : memref<1x6x20x128xf32, #tpu.memory_space<vmem>>, vector<1x1x16x128xf32>
    %521 = vector.shape_cast %520 : vector<1x1x16x128xf32> to vector<16x128xf32>
    %c30 = arith.constant 30 : index
    %522 = memref.load %arg2[%c30] : memref<354xf32, #tpu.memory_space<smem>>
    %523 = vector.broadcast %522 : f32 to vector<16x128xf32>
    %524 = arith.mulf %523, %521 : vector<16x128xf32>
    %525 = arith.addf %507, %524 : vector<16x128xf32>
    %c105 = arith.constant 105 : index
    %526 = memref.load %arg2[%c105] : memref<354xf32, #tpu.memory_space<smem>>
    %527 = vector.broadcast %526 : f32 to vector<16x128xf32>
    %528 = arith.mulf %527, %521 : vector<16x128xf32>
    %529 = arith.addf %511, %528 : vector<16x128xf32>
    %c180 = arith.constant 180 : index
    %530 = memref.load %arg2[%c180] : memref<354xf32, #tpu.memory_space<smem>>
    %531 = vector.broadcast %530 : f32 to vector<16x128xf32>
    %532 = arith.mulf %531, %521 : vector<16x128xf32>
    %533 = arith.addf %515, %532 : vector<16x128xf32>
    %c255 = arith.constant 255 : index
    %534 = memref.load %arg2[%c255] : memref<354xf32, #tpu.memory_space<smem>>
    %535 = vector.broadcast %534 : f32 to vector<16x128xf32>
    %536 = arith.mulf %535, %521 : vector<16x128xf32>
    %537 = arith.addf %519, %536 : vector<16x128xf32>
    %c127_i32_51 = arith.constant 127 : i32
    %538 = tpu.dynamic_rotate %521 by %c127_i32_51 dim 1 : vector<16x128xf32>, i32 -> vector<16x128xf32>
    %c31 = arith.constant 31 : index
    %539 = memref.load %arg2[%c31] : memref<354xf32, #tpu.memory_space<smem>>
    %540 = vector.broadcast %539 : f32 to vector<16x128xf32>
    %541 = arith.mulf %540, %538 : vector<16x128xf32>
    %542 = arith.addf %525, %541 : vector<16x128xf32>
    %c106 = arith.constant 106 : index
    %543 = memref.load %arg2[%c106] : memref<354xf32, #tpu.memory_space<smem>>
    %544 = vector.broadcast %543 : f32 to vector<16x128xf32>
    %545 = arith.mulf %544, %538 : vector<16x128xf32>
    %546 = arith.addf %529, %545 : vector<16x128xf32>
    %c181 = arith.constant 181 : index
    %547 = memref.load %arg2[%c181] : memref<354xf32, #tpu.memory_space<smem>>
    %548 = vector.broadcast %547 : f32 to vector<16x128xf32>
    %549 = arith.mulf %548, %538 : vector<16x128xf32>
    %550 = arith.addf %533, %549 : vector<16x128xf32>
    %c256 = arith.constant 256 : index
    %551 = memref.load %arg2[%c256] : memref<354xf32, #tpu.memory_space<smem>>
    %552 = vector.broadcast %551 : f32 to vector<16x128xf32>
    %553 = arith.mulf %552, %538 : vector<16x128xf32>
    %554 = arith.addf %537, %553 : vector<16x128xf32>
    %c126_i32_52 = arith.constant 126 : i32
    %555 = tpu.dynamic_rotate %521 by %c126_i32_52 dim 1 : vector<16x128xf32>, i32 -> vector<16x128xf32>
    %c32 = arith.constant 32 : index
    %556 = memref.load %arg2[%c32] : memref<354xf32, #tpu.memory_space<smem>>
    %557 = vector.broadcast %556 : f32 to vector<16x128xf32>
    %558 = arith.mulf %557, %555 : vector<16x128xf32>
    %559 = arith.addf %542, %558 : vector<16x128xf32>
    %c107 = arith.constant 107 : index
    %560 = memref.load %arg2[%c107] : memref<354xf32, #tpu.memory_space<smem>>
    %561 = vector.broadcast %560 : f32 to vector<16x128xf32>
    %562 = arith.mulf %561, %555 : vector<16x128xf32>
    %563 = arith.addf %546, %562 : vector<16x128xf32>
    %c182 = arith.constant 182 : index
    %564 = memref.load %arg2[%c182] : memref<354xf32, #tpu.memory_space<smem>>
    %565 = vector.broadcast %564 : f32 to vector<16x128xf32>
    %566 = arith.mulf %565, %555 : vector<16x128xf32>
    %567 = arith.addf %550, %566 : vector<16x128xf32>
    %c257 = arith.constant 257 : index
    %568 = memref.load %arg2[%c257] : memref<354xf32, #tpu.memory_space<smem>>
    %569 = vector.broadcast %568 : f32 to vector<16x128xf32>
    %570 = arith.mulf %569, %555 : vector<16x128xf32>
    %571 = arith.addf %554, %570 : vector<16x128xf32>
    %c125_i32_53 = arith.constant 125 : i32
    %572 = tpu.dynamic_rotate %521 by %c125_i32_53 dim 1 : vector<16x128xf32>, i32 -> vector<16x128xf32>
    %c33 = arith.constant 33 : index
    %573 = memref.load %arg2[%c33] : memref<354xf32, #tpu.memory_space<smem>>
    %574 = vector.broadcast %573 : f32 to vector<16x128xf32>
    %575 = arith.mulf %574, %572 : vector<16x128xf32>
    %576 = arith.addf %559, %575 : vector<16x128xf32>
    %c108 = arith.constant 108 : index
    %577 = memref.load %arg2[%c108] : memref<354xf32, #tpu.memory_space<smem>>
    %578 = vector.broadcast %577 : f32 to vector<16x128xf32>
    %579 = arith.mulf %578, %572 : vector<16x128xf32>
    %580 = arith.addf %563, %579 : vector<16x128xf32>
    %c183 = arith.constant 183 : index
    %581 = memref.load %arg2[%c183] : memref<354xf32, #tpu.memory_space<smem>>
    %582 = vector.broadcast %581 : f32 to vector<16x128xf32>
    %583 = arith.mulf %582, %572 : vector<16x128xf32>
    %584 = arith.addf %567, %583 : vector<16x128xf32>
    %c258 = arith.constant 258 : index
    %585 = memref.load %arg2[%c258] : memref<354xf32, #tpu.memory_space<smem>>
    %586 = vector.broadcast %585 : f32 to vector<16x128xf32>
    %587 = arith.mulf %586, %572 : vector<16x128xf32>
    %588 = arith.addf %571, %587 : vector<16x128xf32>
    %c124_i32_54 = arith.constant 124 : i32
    %589 = tpu.dynamic_rotate %521 by %c124_i32_54 dim 1 : vector<16x128xf32>, i32 -> vector<16x128xf32>
    %c34 = arith.constant 34 : index
    %590 = memref.load %arg2[%c34] : memref<354xf32, #tpu.memory_space<smem>>
    %591 = vector.broadcast %590 : f32 to vector<16x128xf32>
    %592 = arith.mulf %591, %589 : vector<16x128xf32>
    %593 = arith.addf %576, %592 : vector<16x128xf32>
    %c109 = arith.constant 109 : index
    %594 = memref.load %arg2[%c109] : memref<354xf32, #tpu.memory_space<smem>>
    %595 = vector.broadcast %594 : f32 to vector<16x128xf32>
    %596 = arith.mulf %595, %589 : vector<16x128xf32>
    %597 = arith.addf %580, %596 : vector<16x128xf32>
    %c184 = arith.constant 184 : index
    %598 = memref.load %arg2[%c184] : memref<354xf32, #tpu.memory_space<smem>>
    %599 = vector.broadcast %598 : f32 to vector<16x128xf32>
    %600 = arith.mulf %599, %589 : vector<16x128xf32>
    %601 = arith.addf %584, %600 : vector<16x128xf32>
    %c259 = arith.constant 259 : index
    %602 = memref.load %arg2[%c259] : memref<354xf32, #tpu.memory_space<smem>>
    %603 = vector.broadcast %602 : f32 to vector<16x128xf32>
    %604 = arith.mulf %603, %589 : vector<16x128xf32>
    %605 = arith.addf %588, %604 : vector<16x128xf32>
    %c0_55 = arith.constant 0 : index
    %c1_56 = arith.constant 1 : index
    %c2_57 = arith.constant 2 : index
    %c0_58 = arith.constant 0 : index
    %606 = vector.load %arg1[%c0_55, %c1_56, %c2_57, %c0_58] : memref<1x6x20x128xf32, #tpu.memory_space<vmem>>, vector<1x1x16x128xf32>
    %607 = vector.shape_cast %606 : vector<1x1x16x128xf32> to vector<16x128xf32>
    %c35 = arith.constant 35 : index
    %608 = memref.load %arg2[%c35] : memref<354xf32, #tpu.memory_space<smem>>
    %609 = vector.broadcast %608 : f32 to vector<16x128xf32>
    %610 = arith.mulf %609, %607 : vector<16x128xf32>
    %611 = arith.addf %593, %610 : vector<16x128xf32>
    %c110 = arith.constant 110 : index
    %612 = memref.load %arg2[%c110] : memref<354xf32, #tpu.memory_space<smem>>
    %613 = vector.broadcast %612 : f32 to vector<16x128xf32>
    %614 = arith.mulf %613, %607 : vector<16x128xf32>
    %615 = arith.addf %597, %614 : vector<16x128xf32>
    %c185 = arith.constant 185 : index
    %616 = memref.load %arg2[%c185] : memref<354xf32, #tpu.memory_space<smem>>
    %617 = vector.broadcast %616 : f32 to vector<16x128xf32>
    %618 = arith.mulf %617, %607 : vector<16x128xf32>
    %619 = arith.addf %601, %618 : vector<16x128xf32>
    %c260 = arith.constant 260 : index
    %620 = memref.load %arg2[%c260] : memref<354xf32, #tpu.memory_space<smem>>
    %621 = vector.broadcast %620 : f32 to vector<16x128xf32>
    %622 = arith.mulf %621, %607 : vector<16x128xf32>
    %623 = arith.addf %605, %622 : vector<16x128xf32>
    %c127_i32_59 = arith.constant 127 : i32
    %624 = tpu.dynamic_rotate %607 by %c127_i32_59 dim 1 : vector<16x128xf32>, i32 -> vector<16x128xf32>
    %c36 = arith.constant 36 : index
    %625 = memref.load %arg2[%c36] : memref<354xf32, #tpu.memory_space<smem>>
    %626 = vector.broadcast %625 : f32 to vector<16x128xf32>
    %627 = arith.mulf %626, %624 : vector<16x128xf32>
    %628 = arith.addf %611, %627 : vector<16x128xf32>
    %c111 = arith.constant 111 : index
    %629 = memref.load %arg2[%c111] : memref<354xf32, #tpu.memory_space<smem>>
    %630 = vector.broadcast %629 : f32 to vector<16x128xf32>
    %631 = arith.mulf %630, %624 : vector<16x128xf32>
    %632 = arith.addf %615, %631 : vector<16x128xf32>
    %c186 = arith.constant 186 : index
    %633 = memref.load %arg2[%c186] : memref<354xf32, #tpu.memory_space<smem>>
    %634 = vector.broadcast %633 : f32 to vector<16x128xf32>
    %635 = arith.mulf %634, %624 : vector<16x128xf32>
    %636 = arith.addf %619, %635 : vector<16x128xf32>
    %c261 = arith.constant 261 : index
    %637 = memref.load %arg2[%c261] : memref<354xf32, #tpu.memory_space<smem>>
    %638 = vector.broadcast %637 : f32 to vector<16x128xf32>
    %639 = arith.mulf %638, %624 : vector<16x128xf32>
    %640 = arith.addf %623, %639 : vector<16x128xf32>
    %c126_i32_60 = arith.constant 126 : i32
    %641 = tpu.dynamic_rotate %607 by %c126_i32_60 dim 1 : vector<16x128xf32>, i32 -> vector<16x128xf32>
    %c37 = arith.constant 37 : index
    %642 = memref.load %arg2[%c37] : memref<354xf32, #tpu.memory_space<smem>>
    %643 = vector.broadcast %642 : f32 to vector<16x128xf32>
    %644 = arith.mulf %643, %641 : vector<16x128xf32>
    %645 = arith.addf %628, %644 : vector<16x128xf32>
    %c112 = arith.constant 112 : index
    %646 = memref.load %arg2[%c112] : memref<354xf32, #tpu.memory_space<smem>>
    %647 = vector.broadcast %646 : f32 to vector<16x128xf32>
    %648 = arith.mulf %647, %641 : vector<16x128xf32>
    %649 = arith.addf %632, %648 : vector<16x128xf32>
    %c187 = arith.constant 187 : index
    %650 = memref.load %arg2[%c187] : memref<354xf32, #tpu.memory_space<smem>>
    %651 = vector.broadcast %650 : f32 to vector<16x128xf32>
    %652 = arith.mulf %651, %641 : vector<16x128xf32>
    %653 = arith.addf %636, %652 : vector<16x128xf32>
    %c262 = arith.constant 262 : index
    %654 = memref.load %arg2[%c262] : memref<354xf32, #tpu.memory_space<smem>>
    %655 = vector.broadcast %654 : f32 to vector<16x128xf32>
    %656 = arith.mulf %655, %641 : vector<16x128xf32>
    %657 = arith.addf %640, %656 : vector<16x128xf32>
    %c125_i32_61 = arith.constant 125 : i32
    %658 = tpu.dynamic_rotate %607 by %c125_i32_61 dim 1 : vector<16x128xf32>, i32 -> vector<16x128xf32>
    %c38 = arith.constant 38 : index
    %659 = memref.load %arg2[%c38] : memref<354xf32, #tpu.memory_space<smem>>
    %660 = vector.broadcast %659 : f32 to vector<16x128xf32>
    %661 = arith.mulf %660, %658 : vector<16x128xf32>
    %662 = arith.addf %645, %661 : vector<16x128xf32>
    %c113 = arith.constant 113 : index
    %663 = memref.load %arg2[%c113] : memref<354xf32, #tpu.memory_space<smem>>
    %664 = vector.broadcast %663 : f32 to vector<16x128xf32>
    %665 = arith.mulf %664, %658 : vector<16x128xf32>
    %666 = arith.addf %649, %665 : vector<16x128xf32>
    %c188 = arith.constant 188 : index
    %667 = memref.load %arg2[%c188] : memref<354xf32, #tpu.memory_space<smem>>
    %668 = vector.broadcast %667 : f32 to vector<16x128xf32>
    %669 = arith.mulf %668, %658 : vector<16x128xf32>
    %670 = arith.addf %653, %669 : vector<16x128xf32>
    %c263 = arith.constant 263 : index
    %671 = memref.load %arg2[%c263] : memref<354xf32, #tpu.memory_space<smem>>
    %672 = vector.broadcast %671 : f32 to vector<16x128xf32>
    %673 = arith.mulf %672, %658 : vector<16x128xf32>
    %674 = arith.addf %657, %673 : vector<16x128xf32>
    %c124_i32_62 = arith.constant 124 : i32
    %675 = tpu.dynamic_rotate %607 by %c124_i32_62 dim 1 : vector<16x128xf32>, i32 -> vector<16x128xf32>
    %c39 = arith.constant 39 : index
    %676 = memref.load %arg2[%c39] : memref<354xf32, #tpu.memory_space<smem>>
    %677 = vector.broadcast %676 : f32 to vector<16x128xf32>
    %678 = arith.mulf %677, %675 : vector<16x128xf32>
    %679 = arith.addf %662, %678 : vector<16x128xf32>
    %c114 = arith.constant 114 : index
    %680 = memref.load %arg2[%c114] : memref<354xf32, #tpu.memory_space<smem>>
    %681 = vector.broadcast %680 : f32 to vector<16x128xf32>
    %682 = arith.mulf %681, %675 : vector<16x128xf32>
    %683 = arith.addf %666, %682 : vector<16x128xf32>
    %c189 = arith.constant 189 : index
    %684 = memref.load %arg2[%c189] : memref<354xf32, #tpu.memory_space<smem>>
    %685 = vector.broadcast %684 : f32 to vector<16x128xf32>
    %686 = arith.mulf %685, %675 : vector<16x128xf32>
    %687 = arith.addf %670, %686 : vector<16x128xf32>
    %c264 = arith.constant 264 : index
    %688 = memref.load %arg2[%c264] : memref<354xf32, #tpu.memory_space<smem>>
    %689 = vector.broadcast %688 : f32 to vector<16x128xf32>
    %690 = arith.mulf %689, %675 : vector<16x128xf32>
    %691 = arith.addf %674, %690 : vector<16x128xf32>
    %c0_63 = arith.constant 0 : index
    %c1_64 = arith.constant 1 : index
    %c3_65 = arith.constant 3 : index
    %c0_66 = arith.constant 0 : index
    %692 = vector.load %arg1[%c0_63, %c1_64, %c3_65, %c0_66] : memref<1x6x20x128xf32, #tpu.memory_space<vmem>>, vector<1x1x16x128xf32>
    %693 = vector.shape_cast %692 : vector<1x1x16x128xf32> to vector<16x128xf32>
    %c40 = arith.constant 40 : index
    %694 = memref.load %arg2[%c40] : memref<354xf32, #tpu.memory_space<smem>>
    %695 = vector.broadcast %694 : f32 to vector<16x128xf32>
    %696 = arith.mulf %695, %693 : vector<16x128xf32>
    %697 = arith.addf %679, %696 : vector<16x128xf32>
    %c115 = arith.constant 115 : index
    %698 = memref.load %arg2[%c115] : memref<354xf32, #tpu.memory_space<smem>>
    %699 = vector.broadcast %698 : f32 to vector<16x128xf32>
    %700 = arith.mulf %699, %693 : vector<16x128xf32>
    %701 = arith.addf %683, %700 : vector<16x128xf32>
    %c190 = arith.constant 190 : index
    %702 = memref.load %arg2[%c190] : memref<354xf32, #tpu.memory_space<smem>>
    %703 = vector.broadcast %702 : f32 to vector<16x128xf32>
    %704 = arith.mulf %703, %693 : vector<16x128xf32>
    %705 = arith.addf %687, %704 : vector<16x128xf32>
    %c265 = arith.constant 265 : index
    %706 = memref.load %arg2[%c265] : memref<354xf32, #tpu.memory_space<smem>>
    %707 = vector.broadcast %706 : f32 to vector<16x128xf32>
    %708 = arith.mulf %707, %693 : vector<16x128xf32>
    %709 = arith.addf %691, %708 : vector<16x128xf32>
    %c127_i32_67 = arith.constant 127 : i32
    %710 = tpu.dynamic_rotate %693 by %c127_i32_67 dim 1 : vector<16x128xf32>, i32 -> vector<16x128xf32>
    %c41 = arith.constant 41 : index
    %711 = memref.load %arg2[%c41] : memref<354xf32, #tpu.memory_space<smem>>
    %712 = vector.broadcast %711 : f32 to vector<16x128xf32>
    %713 = arith.mulf %712, %710 : vector<16x128xf32>
    %714 = arith.addf %697, %713 : vector<16x128xf32>
    %c116 = arith.constant 116 : index
    %715 = memref.load %arg2[%c116] : memref<354xf32, #tpu.memory_space<smem>>
    %716 = vector.broadcast %715 : f32 to vector<16x128xf32>
    %717 = arith.mulf %716, %710 : vector<16x128xf32>
    %718 = arith.addf %701, %717 : vector<16x128xf32>
    %c191 = arith.constant 191 : index
    %719 = memref.load %arg2[%c191] : memref<354xf32, #tpu.memory_space<smem>>
    %720 = vector.broadcast %719 : f32 to vector<16x128xf32>
    %721 = arith.mulf %720, %710 : vector<16x128xf32>
    %722 = arith.addf %705, %721 : vector<16x128xf32>
    %c266 = arith.constant 266 : index
    %723 = memref.load %arg2[%c266] : memref<354xf32, #tpu.memory_space<smem>>
    %724 = vector.broadcast %723 : f32 to vector<16x128xf32>
    %725 = arith.mulf %724, %710 : vector<16x128xf32>
    %726 = arith.addf %709, %725 : vector<16x128xf32>
    %c126_i32_68 = arith.constant 126 : i32
    %727 = tpu.dynamic_rotate %693 by %c126_i32_68 dim 1 : vector<16x128xf32>, i32 -> vector<16x128xf32>
    %c42 = arith.constant 42 : index
    %728 = memref.load %arg2[%c42] : memref<354xf32, #tpu.memory_space<smem>>
    %729 = vector.broadcast %728 : f32 to vector<16x128xf32>
    %730 = arith.mulf %729, %727 : vector<16x128xf32>
    %731 = arith.addf %714, %730 : vector<16x128xf32>
    %c117 = arith.constant 117 : index
    %732 = memref.load %arg2[%c117] : memref<354xf32, #tpu.memory_space<smem>>
    %733 = vector.broadcast %732 : f32 to vector<16x128xf32>
    %734 = arith.mulf %733, %727 : vector<16x128xf32>
    %735 = arith.addf %718, %734 : vector<16x128xf32>
    %c192 = arith.constant 192 : index
    %736 = memref.load %arg2[%c192] : memref<354xf32, #tpu.memory_space<smem>>
    %737 = vector.broadcast %736 : f32 to vector<16x128xf32>
    %738 = arith.mulf %737, %727 : vector<16x128xf32>
    %739 = arith.addf %722, %738 : vector<16x128xf32>
    %c267 = arith.constant 267 : index
    %740 = memref.load %arg2[%c267] : memref<354xf32, #tpu.memory_space<smem>>
    %741 = vector.broadcast %740 : f32 to vector<16x128xf32>
    %742 = arith.mulf %741, %727 : vector<16x128xf32>
    %743 = arith.addf %726, %742 : vector<16x128xf32>
    %c125_i32_69 = arith.constant 125 : i32
    %744 = tpu.dynamic_rotate %693 by %c125_i32_69 dim 1 : vector<16x128xf32>, i32 -> vector<16x128xf32>
    %c43 = arith.constant 43 : index
    %745 = memref.load %arg2[%c43] : memref<354xf32, #tpu.memory_space<smem>>
    %746 = vector.broadcast %745 : f32 to vector<16x128xf32>
    %747 = arith.mulf %746, %744 : vector<16x128xf32>
    %748 = arith.addf %731, %747 : vector<16x128xf32>
    %c118 = arith.constant 118 : index
    %749 = memref.load %arg2[%c118] : memref<354xf32, #tpu.memory_space<smem>>
    %750 = vector.broadcast %749 : f32 to vector<16x128xf32>
    %751 = arith.mulf %750, %744 : vector<16x128xf32>
    %752 = arith.addf %735, %751 : vector<16x128xf32>
    %c193 = arith.constant 193 : index
    %753 = memref.load %arg2[%c193] : memref<354xf32, #tpu.memory_space<smem>>
    %754 = vector.broadcast %753 : f32 to vector<16x128xf32>
    %755 = arith.mulf %754, %744 : vector<16x128xf32>
    %756 = arith.addf %739, %755 : vector<16x128xf32>
    %c268 = arith.constant 268 : index
    %757 = memref.load %arg2[%c268] : memref<354xf32, #tpu.memory_space<smem>>
    %758 = vector.broadcast %757 : f32 to vector<16x128xf32>
    %759 = arith.mulf %758, %744 : vector<16x128xf32>
    %760 = arith.addf %743, %759 : vector<16x128xf32>
    %c124_i32_70 = arith.constant 124 : i32
    %761 = tpu.dynamic_rotate %693 by %c124_i32_70 dim 1 : vector<16x128xf32>, i32 -> vector<16x128xf32>
    %c44 = arith.constant 44 : index
    %762 = memref.load %arg2[%c44] : memref<354xf32, #tpu.memory_space<smem>>
    %763 = vector.broadcast %762 : f32 to vector<16x128xf32>
    %764 = arith.mulf %763, %761 : vector<16x128xf32>
    %765 = arith.addf %748, %764 : vector<16x128xf32>
    %c119 = arith.constant 119 : index
    %766 = memref.load %arg2[%c119] : memref<354xf32, #tpu.memory_space<smem>>
    %767 = vector.broadcast %766 : f32 to vector<16x128xf32>
    %768 = arith.mulf %767, %761 : vector<16x128xf32>
    %769 = arith.addf %752, %768 : vector<16x128xf32>
    %c194 = arith.constant 194 : index
    %770 = memref.load %arg2[%c194] : memref<354xf32, #tpu.memory_space<smem>>
    %771 = vector.broadcast %770 : f32 to vector<16x128xf32>
    %772 = arith.mulf %771, %761 : vector<16x128xf32>
    %773 = arith.addf %756, %772 : vector<16x128xf32>
    %c269 = arith.constant 269 : index
    %774 = memref.load %arg2[%c269] : memref<354xf32, #tpu.memory_space<smem>>
    %775 = vector.broadcast %774 : f32 to vector<16x128xf32>
    %776 = arith.mulf %775, %761 : vector<16x128xf32>
    %777 = arith.addf %760, %776 : vector<16x128xf32>
    %c0_71 = arith.constant 0 : index
    %c1_72 = arith.constant 1 : index
    %c4_73 = arith.constant 4 : index
    %c0_74 = arith.constant 0 : index
    %778 = vector.load %arg1[%c0_71, %c1_72, %c4_73, %c0_74] : memref<1x6x20x128xf32, #tpu.memory_space<vmem>>, vector<1x1x16x128xf32>
    %779 = vector.shape_cast %778 : vector<1x1x16x128xf32> to vector<16x128xf32>
    %c45 = arith.constant 45 : index
    %780 = memref.load %arg2[%c45] : memref<354xf32, #tpu.memory_space<smem>>
    %781 = vector.broadcast %780 : f32 to vector<16x128xf32>
    %782 = arith.mulf %781, %779 : vector<16x128xf32>
    %783 = arith.addf %765, %782 : vector<16x128xf32>
    %c120 = arith.constant 120 : index
    %784 = memref.load %arg2[%c120] : memref<354xf32, #tpu.memory_space<smem>>
    %785 = vector.broadcast %784 : f32 to vector<16x128xf32>
    %786 = arith.mulf %785, %779 : vector<16x128xf32>
    %787 = arith.addf %769, %786 : vector<16x128xf32>
    %c195 = arith.constant 195 : index
    %788 = memref.load %arg2[%c195] : memref<354xf32, #tpu.memory_space<smem>>
    %789 = vector.broadcast %788 : f32 to vector<16x128xf32>
    %790 = arith.mulf %789, %779 : vector<16x128xf32>
    %791 = arith.addf %773, %790 : vector<16x128xf32>
    %c270 = arith.constant 270 : index
    %792 = memref.load %arg2[%c270] : memref<354xf32, #tpu.memory_space<smem>>
    %793 = vector.broadcast %792 : f32 to vector<16x128xf32>
    %794 = arith.mulf %793, %779 : vector<16x128xf32>
    %795 = arith.addf %777, %794 : vector<16x128xf32>
    %c127_i32_75 = arith.constant 127 : i32
    %796 = tpu.dynamic_rotate %779 by %c127_i32_75 dim 1 : vector<16x128xf32>, i32 -> vector<16x128xf32>
    %c46 = arith.constant 46 : index
    %797 = memref.load %arg2[%c46] : memref<354xf32, #tpu.memory_space<smem>>
    %798 = vector.broadcast %797 : f32 to vector<16x128xf32>
    %799 = arith.mulf %798, %796 : vector<16x128xf32>
    %800 = arith.addf %783, %799 : vector<16x128xf32>
    %c121 = arith.constant 121 : index
    %801 = memref.load %arg2[%c121] : memref<354xf32, #tpu.memory_space<smem>>
    %802 = vector.broadcast %801 : f32 to vector<16x128xf32>
    %803 = arith.mulf %802, %796 : vector<16x128xf32>
    %804 = arith.addf %787, %803 : vector<16x128xf32>
    %c196 = arith.constant 196 : index
    %805 = memref.load %arg2[%c196] : memref<354xf32, #tpu.memory_space<smem>>
    %806 = vector.broadcast %805 : f32 to vector<16x128xf32>
    %807 = arith.mulf %806, %796 : vector<16x128xf32>
    %808 = arith.addf %791, %807 : vector<16x128xf32>
    %c271 = arith.constant 271 : index
    %809 = memref.load %arg2[%c271] : memref<354xf32, #tpu.memory_space<smem>>
    %810 = vector.broadcast %809 : f32 to vector<16x128xf32>
    %811 = arith.mulf %810, %796 : vector<16x128xf32>
    %812 = arith.addf %795, %811 : vector<16x128xf32>
    %c126_i32_76 = arith.constant 126 : i32
    %813 = tpu.dynamic_rotate %779 by %c126_i32_76 dim 1 : vector<16x128xf32>, i32 -> vector<16x128xf32>
    %c47 = arith.constant 47 : index
    %814 = memref.load %arg2[%c47] : memref<354xf32, #tpu.memory_space<smem>>
    %815 = vector.broadcast %814 : f32 to vector<16x128xf32>
    %816 = arith.mulf %815, %813 : vector<16x128xf32>
    %817 = arith.addf %800, %816 : vector<16x128xf32>
    %c122 = arith.constant 122 : index
    %818 = memref.load %arg2[%c122] : memref<354xf32, #tpu.memory_space<smem>>
    %819 = vector.broadcast %818 : f32 to vector<16x128xf32>
    %820 = arith.mulf %819, %813 : vector<16x128xf32>
    %821 = arith.addf %804, %820 : vector<16x128xf32>
    %c197 = arith.constant 197 : index
    %822 = memref.load %arg2[%c197] : memref<354xf32, #tpu.memory_space<smem>>
    %823 = vector.broadcast %822 : f32 to vector<16x128xf32>
    %824 = arith.mulf %823, %813 : vector<16x128xf32>
    %825 = arith.addf %808, %824 : vector<16x128xf32>
    %c272 = arith.constant 272 : index
    %826 = memref.load %arg2[%c272] : memref<354xf32, #tpu.memory_space<smem>>
    %827 = vector.broadcast %826 : f32 to vector<16x128xf32>
    %828 = arith.mulf %827, %813 : vector<16x128xf32>
    %829 = arith.addf %812, %828 : vector<16x128xf32>
    %c125_i32_77 = arith.constant 125 : i32
    %830 = tpu.dynamic_rotate %779 by %c125_i32_77 dim 1 : vector<16x128xf32>, i32 -> vector<16x128xf32>
    %c48 = arith.constant 48 : index
    %831 = memref.load %arg2[%c48] : memref<354xf32, #tpu.memory_space<smem>>
    %832 = vector.broadcast %831 : f32 to vector<16x128xf32>
    %833 = arith.mulf %832, %830 : vector<16x128xf32>
    %834 = arith.addf %817, %833 : vector<16x128xf32>
    %c123 = arith.constant 123 : index
    %835 = memref.load %arg2[%c123] : memref<354xf32, #tpu.memory_space<smem>>
    %836 = vector.broadcast %835 : f32 to vector<16x128xf32>
    %837 = arith.mulf %836, %830 : vector<16x128xf32>
    %838 = arith.addf %821, %837 : vector<16x128xf32>
    %c198 = arith.constant 198 : index
    %839 = memref.load %arg2[%c198] : memref<354xf32, #tpu.memory_space<smem>>
    %840 = vector.broadcast %839 : f32 to vector<16x128xf32>
    %841 = arith.mulf %840, %830 : vector<16x128xf32>
    %842 = arith.addf %825, %841 : vector<16x128xf32>
    %c273 = arith.constant 273 : index
    %843 = memref.load %arg2[%c273] : memref<354xf32, #tpu.memory_space<smem>>
    %844 = vector.broadcast %843 : f32 to vector<16x128xf32>
    %845 = arith.mulf %844, %830 : vector<16x128xf32>
    %846 = arith.addf %829, %845 : vector<16x128xf32>
    %c124_i32_78 = arith.constant 124 : i32
    %847 = tpu.dynamic_rotate %779 by %c124_i32_78 dim 1 : vector<16x128xf32>, i32 -> vector<16x128xf32>
    %c49 = arith.constant 49 : index
    %848 = memref.load %arg2[%c49] : memref<354xf32, #tpu.memory_space<smem>>
    %849 = vector.broadcast %848 : f32 to vector<16x128xf32>
    %850 = arith.mulf %849, %847 : vector<16x128xf32>
    %851 = arith.addf %834, %850 : vector<16x128xf32>
    %c124 = arith.constant 124 : index
    %852 = memref.load %arg2[%c124] : memref<354xf32, #tpu.memory_space<smem>>
    %853 = vector.broadcast %852 : f32 to vector<16x128xf32>
    %854 = arith.mulf %853, %847 : vector<16x128xf32>
    %855 = arith.addf %838, %854 : vector<16x128xf32>
    %c199 = arith.constant 199 : index
    %856 = memref.load %arg2[%c199] : memref<354xf32, #tpu.memory_space<smem>>
    %857 = vector.broadcast %856 : f32 to vector<16x128xf32>
    %858 = arith.mulf %857, %847 : vector<16x128xf32>
    %859 = arith.addf %842, %858 : vector<16x128xf32>
    %c274 = arith.constant 274 : index
    %860 = memref.load %arg2[%c274] : memref<354xf32, #tpu.memory_space<smem>>
    %861 = vector.broadcast %860 : f32 to vector<16x128xf32>
    %862 = arith.mulf %861, %847 : vector<16x128xf32>
    %863 = arith.addf %846, %862 : vector<16x128xf32>
    %c0_79 = arith.constant 0 : index
    %c2_80 = arith.constant 2 : index
    %c0_81 = arith.constant 0 : index
    %c0_82 = arith.constant 0 : index
    %864 = vector.load %arg1[%c0_79, %c2_80, %c0_81, %c0_82] : memref<1x6x20x128xf32, #tpu.memory_space<vmem>>, vector<1x1x16x128xf32>
    %865 = vector.shape_cast %864 : vector<1x1x16x128xf32> to vector<16x128xf32>
    %c50 = arith.constant 50 : index
    %866 = memref.load %arg2[%c50] : memref<354xf32, #tpu.memory_space<smem>>
    %867 = vector.broadcast %866 : f32 to vector<16x128xf32>
    %868 = arith.mulf %867, %865 : vector<16x128xf32>
    %869 = arith.addf %851, %868 : vector<16x128xf32>
    %c125 = arith.constant 125 : index
    %870 = memref.load %arg2[%c125] : memref<354xf32, #tpu.memory_space<smem>>
    %871 = vector.broadcast %870 : f32 to vector<16x128xf32>
    %872 = arith.mulf %871, %865 : vector<16x128xf32>
    %873 = arith.addf %855, %872 : vector<16x128xf32>
    %c200 = arith.constant 200 : index
    %874 = memref.load %arg2[%c200] : memref<354xf32, #tpu.memory_space<smem>>
    %875 = vector.broadcast %874 : f32 to vector<16x128xf32>
    %876 = arith.mulf %875, %865 : vector<16x128xf32>
    %877 = arith.addf %859, %876 : vector<16x128xf32>
    %c275 = arith.constant 275 : index
    %878 = memref.load %arg2[%c275] : memref<354xf32, #tpu.memory_space<smem>>
    %879 = vector.broadcast %878 : f32 to vector<16x128xf32>
    %880 = arith.mulf %879, %865 : vector<16x128xf32>
    %881 = arith.addf %863, %880 : vector<16x128xf32>
    %c127_i32_83 = arith.constant 127 : i32
    %882 = tpu.dynamic_rotate %865 by %c127_i32_83 dim 1 : vector<16x128xf32>, i32 -> vector<16x128xf32>
    %c51 = arith.constant 51 : index
    %883 = memref.load %arg2[%c51] : memref<354xf32, #tpu.memory_space<smem>>
    %884 = vector.broadcast %883 : f32 to vector<16x128xf32>
    %885 = arith.mulf %884, %882 : vector<16x128xf32>
    %886 = arith.addf %869, %885 : vector<16x128xf32>
    %c126 = arith.constant 126 : index
    %887 = memref.load %arg2[%c126] : memref<354xf32, #tpu.memory_space<smem>>
    %888 = vector.broadcast %887 : f32 to vector<16x128xf32>
    %889 = arith.mulf %888, %882 : vector<16x128xf32>
    %890 = arith.addf %873, %889 : vector<16x128xf32>
    %c201 = arith.constant 201 : index
    %891 = memref.load %arg2[%c201] : memref<354xf32, #tpu.memory_space<smem>>
    %892 = vector.broadcast %891 : f32 to vector<16x128xf32>
    %893 = arith.mulf %892, %882 : vector<16x128xf32>
    %894 = arith.addf %877, %893 : vector<16x128xf32>
    %c276 = arith.constant 276 : index
    %895 = memref.load %arg2[%c276] : memref<354xf32, #tpu.memory_space<smem>>
    %896 = vector.broadcast %895 : f32 to vector<16x128xf32>
    %897 = arith.mulf %896, %882 : vector<16x128xf32>
    %898 = arith.addf %881, %897 : vector<16x128xf32>
    %c126_i32_84 = arith.constant 126 : i32
    %899 = tpu.dynamic_rotate %865 by %c126_i32_84 dim 1 : vector<16x128xf32>, i32 -> vector<16x128xf32>
    %c52 = arith.constant 52 : index
    %900 = memref.load %arg2[%c52] : memref<354xf32, #tpu.memory_space<smem>>
    %901 = vector.broadcast %900 : f32 to vector<16x128xf32>
    %902 = arith.mulf %901, %899 : vector<16x128xf32>
    %903 = arith.addf %886, %902 : vector<16x128xf32>
    %c127 = arith.constant 127 : index
    %904 = memref.load %arg2[%c127] : memref<354xf32, #tpu.memory_space<smem>>
    %905 = vector.broadcast %904 : f32 to vector<16x128xf32>
    %906 = arith.mulf %905, %899 : vector<16x128xf32>
    %907 = arith.addf %890, %906 : vector<16x128xf32>
    %c202 = arith.constant 202 : index
    %908 = memref.load %arg2[%c202] : memref<354xf32, #tpu.memory_space<smem>>
    %909 = vector.broadcast %908 : f32 to vector<16x128xf32>
    %910 = arith.mulf %909, %899 : vector<16x128xf32>
    %911 = arith.addf %894, %910 : vector<16x128xf32>
    %c277 = arith.constant 277 : index
    %912 = memref.load %arg2[%c277] : memref<354xf32, #tpu.memory_space<smem>>
    %913 = vector.broadcast %912 : f32 to vector<16x128xf32>
    %914 = arith.mulf %913, %899 : vector<16x128xf32>
    %915 = arith.addf %898, %914 : vector<16x128xf32>
    %c125_i32_85 = arith.constant 125 : i32
    %916 = tpu.dynamic_rotate %865 by %c125_i32_85 dim 1 : vector<16x128xf32>, i32 -> vector<16x128xf32>
    %c53 = arith.constant 53 : index
    %917 = memref.load %arg2[%c53] : memref<354xf32, #tpu.memory_space<smem>>
    %918 = vector.broadcast %917 : f32 to vector<16x128xf32>
    %919 = arith.mulf %918, %916 : vector<16x128xf32>
    %920 = arith.addf %903, %919 : vector<16x128xf32>
    %c128 = arith.constant 128 : index
    %921 = memref.load %arg2[%c128] : memref<354xf32, #tpu.memory_space<smem>>
    %922 = vector.broadcast %921 : f32 to vector<16x128xf32>
    %923 = arith.mulf %922, %916 : vector<16x128xf32>
    %924 = arith.addf %907, %923 : vector<16x128xf32>
    %c203 = arith.constant 203 : index
    %925 = memref.load %arg2[%c203] : memref<354xf32, #tpu.memory_space<smem>>
    %926 = vector.broadcast %925 : f32 to vector<16x128xf32>
    %927 = arith.mulf %926, %916 : vector<16x128xf32>
    %928 = arith.addf %911, %927 : vector<16x128xf32>
    %c278 = arith.constant 278 : index
    %929 = memref.load %arg2[%c278] : memref<354xf32, #tpu.memory_space<smem>>
    %930 = vector.broadcast %929 : f32 to vector<16x128xf32>
    %931 = arith.mulf %930, %916 : vector<16x128xf32>
    %932 = arith.addf %915, %931 : vector<16x128xf32>
    %c124_i32_86 = arith.constant 124 : i32
    %933 = tpu.dynamic_rotate %865 by %c124_i32_86 dim 1 : vector<16x128xf32>, i32 -> vector<16x128xf32>
    %c54 = arith.constant 54 : index
    %934 = memref.load %arg2[%c54] : memref<354xf32, #tpu.memory_space<smem>>
    %935 = vector.broadcast %934 : f32 to vector<16x128xf32>
    %936 = arith.mulf %935, %933 : vector<16x128xf32>
    %937 = arith.addf %920, %936 : vector<16x128xf32>
    %c129 = arith.constant 129 : index
    %938 = memref.load %arg2[%c129] : memref<354xf32, #tpu.memory_space<smem>>
    %939 = vector.broadcast %938 : f32 to vector<16x128xf32>
    %940 = arith.mulf %939, %933 : vector<16x128xf32>
    %941 = arith.addf %924, %940 : vector<16x128xf32>
    %c204 = arith.constant 204 : index
    %942 = memref.load %arg2[%c204] : memref<354xf32, #tpu.memory_space<smem>>
    %943 = vector.broadcast %942 : f32 to vector<16x128xf32>
    %944 = arith.mulf %943, %933 : vector<16x128xf32>
    %945 = arith.addf %928, %944 : vector<16x128xf32>
    %c279 = arith.constant 279 : index
    %946 = memref.load %arg2[%c279] : memref<354xf32, #tpu.memory_space<smem>>
    %947 = vector.broadcast %946 : f32 to vector<16x128xf32>
    %948 = arith.mulf %947, %933 : vector<16x128xf32>
    %949 = arith.addf %932, %948 : vector<16x128xf32>
    %c0_87 = arith.constant 0 : index
    %c2_88 = arith.constant 2 : index
    %c1_89 = arith.constant 1 : index
    %c0_90 = arith.constant 0 : index
    %950 = vector.load %arg1[%c0_87, %c2_88, %c1_89, %c0_90] : memref<1x6x20x128xf32, #tpu.memory_space<vmem>>, vector<1x1x16x128xf32>
    %951 = vector.shape_cast %950 : vector<1x1x16x128xf32> to vector<16x128xf32>
    %c55 = arith.constant 55 : index
    %952 = memref.load %arg2[%c55] : memref<354xf32, #tpu.memory_space<smem>>
    %953 = vector.broadcast %952 : f32 to vector<16x128xf32>
    %954 = arith.mulf %953, %951 : vector<16x128xf32>
    %955 = arith.addf %937, %954 : vector<16x128xf32>
    %c130 = arith.constant 130 : index
    %956 = memref.load %arg2[%c130] : memref<354xf32, #tpu.memory_space<smem>>
    %957 = vector.broadcast %956 : f32 to vector<16x128xf32>
    %958 = arith.mulf %957, %951 : vector<16x128xf32>
    %959 = arith.addf %941, %958 : vector<16x128xf32>
    %c205 = arith.constant 205 : index
    %960 = memref.load %arg2[%c205] : memref<354xf32, #tpu.memory_space<smem>>
    %961 = vector.broadcast %960 : f32 to vector<16x128xf32>
    %962 = arith.mulf %961, %951 : vector<16x128xf32>
    %963 = arith.addf %945, %962 : vector<16x128xf32>
    %c280 = arith.constant 280 : index
    %964 = memref.load %arg2[%c280] : memref<354xf32, #tpu.memory_space<smem>>
    %965 = vector.broadcast %964 : f32 to vector<16x128xf32>
    %966 = arith.mulf %965, %951 : vector<16x128xf32>
    %967 = arith.addf %949, %966 : vector<16x128xf32>
    %c127_i32_91 = arith.constant 127 : i32
    %968 = tpu.dynamic_rotate %951 by %c127_i32_91 dim 1 : vector<16x128xf32>, i32 -> vector<16x128xf32>
    %c56 = arith.constant 56 : index
    %969 = memref.load %arg2[%c56] : memref<354xf32, #tpu.memory_space<smem>>
    %970 = vector.broadcast %969 : f32 to vector<16x128xf32>
    %971 = arith.mulf %970, %968 : vector<16x128xf32>
    %972 = arith.addf %955, %971 : vector<16x128xf32>
    %c131 = arith.constant 131 : index
    %973 = memref.load %arg2[%c131] : memref<354xf32, #tpu.memory_space<smem>>
    %974 = vector.broadcast %973 : f32 to vector<16x128xf32>
    %975 = arith.mulf %974, %968 : vector<16x128xf32>
    %976 = arith.addf %959, %975 : vector<16x128xf32>
    %c206 = arith.constant 206 : index
    %977 = memref.load %arg2[%c206] : memref<354xf32, #tpu.memory_space<smem>>
    %978 = vector.broadcast %977 : f32 to vector<16x128xf32>
    %979 = arith.mulf %978, %968 : vector<16x128xf32>
    %980 = arith.addf %963, %979 : vector<16x128xf32>
    %c281 = arith.constant 281 : index
    %981 = memref.load %arg2[%c281] : memref<354xf32, #tpu.memory_space<smem>>
    %982 = vector.broadcast %981 : f32 to vector<16x128xf32>
    %983 = arith.mulf %982, %968 : vector<16x128xf32>
    %984 = arith.addf %967, %983 : vector<16x128xf32>
    %c126_i32_92 = arith.constant 126 : i32
    %985 = tpu.dynamic_rotate %951 by %c126_i32_92 dim 1 : vector<16x128xf32>, i32 -> vector<16x128xf32>
    %c57 = arith.constant 57 : index
    %986 = memref.load %arg2[%c57] : memref<354xf32, #tpu.memory_space<smem>>
    %987 = vector.broadcast %986 : f32 to vector<16x128xf32>
    %988 = arith.mulf %987, %985 : vector<16x128xf32>
    %989 = arith.addf %972, %988 : vector<16x128xf32>
    %c132 = arith.constant 132 : index
    %990 = memref.load %arg2[%c132] : memref<354xf32, #tpu.memory_space<smem>>
    %991 = vector.broadcast %990 : f32 to vector<16x128xf32>
    %992 = arith.mulf %991, %985 : vector<16x128xf32>
    %993 = arith.addf %976, %992 : vector<16x128xf32>
    %c207 = arith.constant 207 : index
    %994 = memref.load %arg2[%c207] : memref<354xf32, #tpu.memory_space<smem>>
    %995 = vector.broadcast %994 : f32 to vector<16x128xf32>
    %996 = arith.mulf %995, %985 : vector<16x128xf32>
    %997 = arith.addf %980, %996 : vector<16x128xf32>
    %c282 = arith.constant 282 : index
    %998 = memref.load %arg2[%c282] : memref<354xf32, #tpu.memory_space<smem>>
    %999 = vector.broadcast %998 : f32 to vector<16x128xf32>
    %1000 = arith.mulf %999, %985 : vector<16x128xf32>
    %1001 = arith.addf %984, %1000 : vector<16x128xf32>
    %c125_i32_93 = arith.constant 125 : i32
    %1002 = tpu.dynamic_rotate %951 by %c125_i32_93 dim 1 : vector<16x128xf32>, i32 -> vector<16x128xf32>
    %c58 = arith.constant 58 : index
    %1003 = memref.load %arg2[%c58] : memref<354xf32, #tpu.memory_space<smem>>
    %1004 = vector.broadcast %1003 : f32 to vector<16x128xf32>
    %1005 = arith.mulf %1004, %1002 : vector<16x128xf32>
    %1006 = arith.addf %989, %1005 : vector<16x128xf32>
    %c133 = arith.constant 133 : index
    %1007 = memref.load %arg2[%c133] : memref<354xf32, #tpu.memory_space<smem>>
    %1008 = vector.broadcast %1007 : f32 to vector<16x128xf32>
    %1009 = arith.mulf %1008, %1002 : vector<16x128xf32>
    %1010 = arith.addf %993, %1009 : vector<16x128xf32>
    %c208 = arith.constant 208 : index
    %1011 = memref.load %arg2[%c208] : memref<354xf32, #tpu.memory_space<smem>>
    %1012 = vector.broadcast %1011 : f32 to vector<16x128xf32>
    %1013 = arith.mulf %1012, %1002 : vector<16x128xf32>
    %1014 = arith.addf %997, %1013 : vector<16x128xf32>
    %c283 = arith.constant 283 : index
    %1015 = memref.load %arg2[%c283] : memref<354xf32, #tpu.memory_space<smem>>
    %1016 = vector.broadcast %1015 : f32 to vector<16x128xf32>
    %1017 = arith.mulf %1016, %1002 : vector<16x128xf32>
    %1018 = arith.addf %1001, %1017 : vector<16x128xf32>
    %c124_i32_94 = arith.constant 124 : i32
    %1019 = tpu.dynamic_rotate %951 by %c124_i32_94 dim 1 : vector<16x128xf32>, i32 -> vector<16x128xf32>
    %c59 = arith.constant 59 : index
    %1020 = memref.load %arg2[%c59] : memref<354xf32, #tpu.memory_space<smem>>
    %1021 = vector.broadcast %1020 : f32 to vector<16x128xf32>
    %1022 = arith.mulf %1021, %1019 : vector<16x128xf32>
    %1023 = arith.addf %1006, %1022 : vector<16x128xf32>
    %c134 = arith.constant 134 : index
    %1024 = memref.load %arg2[%c134] : memref<354xf32, #tpu.memory_space<smem>>
    %1025 = vector.broadcast %1024 : f32 to vector<16x128xf32>
    %1026 = arith.mulf %1025, %1019 : vector<16x128xf32>
    %1027 = arith.addf %1010, %1026 : vector<16x128xf32>
    %c209 = arith.constant 209 : index
    %1028 = memref.load %arg2[%c209] : memref<354xf32, #tpu.memory_space<smem>>
    %1029 = vector.broadcast %1028 : f32 to vector<16x128xf32>
    %1030 = arith.mulf %1029, %1019 : vector<16x128xf32>
    %1031 = arith.addf %1014, %1030 : vector<16x128xf32>
    %c284 = arith.constant 284 : index
    %1032 = memref.load %arg2[%c284] : memref<354xf32, #tpu.memory_space<smem>>
    %1033 = vector.broadcast %1032 : f32 to vector<16x128xf32>
    %1034 = arith.mulf %1033, %1019 : vector<16x128xf32>
    %1035 = arith.addf %1018, %1034 : vector<16x128xf32>
    %c0_95 = arith.constant 0 : index
    %c2_96 = arith.constant 2 : index
    %c2_97 = arith.constant 2 : index
    %c0_98 = arith.constant 0 : index
    %1036 = vector.load %arg1[%c0_95, %c2_96, %c2_97, %c0_98] : memref<1x6x20x128xf32, #tpu.memory_space<vmem>>, vector<1x1x16x128xf32>
    %1037 = vector.shape_cast %1036 : vector<1x1x16x128xf32> to vector<16x128xf32>
    %c60 = arith.constant 60 : index
    %1038 = memref.load %arg2[%c60] : memref<354xf32, #tpu.memory_space<smem>>
    %1039 = vector.broadcast %1038 : f32 to vector<16x128xf32>
    %1040 = arith.mulf %1039, %1037 : vector<16x128xf32>
    %1041 = arith.addf %1023, %1040 : vector<16x128xf32>
    %c135 = arith.constant 135 : index
    %1042 = memref.load %arg2[%c135] : memref<354xf32, #tpu.memory_space<smem>>
    %1043 = vector.broadcast %1042 : f32 to vector<16x128xf32>
    %1044 = arith.mulf %1043, %1037 : vector<16x128xf32>
    %1045 = arith.addf %1027, %1044 : vector<16x128xf32>
    %c210 = arith.constant 210 : index
    %1046 = memref.load %arg2[%c210] : memref<354xf32, #tpu.memory_space<smem>>
    %1047 = vector.broadcast %1046 : f32 to vector<16x128xf32>
    %1048 = arith.mulf %1047, %1037 : vector<16x128xf32>
    %1049 = arith.addf %1031, %1048 : vector<16x128xf32>
    %c285 = arith.constant 285 : index
    %1050 = memref.load %arg2[%c285] : memref<354xf32, #tpu.memory_space<smem>>
    %1051 = vector.broadcast %1050 : f32 to vector<16x128xf32>
    %1052 = arith.mulf %1051, %1037 : vector<16x128xf32>
    %1053 = arith.addf %1035, %1052 : vector<16x128xf32>
    %c127_i32_99 = arith.constant 127 : i32
    %1054 = tpu.dynamic_rotate %1037 by %c127_i32_99 dim 1 : vector<16x128xf32>, i32 -> vector<16x128xf32>
    %c61 = arith.constant 61 : index
    %1055 = memref.load %arg2[%c61] : memref<354xf32, #tpu.memory_space<smem>>
    %1056 = vector.broadcast %1055 : f32 to vector<16x128xf32>
    %1057 = arith.mulf %1056, %1054 : vector<16x128xf32>
    %1058 = arith.addf %1041, %1057 : vector<16x128xf32>
    %c136 = arith.constant 136 : index
    %1059 = memref.load %arg2[%c136] : memref<354xf32, #tpu.memory_space<smem>>
    %1060 = vector.broadcast %1059 : f32 to vector<16x128xf32>
    %1061 = arith.mulf %1060, %1054 : vector<16x128xf32>
    %1062 = arith.addf %1045, %1061 : vector<16x128xf32>
    %c211 = arith.constant 211 : index
    %1063 = memref.load %arg2[%c211] : memref<354xf32, #tpu.memory_space<smem>>
    %1064 = vector.broadcast %1063 : f32 to vector<16x128xf32>
    %1065 = arith.mulf %1064, %1054 : vector<16x128xf32>
    %1066 = arith.addf %1049, %1065 : vector<16x128xf32>
    %c286 = arith.constant 286 : index
    %1067 = memref.load %arg2[%c286] : memref<354xf32, #tpu.memory_space<smem>>
    %1068 = vector.broadcast %1067 : f32 to vector<16x128xf32>
    %1069 = arith.mulf %1068, %1054 : vector<16x128xf32>
    %1070 = arith.addf %1053, %1069 : vector<16x128xf32>
    %c126_i32_100 = arith.constant 126 : i32
    %1071 = tpu.dynamic_rotate %1037 by %c126_i32_100 dim 1 : vector<16x128xf32>, i32 -> vector<16x128xf32>
    %c62 = arith.constant 62 : index
    %1072 = memref.load %arg2[%c62] : memref<354xf32, #tpu.memory_space<smem>>
    %1073 = vector.broadcast %1072 : f32 to vector<16x128xf32>
    %1074 = arith.mulf %1073, %1071 : vector<16x128xf32>
    %1075 = arith.addf %1058, %1074 : vector<16x128xf32>
    %c137 = arith.constant 137 : index
    %1076 = memref.load %arg2[%c137] : memref<354xf32, #tpu.memory_space<smem>>
    %1077 = vector.broadcast %1076 : f32 to vector<16x128xf32>
    %1078 = arith.mulf %1077, %1071 : vector<16x128xf32>
    %1079 = arith.addf %1062, %1078 : vector<16x128xf32>
    %c212 = arith.constant 212 : index
    %1080 = memref.load %arg2[%c212] : memref<354xf32, #tpu.memory_space<smem>>
    %1081 = vector.broadcast %1080 : f32 to vector<16x128xf32>
    %1082 = arith.mulf %1081, %1071 : vector<16x128xf32>
    %1083 = arith.addf %1066, %1082 : vector<16x128xf32>
    %c287 = arith.constant 287 : index
    %1084 = memref.load %arg2[%c287] : memref<354xf32, #tpu.memory_space<smem>>
    %1085 = vector.broadcast %1084 : f32 to vector<16x128xf32>
    %1086 = arith.mulf %1085, %1071 : vector<16x128xf32>
    %1087 = arith.addf %1070, %1086 : vector<16x128xf32>
    %c125_i32_101 = arith.constant 125 : i32
    %1088 = tpu.dynamic_rotate %1037 by %c125_i32_101 dim 1 : vector<16x128xf32>, i32 -> vector<16x128xf32>
    %c63 = arith.constant 63 : index
    %1089 = memref.load %arg2[%c63] : memref<354xf32, #tpu.memory_space<smem>>
    %1090 = vector.broadcast %1089 : f32 to vector<16x128xf32>
    %1091 = arith.mulf %1090, %1088 : vector<16x128xf32>
    %1092 = arith.addf %1075, %1091 : vector<16x128xf32>
    %c138 = arith.constant 138 : index
    %1093 = memref.load %arg2[%c138] : memref<354xf32, #tpu.memory_space<smem>>
    %1094 = vector.broadcast %1093 : f32 to vector<16x128xf32>
    %1095 = arith.mulf %1094, %1088 : vector<16x128xf32>
    %1096 = arith.addf %1079, %1095 : vector<16x128xf32>
    %c213 = arith.constant 213 : index
    %1097 = memref.load %arg2[%c213] : memref<354xf32, #tpu.memory_space<smem>>
    %1098 = vector.broadcast %1097 : f32 to vector<16x128xf32>
    %1099 = arith.mulf %1098, %1088 : vector<16x128xf32>
    %1100 = arith.addf %1083, %1099 : vector<16x128xf32>
    %c288 = arith.constant 288 : index
    %1101 = memref.load %arg2[%c288] : memref<354xf32, #tpu.memory_space<smem>>
    %1102 = vector.broadcast %1101 : f32 to vector<16x128xf32>
    %1103 = arith.mulf %1102, %1088 : vector<16x128xf32>
    %1104 = arith.addf %1087, %1103 : vector<16x128xf32>
    %c124_i32_102 = arith.constant 124 : i32
    %1105 = tpu.dynamic_rotate %1037 by %c124_i32_102 dim 1 : vector<16x128xf32>, i32 -> vector<16x128xf32>
    %c64 = arith.constant 64 : index
    %1106 = memref.load %arg2[%c64] : memref<354xf32, #tpu.memory_space<smem>>
    %1107 = vector.broadcast %1106 : f32 to vector<16x128xf32>
    %1108 = arith.mulf %1107, %1105 : vector<16x128xf32>
    %1109 = arith.addf %1092, %1108 : vector<16x128xf32>
    %c139 = arith.constant 139 : index
    %1110 = memref.load %arg2[%c139] : memref<354xf32, #tpu.memory_space<smem>>
    %1111 = vector.broadcast %1110 : f32 to vector<16x128xf32>
    %1112 = arith.mulf %1111, %1105 : vector<16x128xf32>
    %1113 = arith.addf %1096, %1112 : vector<16x128xf32>
    %c214 = arith.constant 214 : index
    %1114 = memref.load %arg2[%c214] : memref<354xf32, #tpu.memory_space<smem>>
    %1115 = vector.broadcast %1114 : f32 to vector<16x128xf32>
    %1116 = arith.mulf %1115, %1105 : vector<16x128xf32>
    %1117 = arith.addf %1100, %1116 : vector<16x128xf32>
    %c289 = arith.constant 289 : index
    %1118 = memref.load %arg2[%c289] : memref<354xf32, #tpu.memory_space<smem>>
    %1119 = vector.broadcast %1118 : f32 to vector<16x128xf32>
    %1120 = arith.mulf %1119, %1105 : vector<16x128xf32>
    %1121 = arith.addf %1104, %1120 : vector<16x128xf32>
    %c0_103 = arith.constant 0 : index
    %c2_104 = arith.constant 2 : index
    %c3_105 = arith.constant 3 : index
    %c0_106 = arith.constant 0 : index
    %1122 = vector.load %arg1[%c0_103, %c2_104, %c3_105, %c0_106] : memref<1x6x20x128xf32, #tpu.memory_space<vmem>>, vector<1x1x16x128xf32>
    %1123 = vector.shape_cast %1122 : vector<1x1x16x128xf32> to vector<16x128xf32>
    %c65 = arith.constant 65 : index
    %1124 = memref.load %arg2[%c65] : memref<354xf32, #tpu.memory_space<smem>>
    %1125 = vector.broadcast %1124 : f32 to vector<16x128xf32>
    %1126 = arith.mulf %1125, %1123 : vector<16x128xf32>
    %1127 = arith.addf %1109, %1126 : vector<16x128xf32>
    %c140 = arith.constant 140 : index
    %1128 = memref.load %arg2[%c140] : memref<354xf32, #tpu.memory_space<smem>>
    %1129 = vector.broadcast %1128 : f32 to vector<16x128xf32>
    %1130 = arith.mulf %1129, %1123 : vector<16x128xf32>
    %1131 = arith.addf %1113, %1130 : vector<16x128xf32>
    %c215 = arith.constant 215 : index
    %1132 = memref.load %arg2[%c215] : memref<354xf32, #tpu.memory_space<smem>>
    %1133 = vector.broadcast %1132 : f32 to vector<16x128xf32>
    %1134 = arith.mulf %1133, %1123 : vector<16x128xf32>
    %1135 = arith.addf %1117, %1134 : vector<16x128xf32>
    %c290 = arith.constant 290 : index
    %1136 = memref.load %arg2[%c290] : memref<354xf32, #tpu.memory_space<smem>>
    %1137 = vector.broadcast %1136 : f32 to vector<16x128xf32>
    %1138 = arith.mulf %1137, %1123 : vector<16x128xf32>
    %1139 = arith.addf %1121, %1138 : vector<16x128xf32>
    %c127_i32_107 = arith.constant 127 : i32
    %1140 = tpu.dynamic_rotate %1123 by %c127_i32_107 dim 1 : vector<16x128xf32>, i32 -> vector<16x128xf32>
    %c66 = arith.constant 66 : index
    %1141 = memref.load %arg2[%c66] : memref<354xf32, #tpu.memory_space<smem>>
    %1142 = vector.broadcast %1141 : f32 to vector<16x128xf32>
    %1143 = arith.mulf %1142, %1140 : vector<16x128xf32>
    %1144 = arith.addf %1127, %1143 : vector<16x128xf32>
    %c141 = arith.constant 141 : index
    %1145 = memref.load %arg2[%c141] : memref<354xf32, #tpu.memory_space<smem>>
    %1146 = vector.broadcast %1145 : f32 to vector<16x128xf32>
    %1147 = arith.mulf %1146, %1140 : vector<16x128xf32>
    %1148 = arith.addf %1131, %1147 : vector<16x128xf32>
    %c216 = arith.constant 216 : index
    %1149 = memref.load %arg2[%c216] : memref<354xf32, #tpu.memory_space<smem>>
    %1150 = vector.broadcast %1149 : f32 to vector<16x128xf32>
    %1151 = arith.mulf %1150, %1140 : vector<16x128xf32>
    %1152 = arith.addf %1135, %1151 : vector<16x128xf32>
    %c291 = arith.constant 291 : index
    %1153 = memref.load %arg2[%c291] : memref<354xf32, #tpu.memory_space<smem>>
    %1154 = vector.broadcast %1153 : f32 to vector<16x128xf32>
    %1155 = arith.mulf %1154, %1140 : vector<16x128xf32>
    %1156 = arith.addf %1139, %1155 : vector<16x128xf32>
    %c126_i32_108 = arith.constant 126 : i32
    %1157 = tpu.dynamic_rotate %1123 by %c126_i32_108 dim 1 : vector<16x128xf32>, i32 -> vector<16x128xf32>
    %c67 = arith.constant 67 : index
    %1158 = memref.load %arg2[%c67] : memref<354xf32, #tpu.memory_space<smem>>
    %1159 = vector.broadcast %1158 : f32 to vector<16x128xf32>
    %1160 = arith.mulf %1159, %1157 : vector<16x128xf32>
    %1161 = arith.addf %1144, %1160 : vector<16x128xf32>
    %c142 = arith.constant 142 : index
    %1162 = memref.load %arg2[%c142] : memref<354xf32, #tpu.memory_space<smem>>
    %1163 = vector.broadcast %1162 : f32 to vector<16x128xf32>
    %1164 = arith.mulf %1163, %1157 : vector<16x128xf32>
    %1165 = arith.addf %1148, %1164 : vector<16x128xf32>
    %c217 = arith.constant 217 : index
    %1166 = memref.load %arg2[%c217] : memref<354xf32, #tpu.memory_space<smem>>
    %1167 = vector.broadcast %1166 : f32 to vector<16x128xf32>
    %1168 = arith.mulf %1167, %1157 : vector<16x128xf32>
    %1169 = arith.addf %1152, %1168 : vector<16x128xf32>
    %c292 = arith.constant 292 : index
    %1170 = memref.load %arg2[%c292] : memref<354xf32, #tpu.memory_space<smem>>
    %1171 = vector.broadcast %1170 : f32 to vector<16x128xf32>
    %1172 = arith.mulf %1171, %1157 : vector<16x128xf32>
    %1173 = arith.addf %1156, %1172 : vector<16x128xf32>
    %c125_i32_109 = arith.constant 125 : i32
    %1174 = tpu.dynamic_rotate %1123 by %c125_i32_109 dim 1 : vector<16x128xf32>, i32 -> vector<16x128xf32>
    %c68 = arith.constant 68 : index
    %1175 = memref.load %arg2[%c68] : memref<354xf32, #tpu.memory_space<smem>>
    %1176 = vector.broadcast %1175 : f32 to vector<16x128xf32>
    %1177 = arith.mulf %1176, %1174 : vector<16x128xf32>
    %1178 = arith.addf %1161, %1177 : vector<16x128xf32>
    %c143 = arith.constant 143 : index
    %1179 = memref.load %arg2[%c143] : memref<354xf32, #tpu.memory_space<smem>>
    %1180 = vector.broadcast %1179 : f32 to vector<16x128xf32>
    %1181 = arith.mulf %1180, %1174 : vector<16x128xf32>
    %1182 = arith.addf %1165, %1181 : vector<16x128xf32>
    %c218 = arith.constant 218 : index
    %1183 = memref.load %arg2[%c218] : memref<354xf32, #tpu.memory_space<smem>>
    %1184 = vector.broadcast %1183 : f32 to vector<16x128xf32>
    %1185 = arith.mulf %1184, %1174 : vector<16x128xf32>
    %1186 = arith.addf %1169, %1185 : vector<16x128xf32>
    %c293 = arith.constant 293 : index
    %1187 = memref.load %arg2[%c293] : memref<354xf32, #tpu.memory_space<smem>>
    %1188 = vector.broadcast %1187 : f32 to vector<16x128xf32>
    %1189 = arith.mulf %1188, %1174 : vector<16x128xf32>
    %1190 = arith.addf %1173, %1189 : vector<16x128xf32>
    %c124_i32_110 = arith.constant 124 : i32
    %1191 = tpu.dynamic_rotate %1123 by %c124_i32_110 dim 1 : vector<16x128xf32>, i32 -> vector<16x128xf32>
    %c69 = arith.constant 69 : index
    %1192 = memref.load %arg2[%c69] : memref<354xf32, #tpu.memory_space<smem>>
    %1193 = vector.broadcast %1192 : f32 to vector<16x128xf32>
    %1194 = arith.mulf %1193, %1191 : vector<16x128xf32>
    %1195 = arith.addf %1178, %1194 : vector<16x128xf32>
    %c144 = arith.constant 144 : index
    %1196 = memref.load %arg2[%c144] : memref<354xf32, #tpu.memory_space<smem>>
    %1197 = vector.broadcast %1196 : f32 to vector<16x128xf32>
    %1198 = arith.mulf %1197, %1191 : vector<16x128xf32>
    %1199 = arith.addf %1182, %1198 : vector<16x128xf32>
    %c219 = arith.constant 219 : index
    %1200 = memref.load %arg2[%c219] : memref<354xf32, #tpu.memory_space<smem>>
    %1201 = vector.broadcast %1200 : f32 to vector<16x128xf32>
    %1202 = arith.mulf %1201, %1191 : vector<16x128xf32>
    %1203 = arith.addf %1186, %1202 : vector<16x128xf32>
    %c294 = arith.constant 294 : index
    %1204 = memref.load %arg2[%c294] : memref<354xf32, #tpu.memory_space<smem>>
    %1205 = vector.broadcast %1204 : f32 to vector<16x128xf32>
    %1206 = arith.mulf %1205, %1191 : vector<16x128xf32>
    %1207 = arith.addf %1190, %1206 : vector<16x128xf32>
    %c0_111 = arith.constant 0 : index
    %c2_112 = arith.constant 2 : index
    %c4_113 = arith.constant 4 : index
    %c0_114 = arith.constant 0 : index
    %1208 = vector.load %arg1[%c0_111, %c2_112, %c4_113, %c0_114] : memref<1x6x20x128xf32, #tpu.memory_space<vmem>>, vector<1x1x16x128xf32>
    %1209 = vector.shape_cast %1208 : vector<1x1x16x128xf32> to vector<16x128xf32>
    %c70 = arith.constant 70 : index
    %1210 = memref.load %arg2[%c70] : memref<354xf32, #tpu.memory_space<smem>>
    %1211 = vector.broadcast %1210 : f32 to vector<16x128xf32>
    %1212 = arith.mulf %1211, %1209 : vector<16x128xf32>
    %1213 = arith.addf %1195, %1212 : vector<16x128xf32>
    %c145 = arith.constant 145 : index
    %1214 = memref.load %arg2[%c145] : memref<354xf32, #tpu.memory_space<smem>>
    %1215 = vector.broadcast %1214 : f32 to vector<16x128xf32>
    %1216 = arith.mulf %1215, %1209 : vector<16x128xf32>
    %1217 = arith.addf %1199, %1216 : vector<16x128xf32>
    %c220 = arith.constant 220 : index
    %1218 = memref.load %arg2[%c220] : memref<354xf32, #tpu.memory_space<smem>>
    %1219 = vector.broadcast %1218 : f32 to vector<16x128xf32>
    %1220 = arith.mulf %1219, %1209 : vector<16x128xf32>
    %1221 = arith.addf %1203, %1220 : vector<16x128xf32>
    %c295 = arith.constant 295 : index
    %1222 = memref.load %arg2[%c295] : memref<354xf32, #tpu.memory_space<smem>>
    %1223 = vector.broadcast %1222 : f32 to vector<16x128xf32>
    %1224 = arith.mulf %1223, %1209 : vector<16x128xf32>
    %1225 = arith.addf %1207, %1224 : vector<16x128xf32>
    %c127_i32_115 = arith.constant 127 : i32
    %1226 = tpu.dynamic_rotate %1209 by %c127_i32_115 dim 1 : vector<16x128xf32>, i32 -> vector<16x128xf32>
    %c71 = arith.constant 71 : index
    %1227 = memref.load %arg2[%c71] : memref<354xf32, #tpu.memory_space<smem>>
    %1228 = vector.broadcast %1227 : f32 to vector<16x128xf32>
    %1229 = arith.mulf %1228, %1226 : vector<16x128xf32>
    %1230 = arith.addf %1213, %1229 : vector<16x128xf32>
    %c146 = arith.constant 146 : index
    %1231 = memref.load %arg2[%c146] : memref<354xf32, #tpu.memory_space<smem>>
    %1232 = vector.broadcast %1231 : f32 to vector<16x128xf32>
    %1233 = arith.mulf %1232, %1226 : vector<16x128xf32>
    %1234 = arith.addf %1217, %1233 : vector<16x128xf32>
    %c221 = arith.constant 221 : index
    %1235 = memref.load %arg2[%c221] : memref<354xf32, #tpu.memory_space<smem>>
    %1236 = vector.broadcast %1235 : f32 to vector<16x128xf32>
    %1237 = arith.mulf %1236, %1226 : vector<16x128xf32>
    %1238 = arith.addf %1221, %1237 : vector<16x128xf32>
    %c296 = arith.constant 296 : index
    %1239 = memref.load %arg2[%c296] : memref<354xf32, #tpu.memory_space<smem>>
    %1240 = vector.broadcast %1239 : f32 to vector<16x128xf32>
    %1241 = arith.mulf %1240, %1226 : vector<16x128xf32>
    %1242 = arith.addf %1225, %1241 : vector<16x128xf32>
    %c126_i32_116 = arith.constant 126 : i32
    %1243 = tpu.dynamic_rotate %1209 by %c126_i32_116 dim 1 : vector<16x128xf32>, i32 -> vector<16x128xf32>
    %c72 = arith.constant 72 : index
    %1244 = memref.load %arg2[%c72] : memref<354xf32, #tpu.memory_space<smem>>
    %1245 = vector.broadcast %1244 : f32 to vector<16x128xf32>
    %1246 = arith.mulf %1245, %1243 : vector<16x128xf32>
    %1247 = arith.addf %1230, %1246 : vector<16x128xf32>
    %c147 = arith.constant 147 : index
    %1248 = memref.load %arg2[%c147] : memref<354xf32, #tpu.memory_space<smem>>
    %1249 = vector.broadcast %1248 : f32 to vector<16x128xf32>
    %1250 = arith.mulf %1249, %1243 : vector<16x128xf32>
    %1251 = arith.addf %1234, %1250 : vector<16x128xf32>
    %c222 = arith.constant 222 : index
    %1252 = memref.load %arg2[%c222] : memref<354xf32, #tpu.memory_space<smem>>
    %1253 = vector.broadcast %1252 : f32 to vector<16x128xf32>
    %1254 = arith.mulf %1253, %1243 : vector<16x128xf32>
    %1255 = arith.addf %1238, %1254 : vector<16x128xf32>
    %c297 = arith.constant 297 : index
    %1256 = memref.load %arg2[%c297] : memref<354xf32, #tpu.memory_space<smem>>
    %1257 = vector.broadcast %1256 : f32 to vector<16x128xf32>
    %1258 = arith.mulf %1257, %1243 : vector<16x128xf32>
    %1259 = arith.addf %1242, %1258 : vector<16x128xf32>
    %c125_i32_117 = arith.constant 125 : i32
    %1260 = tpu.dynamic_rotate %1209 by %c125_i32_117 dim 1 : vector<16x128xf32>, i32 -> vector<16x128xf32>
    %c73 = arith.constant 73 : index
    %1261 = memref.load %arg2[%c73] : memref<354xf32, #tpu.memory_space<smem>>
    %1262 = vector.broadcast %1261 : f32 to vector<16x128xf32>
    %1263 = arith.mulf %1262, %1260 : vector<16x128xf32>
    %1264 = arith.addf %1247, %1263 : vector<16x128xf32>
    %c148 = arith.constant 148 : index
    %1265 = memref.load %arg2[%c148] : memref<354xf32, #tpu.memory_space<smem>>
    %1266 = vector.broadcast %1265 : f32 to vector<16x128xf32>
    %1267 = arith.mulf %1266, %1260 : vector<16x128xf32>
    %1268 = arith.addf %1251, %1267 : vector<16x128xf32>
    %c223 = arith.constant 223 : index
    %1269 = memref.load %arg2[%c223] : memref<354xf32, #tpu.memory_space<smem>>
    %1270 = vector.broadcast %1269 : f32 to vector<16x128xf32>
    %1271 = arith.mulf %1270, %1260 : vector<16x128xf32>
    %1272 = arith.addf %1255, %1271 : vector<16x128xf32>
    %c298 = arith.constant 298 : index
    %1273 = memref.load %arg2[%c298] : memref<354xf32, #tpu.memory_space<smem>>
    %1274 = vector.broadcast %1273 : f32 to vector<16x128xf32>
    %1275 = arith.mulf %1274, %1260 : vector<16x128xf32>
    %1276 = arith.addf %1259, %1275 : vector<16x128xf32>
    %c124_i32_118 = arith.constant 124 : i32
    %1277 = tpu.dynamic_rotate %1209 by %c124_i32_118 dim 1 : vector<16x128xf32>, i32 -> vector<16x128xf32>
    %c74 = arith.constant 74 : index
    %1278 = memref.load %arg2[%c74] : memref<354xf32, #tpu.memory_space<smem>>
    %1279 = vector.broadcast %1278 : f32 to vector<16x128xf32>
    %1280 = arith.mulf %1279, %1277 : vector<16x128xf32>
    %1281 = arith.addf %1264, %1280 : vector<16x128xf32>
    %c149 = arith.constant 149 : index
    %1282 = memref.load %arg2[%c149] : memref<354xf32, #tpu.memory_space<smem>>
    %1283 = vector.broadcast %1282 : f32 to vector<16x128xf32>
    %1284 = arith.mulf %1283, %1277 : vector<16x128xf32>
    %1285 = arith.addf %1268, %1284 : vector<16x128xf32>
    %c224 = arith.constant 224 : index
    %1286 = memref.load %arg2[%c224] : memref<354xf32, #tpu.memory_space<smem>>
    %1287 = vector.broadcast %1286 : f32 to vector<16x128xf32>
    %1288 = arith.mulf %1287, %1277 : vector<16x128xf32>
    %1289 = arith.addf %1272, %1288 : vector<16x128xf32>
    %c299 = arith.constant 299 : index
    %1290 = memref.load %arg2[%c299] : memref<354xf32, #tpu.memory_space<smem>>
    %1291 = vector.broadcast %1290 : f32 to vector<16x128xf32>
    %1292 = arith.mulf %1291, %1277 : vector<16x128xf32>
    %1293 = arith.addf %1276, %1292 : vector<16x128xf32>
    %c0_119 = arith.constant 0 : index
    %c0_120 = arith.constant 0 : index
    %c0_121 = arith.constant 0 : index
    %c0_122 = arith.constant 0 : index
    %1294 = vector.load %arg3[%c0_119, %c0_120, %c0_121, %c0_122] : memref<1x6x16x128xf32, #tpu.memory_space<vmem>>, vector<1x1x16x128xf32>
    %1295 = vector.shape_cast %1294 : vector<1x1x16x128xf32> to vector<16x128xf32>
    %1296 = vector.shape_cast %1281 : vector<16x128xf32> to vector<1x1x16x128xf32>
    tpu.vector_store %arg3[%c0_119, %c0_120, %c0_121, %c0_122], %1296 {strides = array<i32>} : memref<1x6x16x128xf32, #tpu.memory_space<vmem>>, vector<1x1x16x128xf32>,
    %c0_123 = arith.constant 0 : index
    %c1_124 = arith.constant 1 : index
    %c0_125 = arith.constant 0 : index
    %c0_126 = arith.constant 0 : index
    %1297 = vector.load %arg3[%c0_123, %c1_124, %c0_125, %c0_126] : memref<1x6x16x128xf32, #tpu.memory_space<vmem>>, vector<1x1x16x128xf32>
    %1298 = vector.shape_cast %1297 : vector<1x1x16x128xf32> to vector<16x128xf32>
    %1299 = vector.shape_cast %1285 : vector<16x128xf32> to vector<1x1x16x128xf32>
    tpu.vector_store %arg3[%c0_123, %c1_124, %c0_125, %c0_126], %1299 {strides = array<i32>} : memref<1x6x16x128xf32, #tpu.memory_space<vmem>>, vector<1x1x16x128xf32>,
    %c0_127 = arith.constant 0 : index
    %c2_128 = arith.constant 2 : index
    %c0_129 = arith.constant 0 : index
    %c0_130 = arith.constant 0 : index
    %1300 = vector.load %arg3[%c0_127, %c2_128, %c0_129, %c0_130] : memref<1x6x16x128xf32, #tpu.memory_space<vmem>>, vector<1x1x16x128xf32>
    %1301 = vector.shape_cast %1300 : vector<1x1x16x128xf32> to vector<16x128xf32>
    %1302 = vector.shape_cast %1289 : vector<16x128xf32> to vector<1x1x16x128xf32>
    tpu.vector_store %arg3[%c0_127, %c2_128, %c0_129, %c0_130], %1302 {strides = array<i32>} : memref<1x6x16x128xf32, #tpu.memory_space<vmem>>, vector<1x1x16x128xf32>,
    %c0_131 = arith.constant 0 : index
    %c3_132 = arith.constant 3 : index
    %c0_133 = arith.constant 0 : index
    %c0_134 = arith.constant 0 : index
    %1303 = vector.load %arg3[%c0_131, %c3_132, %c0_133, %c0_134] : memref<1x6x16x128xf32, #tpu.memory_space<vmem>>, vector<1x1x16x128xf32>
    %1304 = vector.shape_cast %1303 : vector<1x1x16x128xf32> to vector<16x128xf32>
    %1305 = vector.shape_cast %1293 : vector<16x128xf32> to vector<1x1x16x128xf32>
    tpu.vector_store %arg3[%c0_131, %c3_132, %c0_133, %c0_134], %1305 {strides = array<i32>} : memref<1x6x16x128xf32, #tpu.memory_space<vmem>>, vector<1x1x16x128xf32>,
    %cst_135 = arith.constant 0.000000e+00 : f32
    %1306 = vector.broadcast %cst_135 : f32 to vector<16x128xf32>
    %cst_136 = arith.constant 0.000000e+00 : f32
    %1307 = vector.broadcast %cst_136 : f32 to vector<16x128xf32>
    %c0_137 = arith.constant 0 : index
    %c3_138 = arith.constant 3 : index
    %c1_139 = arith.constant 1 : index
    %c0_140 = arith.constant 0 : index
    %1308 = vector.load %arg1[%c0_137, %c3_138, %c1_139, %c0_140] : memref<1x6x20x128xf32, #tpu.memory_space<vmem>>, vector<1x1x16x128xf32>
    %1309 = vector.shape_cast %1308 : vector<1x1x16x128xf32> to vector<16x128xf32>
    %c127_i32_141 = arith.constant 127 : i32
    %1310 = tpu.dynamic_rotate %1309 by %c127_i32_141 dim 1 : vector<16x128xf32>, i32 -> vector<16x128xf32>
    %c300 = arith.constant 300 : index
    %1311 = memref.load %arg2[%c300] : memref<354xf32, #tpu.memory_space<smem>>
    %1312 = vector.broadcast %1311 : f32 to vector<16x128xf32>
    %1313 = arith.mulf %1312, %1310 : vector<16x128xf32>
    %1314 = arith.addf %1306, %1313 : vector<16x128xf32>
    %c327 = arith.constant 327 : index
    %1315 = memref.load %arg2[%c327] : memref<354xf32, #tpu.memory_space<smem>>
    %1316 = vector.broadcast %1315 : f32 to vector<16x128xf32>
    %1317 = arith.mulf %1316, %1310 : vector<16x128xf32>
    %1318 = arith.addf %1307, %1317 : vector<16x128xf32>
    %c126_i32_142 = arith.constant 126 : i32
    %1319 = tpu.dynamic_rotate %1309 by %c126_i32_142 dim 1 : vector<16x128xf32>, i32 -> vector<16x128xf32>
    %c301 = arith.constant 301 : index
    %1320 = memref.load %arg2[%c301] : memref<354xf32, #tpu.memory_space<smem>>
    %1321 = vector.broadcast %1320 : f32 to vector<16x128xf32>
    %1322 = arith.mulf %1321, %1319 : vector<16x128xf32>
    %1323 = arith.addf %1314, %1322 : vector<16x128xf32>
    %c328 = arith.constant 328 : index
    %1324 = memref.load %arg2[%c328] : memref<354xf32, #tpu.memory_space<smem>>
    %1325 = vector.broadcast %1324 : f32 to vector<16x128xf32>
    %1326 = arith.mulf %1325, %1319 : vector<16x128xf32>
    %1327 = arith.addf %1318, %1326 : vector<16x128xf32>
    %c125_i32_143 = arith.constant 125 : i32
    %1328 = tpu.dynamic_rotate %1309 by %c125_i32_143 dim 1 : vector<16x128xf32>, i32 -> vector<16x128xf32>
    %c302 = arith.constant 302 : index
    %1329 = memref.load %arg2[%c302] : memref<354xf32, #tpu.memory_space<smem>>
    %1330 = vector.broadcast %1329 : f32 to vector<16x128xf32>
    %1331 = arith.mulf %1330, %1328 : vector<16x128xf32>
    %1332 = arith.addf %1323, %1331 : vector<16x128xf32>
    %c329 = arith.constant 329 : index
    %1333 = memref.load %arg2[%c329] : memref<354xf32, #tpu.memory_space<smem>>
    %1334 = vector.broadcast %1333 : f32 to vector<16x128xf32>
    %1335 = arith.mulf %1334, %1328 : vector<16x128xf32>
    %1336 = arith.addf %1327, %1335 : vector<16x128xf32>
    %c0_144 = arith.constant 0 : index
    %c3_145 = arith.constant 3 : index
    %c2_146 = arith.constant 2 : index
    %c0_147 = arith.constant 0 : index
    %1337 = vector.load %arg1[%c0_144, %c3_145, %c2_146, %c0_147] : memref<1x6x20x128xf32, #tpu.memory_space<vmem>>, vector<1x1x16x128xf32>
    %1338 = vector.shape_cast %1337 : vector<1x1x16x128xf32> to vector<16x128xf32>
    %c127_i32_148 = arith.constant 127 : i32
    %1339 = tpu.dynamic_rotate %1338 by %c127_i32_148 dim 1 : vector<16x128xf32>, i32 -> vector<16x128xf32>
    %c303 = arith.constant 303 : index
    %1340 = memref.load %arg2[%c303] : memref<354xf32, #tpu.memory_space<smem>>
    %1341 = vector.broadcast %1340 : f32 to vector<16x128xf32>
    %1342 = arith.mulf %1341, %1339 : vector<16x128xf32>
    %1343 = arith.addf %1332, %1342 : vector<16x128xf32>
    %c330 = arith.constant 330 : index
    %1344 = memref.load %arg2[%c330] : memref<354xf32, #tpu.memory_space<smem>>
    %1345 = vector.broadcast %1344 : f32 to vector<16x128xf32>
    %1346 = arith.mulf %1345, %1339 : vector<16x128xf32>
    %1347 = arith.addf %1336, %1346 : vector<16x128xf32>
    %c126_i32_149 = arith.constant 126 : i32
    %1348 = tpu.dynamic_rotate %1338 by %c126_i32_149 dim 1 : vector<16x128xf32>, i32 -> vector<16x128xf32>
    %c304 = arith.constant 304 : index
    %1349 = memref.load %arg2[%c304] : memref<354xf32, #tpu.memory_space<smem>>
    %1350 = vector.broadcast %1349 : f32 to vector<16x128xf32>
    %1351 = arith.mulf %1350, %1348 : vector<16x128xf32>
    %1352 = arith.addf %1343, %1351 : vector<16x128xf32>
    %c331 = arith.constant 331 : index
    %1353 = memref.load %arg2[%c331] : memref<354xf32, #tpu.memory_space<smem>>
    %1354 = vector.broadcast %1353 : f32 to vector<16x128xf32>
    %1355 = arith.mulf %1354, %1348 : vector<16x128xf32>
    %1356 = arith.addf %1347, %1355 : vector<16x128xf32>
    %c125_i32_150 = arith.constant 125 : i32
    %1357 = tpu.dynamic_rotate %1338 by %c125_i32_150 dim 1 : vector<16x128xf32>, i32 -> vector<16x128xf32>
    %c305 = arith.constant 305 : index
    %1358 = memref.load %arg2[%c305] : memref<354xf32, #tpu.memory_space<smem>>
    %1359 = vector.broadcast %1358 : f32 to vector<16x128xf32>
    %1360 = arith.mulf %1359, %1357 : vector<16x128xf32>
    %1361 = arith.addf %1352, %1360 : vector<16x128xf32>
    %c332 = arith.constant 332 : index
    %1362 = memref.load %arg2[%c332] : memref<354xf32, #tpu.memory_space<smem>>
    %1363 = vector.broadcast %1362 : f32 to vector<16x128xf32>
    %1364 = arith.mulf %1363, %1357 : vector<16x128xf32>
    %1365 = arith.addf %1356, %1364 : vector<16x128xf32>
    %c0_151 = arith.constant 0 : index
    %c3_152 = arith.constant 3 : index
    %c3_153 = arith.constant 3 : index
    %c0_154 = arith.constant 0 : index
    %1366 = vector.load %arg1[%c0_151, %c3_152, %c3_153, %c0_154] : memref<1x6x20x128xf32, #tpu.memory_space<vmem>>, vector<1x1x16x128xf32>
    %1367 = vector.shape_cast %1366 : vector<1x1x16x128xf32> to vector<16x128xf32>
    %c127_i32_155 = arith.constant 127 : i32
    %1368 = tpu.dynamic_rotate %1367 by %c127_i32_155 dim 1 : vector<16x128xf32>, i32 -> vector<16x128xf32>
    %c306 = arith.constant 306 : index
    %1369 = memref.load %arg2[%c306] : memref<354xf32, #tpu.memory_space<smem>>
    %1370 = vector.broadcast %1369 : f32 to vector<16x128xf32>
    %1371 = arith.mulf %1370, %1368 : vector<16x128xf32>
    %1372 = arith.addf %1361, %1371 : vector<16x128xf32>
    %c333 = arith.constant 333 : index
    %1373 = memref.load %arg2[%c333] : memref<354xf32, #tpu.memory_space<smem>>
    %1374 = vector.broadcast %1373 : f32 to vector<16x128xf32>
    %1375 = arith.mulf %1374, %1368 : vector<16x128xf32>
    %1376 = arith.addf %1365, %1375 : vector<16x128xf32>
    %c126_i32_156 = arith.constant 126 : i32
    %1377 = tpu.dynamic_rotate %1367 by %c126_i32_156 dim 1 : vector<16x128xf32>, i32 -> vector<16x128xf32>
    %c307 = arith.constant 307 : index
    %1378 = memref.load %arg2[%c307] : memref<354xf32, #tpu.memory_space<smem>>
    %1379 = vector.broadcast %1378 : f32 to vector<16x128xf32>
    %1380 = arith.mulf %1379, %1377 : vector<16x128xf32>
    %1381 = arith.addf %1372, %1380 : vector<16x128xf32>
    %c334 = arith.constant 334 : index
    %1382 = memref.load %arg2[%c334] : memref<354xf32, #tpu.memory_space<smem>>
    %1383 = vector.broadcast %1382 : f32 to vector<16x128xf32>
    %1384 = arith.mulf %1383, %1377 : vector<16x128xf32>
    %1385 = arith.addf %1376, %1384 : vector<16x128xf32>
    %c125_i32_157 = arith.constant 125 : i32
    %1386 = tpu.dynamic_rotate %1367 by %c125_i32_157 dim 1 : vector<16x128xf32>, i32 -> vector<16x128xf32>
    %c308 = arith.constant 308 : index
    %1387 = memref.load %arg2[%c308] : memref<354xf32, #tpu.memory_space<smem>>
    %1388 = vector.broadcast %1387 : f32 to vector<16x128xf32>
    %1389 = arith.mulf %1388, %1386 : vector<16x128xf32>
    %1390 = arith.addf %1381, %1389 : vector<16x128xf32>
    %c335 = arith.constant 335 : index
    %1391 = memref.load %arg2[%c335] : memref<354xf32, #tpu.memory_space<smem>>
    %1392 = vector.broadcast %1391 : f32 to vector<16x128xf32>
    %1393 = arith.mulf %1392, %1386 : vector<16x128xf32>
    %1394 = arith.addf %1385, %1393 : vector<16x128xf32>
    %c0_158 = arith.constant 0 : index
    %c4_159 = arith.constant 4 : index
    %c1_160 = arith.constant 1 : index
    %c0_161 = arith.constant 0 : index
    %1395 = vector.load %arg1[%c0_158, %c4_159, %c1_160, %c0_161] : memref<1x6x20x128xf32, #tpu.memory_space<vmem>>, vector<1x1x16x128xf32>
    %1396 = vector.shape_cast %1395 : vector<1x1x16x128xf32> to vector<16x128xf32>
    %c127_i32_162 = arith.constant 127 : i32
    %1397 = tpu.dynamic_rotate %1396 by %c127_i32_162 dim 1 : vector<16x128xf32>, i32 -> vector<16x128xf32>
    %c309 = arith.constant 309 : index
    %1398 = memref.load %arg2[%c309] : memref<354xf32, #tpu.memory_space<smem>>
    %1399 = vector.broadcast %1398 : f32 to vector<16x128xf32>
    %1400 = arith.mulf %1399, %1397 : vector<16x128xf32>
    %1401 = arith.addf %1390, %1400 : vector<16x128xf32>
    %c336 = arith.constant 336 : index
    %1402 = memref.load %arg2[%c336] : memref<354xf32, #tpu.memory_space<smem>>
    %1403 = vector.broadcast %1402 : f32 to vector<16x128xf32>
    %1404 = arith.mulf %1403, %1397 : vector<16x128xf32>
    %1405 = arith.addf %1394, %1404 : vector<16x128xf32>
    %c126_i32_163 = arith.constant 126 : i32
    %1406 = tpu.dynamic_rotate %1396 by %c126_i32_163 dim 1 : vector<16x128xf32>, i32 -> vector<16x128xf32>
    %c310 = arith.constant 310 : index
    %1407 = memref.load %arg2[%c310] : memref<354xf32, #tpu.memory_space<smem>>
    %1408 = vector.broadcast %1407 : f32 to vector<16x128xf32>
    %1409 = arith.mulf %1408, %1406 : vector<16x128xf32>
    %1410 = arith.addf %1401, %1409 : vector<16x128xf32>
    %c337 = arith.constant 337 : index
    %1411 = memref.load %arg2[%c337] : memref<354xf32, #tpu.memory_space<smem>>
    %1412 = vector.broadcast %1411 : f32 to vector<16x128xf32>
    %1413 = arith.mulf %1412, %1406 : vector<16x128xf32>
    %1414 = arith.addf %1405, %1413 : vector<16x128xf32>
    %c125_i32_164 = arith.constant 125 : i32
    %1415 = tpu.dynamic_rotate %1396 by %c125_i32_164 dim 1 : vector<16x128xf32>, i32 -> vector<16x128xf32>
    %c311 = arith.constant 311 : index
    %1416 = memref.load %arg2[%c311] : memref<354xf32, #tpu.memory_space<smem>>
    %1417 = vector.broadcast %1416 : f32 to vector<16x128xf32>
    %1418 = arith.mulf %1417, %1415 : vector<16x128xf32>
    %1419 = arith.addf %1410, %1418 : vector<16x128xf32>
    %c338 = arith.constant 338 : index
    %1420 = memref.load %arg2[%c338] : memref<354xf32, #tpu.memory_space<smem>>
    %1421 = vector.broadcast %1420 : f32 to vector<16x128xf32>
    %1422 = arith.mulf %1421, %1415 : vector<16x128xf32>
    %1423 = arith.addf %1414, %1422 : vector<16x128xf32>
    %c0_165 = arith.constant 0 : index
    %c4_166 = arith.constant 4 : index
    %c2_167 = arith.constant 2 : index
    %c0_168 = arith.constant 0 : index
    %1424 = vector.load %arg1[%c0_165, %c4_166, %c2_167, %c0_168] : memref<1x6x20x128xf32, #tpu.memory_space<vmem>>, vector<1x1x16x128xf32>
    %1425 = vector.shape_cast %1424 : vector<1x1x16x128xf32> to vector<16x128xf32>
    %c127_i32_169 = arith.constant 127 : i32
    %1426 = tpu.dynamic_rotate %1425 by %c127_i32_169 dim 1 : vector<16x128xf32>, i32 -> vector<16x128xf32>
    %c312 = arith.constant 312 : index
    %1427 = memref.load %arg2[%c312] : memref<354xf32, #tpu.memory_space<smem>>
    %1428 = vector.broadcast %1427 : f32 to vector<16x128xf32>
    %1429 = arith.mulf %1428, %1426 : vector<16x128xf32>
    %1430 = arith.addf %1419, %1429 : vector<16x128xf32>
    %c339 = arith.constant 339 : index
    %1431 = memref.load %arg2[%c339] : memref<354xf32, #tpu.memory_space<smem>>
    %1432 = vector.broadcast %1431 : f32 to vector<16x128xf32>
    %1433 = arith.mulf %1432, %1426 : vector<16x128xf32>
    %1434 = arith.addf %1423, %1433 : vector<16x128xf32>
    %c126_i32_170 = arith.constant 126 : i32
    %1435 = tpu.dynamic_rotate %1425 by %c126_i32_170 dim 1 : vector<16x128xf32>, i32 -> vector<16x128xf32>
    %c313 = arith.constant 313 : index
    %1436 = memref.load %arg2[%c313] : memref<354xf32, #tpu.memory_space<smem>>
    %1437 = vector.broadcast %1436 : f32 to vector<16x128xf32>
    %1438 = arith.mulf %1437, %1435 : vector<16x128xf32>
    %1439 = arith.addf %1430, %1438 : vector<16x128xf32>
    %c340 = arith.constant 340 : index
    %1440 = memref.load %arg2[%c340] : memref<354xf32, #tpu.memory_space<smem>>
    %1441 = vector.broadcast %1440 : f32 to vector<16x128xf32>
    %1442 = arith.mulf %1441, %1435 : vector<16x128xf32>
    %1443 = arith.addf %1434, %1442 : vector<16x128xf32>
    %c125_i32_171 = arith.constant 125 : i32
    %1444 = tpu.dynamic_rotate %1425 by %c125_i32_171 dim 1 : vector<16x128xf32>, i32 -> vector<16x128xf32>
    %c314 = arith.constant 314 : index
    %1445 = memref.load %arg2[%c314] : memref<354xf32, #tpu.memory_space<smem>>
    %1446 = vector.broadcast %1445 : f32 to vector<16x128xf32>
    %1447 = arith.mulf %1446, %1444 : vector<16x128xf32>
    %1448 = arith.addf %1439, %1447 : vector<16x128xf32>
    %c341 = arith.constant 341 : index
    %1449 = memref.load %arg2[%c341] : memref<354xf32, #tpu.memory_space<smem>>
    %1450 = vector.broadcast %1449 : f32 to vector<16x128xf32>
    %1451 = arith.mulf %1450, %1444 : vector<16x128xf32>
    %1452 = arith.addf %1443, %1451 : vector<16x128xf32>
    %c0_172 = arith.constant 0 : index
    %c4_173 = arith.constant 4 : index
    %c3_174 = arith.constant 3 : index
    %c0_175 = arith.constant 0 : index
    %1453 = vector.load %arg1[%c0_172, %c4_173, %c3_174, %c0_175] : memref<1x6x20x128xf32, #tpu.memory_space<vmem>>, vector<1x1x16x128xf32>
    %1454 = vector.shape_cast %1453 : vector<1x1x16x128xf32> to vector<16x128xf32>
    %c127_i32_176 = arith.constant 127 : i32
    %1455 = tpu.dynamic_rotate %1454 by %c127_i32_176 dim 1 : vector<16x128xf32>, i32 -> vector<16x128xf32>
    %c315 = arith.constant 315 : index
    %1456 = memref.load %arg2[%c315] : memref<354xf32, #tpu.memory_space<smem>>
    %1457 = vector.broadcast %1456 : f32 to vector<16x128xf32>
    %1458 = arith.mulf %1457, %1455 : vector<16x128xf32>
    %1459 = arith.addf %1448, %1458 : vector<16x128xf32>
    %c342 = arith.constant 342 : index
    %1460 = memref.load %arg2[%c342] : memref<354xf32, #tpu.memory_space<smem>>
    %1461 = vector.broadcast %1460 : f32 to vector<16x128xf32>
    %1462 = arith.mulf %1461, %1455 : vector<16x128xf32>
    %1463 = arith.addf %1452, %1462 : vector<16x128xf32>
    %c126_i32_177 = arith.constant 126 : i32
    %1464 = tpu.dynamic_rotate %1454 by %c126_i32_177 dim 1 : vector<16x128xf32>, i32 -> vector<16x128xf32>
    %c316 = arith.constant 316 : index
    %1465 = memref.load %arg2[%c316] : memref<354xf32, #tpu.memory_space<smem>>
    %1466 = vector.broadcast %1465 : f32 to vector<16x128xf32>
    %1467 = arith.mulf %1466, %1464 : vector<16x128xf32>
    %1468 = arith.addf %1459, %1467 : vector<16x128xf32>
    %c343 = arith.constant 343 : index
    %1469 = memref.load %arg2[%c343] : memref<354xf32, #tpu.memory_space<smem>>
    %1470 = vector.broadcast %1469 : f32 to vector<16x128xf32>
    %1471 = arith.mulf %1470, %1464 : vector<16x128xf32>
    %1472 = arith.addf %1463, %1471 : vector<16x128xf32>
    %c125_i32_178 = arith.constant 125 : i32
    %1473 = tpu.dynamic_rotate %1454 by %c125_i32_178 dim 1 : vector<16x128xf32>, i32 -> vector<16x128xf32>
    %c317 = arith.constant 317 : index
    %1474 = memref.load %arg2[%c317] : memref<354xf32, #tpu.memory_space<smem>>
    %1475 = vector.broadcast %1474 : f32 to vector<16x128xf32>
    %1476 = arith.mulf %1475, %1473 : vector<16x128xf32>
    %1477 = arith.addf %1468, %1476 : vector<16x128xf32>
    %c344 = arith.constant 344 : index
    %1478 = memref.load %arg2[%c344] : memref<354xf32, #tpu.memory_space<smem>>
    %1479 = vector.broadcast %1478 : f32 to vector<16x128xf32>
    %1480 = arith.mulf %1479, %1473 : vector<16x128xf32>
    %1481 = arith.addf %1472, %1480 : vector<16x128xf32>
    %c0_179 = arith.constant 0 : index
    %c5_180 = arith.constant 5 : index
    %c1_181 = arith.constant 1 : index
    %c0_182 = arith.constant 0 : index
    %1482 = vector.load %arg1[%c0_179, %c5_180, %c1_181, %c0_182] : memref<1x6x20x128xf32, #tpu.memory_space<vmem>>, vector<1x1x16x128xf32>
    %1483 = vector.shape_cast %1482 : vector<1x1x16x128xf32> to vector<16x128xf32>
    %c127_i32_183 = arith.constant 127 : i32
    %1484 = tpu.dynamic_rotate %1483 by %c127_i32_183 dim 1 : vector<16x128xf32>, i32 -> vector<16x128xf32>
    %c318 = arith.constant 318 : index
    %1485 = memref.load %arg2[%c318] : memref<354xf32, #tpu.memory_space<smem>>
    %1486 = vector.broadcast %1485 : f32 to vector<16x128xf32>
    %1487 = arith.mulf %1486, %1484 : vector<16x128xf32>
    %1488 = arith.addf %1477, %1487 : vector<16x128xf32>
    %c345 = arith.constant 345 : index
    %1489 = memref.load %arg2[%c345] : memref<354xf32, #tpu.memory_space<smem>>
    %1490 = vector.broadcast %1489 : f32 to vector<16x128xf32>
    %1491 = arith.mulf %1490, %1484 : vector<16x128xf32>
    %1492 = arith.addf %1481, %1491 : vector<16x128xf32>
    %c126_i32_184 = arith.constant 126 : i32
    %1493 = tpu.dynamic_rotate %1483 by %c126_i32_184 dim 1 : vector<16x128xf32>, i32 -> vector<16x128xf32>
    %c319 = arith.constant 319 : index
    %1494 = memref.load %arg2[%c319] : memref<354xf32, #tpu.memory_space<smem>>
    %1495 = vector.broadcast %1494 : f32 to vector<16x128xf32>
    %1496 = arith.mulf %1495, %1493 : vector<16x128xf32>
    %1497 = arith.addf %1488, %1496 : vector<16x128xf32>
    %c346 = arith.constant 346 : index
    %1498 = memref.load %arg2[%c346] : memref<354xf32, #tpu.memory_space<smem>>
    %1499 = vector.broadcast %1498 : f32 to vector<16x128xf32>
    %1500 = arith.mulf %1499, %1493 : vector<16x128xf32>
    %1501 = arith.addf %1492, %1500 : vector<16x128xf32>
    %c125_i32_185 = arith.constant 125 : i32
    %1502 = tpu.dynamic_rotate %1483 by %c125_i32_185 dim 1 : vector<16x128xf32>, i32 -> vector<16x128xf32>
    %c320 = arith.constant 320 : index
    %1503 = memref.load %arg2[%c320] : memref<354xf32, #tpu.memory_space<smem>>
    %1504 = vector.broadcast %1503 : f32 to vector<16x128xf32>
    %1505 = arith.mulf %1504, %1502 : vector<16x128xf32>
    %1506 = arith.addf %1497, %1505 : vector<16x128xf32>
    %c347 = arith.constant 347 : index
    %1507 = memref.load %arg2[%c347] : memref<354xf32, #tpu.memory_space<smem>>
    %1508 = vector.broadcast %1507 : f32 to vector<16x128xf32>
    %1509 = arith.mulf %1508, %1502 : vector<16x128xf32>
    %1510 = arith.addf %1501, %1509 : vector<16x128xf32>
    %c0_186 = arith.constant 0 : index
    %c5_187 = arith.constant 5 : index
    %c2_188 = arith.constant 2 : index
    %c0_189 = arith.constant 0 : index
    %1511 = vector.load %arg1[%c0_186, %c5_187, %c2_188, %c0_189] : memref<1x6x20x128xf32, #tpu.memory_space<vmem>>, vector<1x1x16x128xf32>
    %1512 = vector.shape_cast %1511 : vector<1x1x16x128xf32> to vector<16x128xf32>
    %c127_i32_190 = arith.constant 127 : i32
    %1513 = tpu.dynamic_rotate %1512 by %c127_i32_190 dim 1 : vector<16x128xf32>, i32 -> vector<16x128xf32>
    %c321 = arith.constant 321 : index
    %1514 = memref.load %arg2[%c321] : memref<354xf32, #tpu.memory_space<smem>>
    %1515 = vector.broadcast %1514 : f32 to vector<16x128xf32>
    %1516 = arith.mulf %1515, %1513 : vector<16x128xf32>
    %1517 = arith.addf %1506, %1516 : vector<16x128xf32>
    %c348 = arith.constant 348 : index
    %1518 = memref.load %arg2[%c348] : memref<354xf32, #tpu.memory_space<smem>>
    %1519 = vector.broadcast %1518 : f32 to vector<16x128xf32>
    %1520 = arith.mulf %1519, %1513 : vector<16x128xf32>
    %1521 = arith.addf %1510, %1520 : vector<16x128xf32>
    %c126_i32_191 = arith.constant 126 : i32
    %1522 = tpu.dynamic_rotate %1512 by %c126_i32_191 dim 1 : vector<16x128xf32>, i32 -> vector<16x128xf32>
    %c322 = arith.constant 322 : index
    %1523 = memref.load %arg2[%c322] : memref<354xf32, #tpu.memory_space<smem>>
    %1524 = vector.broadcast %1523 : f32 to vector<16x128xf32>
    %1525 = arith.mulf %1524, %1522 : vector<16x128xf32>
    %1526 = arith.addf %1517, %1525 : vector<16x128xf32>
    %c349 = arith.constant 349 : index
    %1527 = memref.load %arg2[%c349] : memref<354xf32, #tpu.memory_space<smem>>
    %1528 = vector.broadcast %1527 : f32 to vector<16x128xf32>
    %1529 = arith.mulf %1528, %1522 : vector<16x128xf32>
    %1530 = arith.addf %1521, %1529 : vector<16x128xf32>
    %c125_i32_192 = arith.constant 125 : i32
    %1531 = tpu.dynamic_rotate %1512 by %c125_i32_192 dim 1 : vector<16x128xf32>, i32 -> vector<16x128xf32>
    %c323 = arith.constant 323 : index
    %1532 = memref.load %arg2[%c323] : memref<354xf32, #tpu.memory_space<smem>>
    %1533 = vector.broadcast %1532 : f32 to vector<16x128xf32>
    %1534 = arith.mulf %1533, %1531 : vector<16x128xf32>
    %1535 = arith.addf %1526, %1534 : vector<16x128xf32>
    %c350 = arith.constant 350 : index
    %1536 = memref.load %arg2[%c350] : memref<354xf32, #tpu.memory_space<smem>>
    %1537 = vector.broadcast %1536 : f32 to vector<16x128xf32>
    %1538 = arith.mulf %1537, %1531 : vector<16x128xf32>
    %1539 = arith.addf %1530, %1538 : vector<16x128xf32>
    %c0_193 = arith.constant 0 : index
    %c5_194 = arith.constant 5 : index
    %c3_195 = arith.constant 3 : index
    %c0_196 = arith.constant 0 : index
    %1540 = vector.load %arg1[%c0_193, %c5_194, %c3_195, %c0_196] : memref<1x6x20x128xf32, #tpu.memory_space<vmem>>, vector<1x1x16x128xf32>
    %1541 = vector.shape_cast %1540 : vector<1x1x16x128xf32> to vector<16x128xf32>
    %c127_i32_197 = arith.constant 127 : i32
    %1542 = tpu.dynamic_rotate %1541 by %c127_i32_197 dim 1 : vector<16x128xf32>, i32 -> vector<16x128xf32>
    %c324 = arith.constant 324 : index
    %1543 = memref.load %arg2[%c324] : memref<354xf32, #tpu.memory_space<smem>>
    %1544 = vector.broadcast %1543 : f32 to vector<16x128xf32>
    %1545 = arith.mulf %1544, %1542 : vector<16x128xf32>
    %1546 = arith.addf %1535, %1545 : vector<16x128xf32>
    %c351 = arith.constant 351 : index
    %1547 = memref.load %arg2[%c351] : memref<354xf32, #tpu.memory_space<smem>>
    %1548 = vector.broadcast %1547 : f32 to vector<16x128xf32>
    %1549 = arith.mulf %1548, %1542 : vector<16x128xf32>
    %1550 = arith.addf %1539, %1549 : vector<16x128xf32>
    %c126_i32_198 = arith.constant 126 : i32
    %1551 = tpu.dynamic_rotate %1541 by %c126_i32_198 dim 1 : vector<16x128xf32>, i32 -> vector<16x128xf32>
    %c325 = arith.constant 325 : index
    %1552 = memref.load %arg2[%c325] : memref<354xf32, #tpu.memory_space<smem>>
    %1553 = vector.broadcast %1552 : f32 to vector<16x128xf32>
    %1554 = arith.mulf %1553, %1551 : vector<16x128xf32>
    %1555 = arith.addf %1546, %1554 : vector<16x128xf32>
    %c352 = arith.constant 352 : index
    %1556 = memref.load %arg2[%c352] : memref<354xf32, #tpu.memory_space<smem>>
    %1557 = vector.broadcast %1556 : f32 to vector<16x128xf32>
    %1558 = arith.mulf %1557, %1551 : vector<16x128xf32>
    %1559 = arith.addf %1550, %1558 : vector<16x128xf32>
    %c125_i32_199 = arith.constant 125 : i32
    %1560 = tpu.dynamic_rotate %1541 by %c125_i32_199 dim 1 : vector<16x128xf32>, i32 -> vector<16x128xf32>
    %c326 = arith.constant 326 : index
    %1561 = memref.load %arg2[%c326] : memref<354xf32, #tpu.memory_space<smem>>
    %1562 = vector.broadcast %1561 : f32 to vector<16x128xf32>
    %1563 = arith.mulf %1562, %1560 : vector<16x128xf32>
    %1564 = arith.addf %1555, %1563 : vector<16x128xf32>
    %c353 = arith.constant 353 : index
    %1565 = memref.load %arg2[%c353] : memref<354xf32, #tpu.memory_space<smem>>
    %1566 = vector.broadcast %1565 : f32 to vector<16x128xf32>
    %1567 = arith.mulf %1566, %1560 : vector<16x128xf32>
    %1568 = arith.addf %1559, %1567 : vector<16x128xf32>
    %c0_200 = arith.constant 0 : index
    %c4_201 = arith.constant 4 : index
    %c0_202 = arith.constant 0 : index
    %c0_203 = arith.constant 0 : index
    %1569 = vector.load %arg3[%c0_200, %c4_201, %c0_202, %c0_203] : memref<1x6x16x128xf32, #tpu.memory_space<vmem>>, vector<1x1x16x128xf32>
    %1570 = vector.shape_cast %1569 : vector<1x1x16x128xf32> to vector<16x128xf32>
    %1571 = vector.shape_cast %1564 : vector<16x128xf32> to vector<1x1x16x128xf32>
    tpu.vector_store %arg3[%c0_200, %c4_201, %c0_202, %c0_203], %1571 {strides = array<i32>} : memref<1x6x16x128xf32, #tpu.memory_space<vmem>>, vector<1x1x16x128xf32>,
    %c0_204 = arith.constant 0 : index
    %c5_205 = arith.constant 5 : index
    %c0_206 = arith.constant 0 : index
    %c0_207 = arith.constant 0 : index
    %1572 = vector.load %arg3[%c0_204, %c5_205, %c0_206, %c0_207] : memref<1x6x16x128xf32, #tpu.memory_space<vmem>>, vector<1x1x16x128xf32>
    %1573 = vector.shape_cast %1572 : vector<1x1x16x128xf32> to vector<16x128xf32>
    %1574 = vector.shape_cast %1568 : vector<16x128xf32> to vector<1x1x16x128xf32>
    tpu.vector_store %arg3[%c0_204, %c5_205, %c0_206, %c0_207], %1574 {strides = array<i32>} : memref<1x6x16x128xf32, #tpu.memory_space<vmem>>, vector<1x1x16x128xf32>,
    return
  }
  func.func @transform_0(%arg0: i32) -> (i32, i32, i32, i32) {
    %c0_i32 = arith.constant 0 : i32
    %c0_i32_0 = arith.constant 0 : i32
    %c0_i32_1 = arith.constant 0 : i32
    %c0_i32_2 = arith.constant 0 : i32
    return %arg0, %c0_i32, %c0_i32_0, %c0_i32_1 : i32, i32, i32, i32
  }
  func.func @transform_1(%arg0: i32) -> i32 {
    %c0_i32 = arith.constant 0 : i32
    %c0_i32_0 = arith.constant 0 : i32
    return %c0_i32 : i32
  }
  func.func @transform_2(%arg0: i32) -> (i32, i32, i32, i32) {
    %c0_i32 = arith.constant 0 : i32
    %c0_i32_0 = arith.constant 0 : i32
    %c0_i32_1 = arith.constant 0 : i32
    %c0_i32_2 = arith.constant 0 : i32
    return %arg0, %c0_i32, %c0_i32_0, %c0_i32_1 : i32, i32, i32, i32
  }
}

</mosaic_0001>

<llo_original>
// kernel: tpu_custom_call.1
$region0: #{tpu_custom_call.1}
  #allocation0 [shape = 'u32[]', space=smem, size = 0x4, offset = 0x4, fixed_abs, tag = 'smem constant byte address 0x4 - core index']
  #allocation1 [shape = 'u32[144,128]{1,0:T(1,128)}', space=vmem, size = 0x12000, scoped, tag = 'internal scratch']
  %s0 = inlined_call_operand.vmem [shape: f32[2,6,20,128], index: 0, kind: input, shape index: {}]
  %s1 = inlined_call_operand.vmem [shape: f32[354], index: 1, kind: input, shape index: {}]
  %s2 = inlined_call_operand.hbm [shape: f32[2,6,16,128], index: 2, kind: output, shape index: {}]
  %s3 = sld [smem:[#allocation0]]
  $region45: #{tpu_custom_call.1} parent=0
    _
  %s5 = ssub.s32 1, %s3
  %s6 = scalar_select 0, %s5, %s3
  $region1: #{tpu_custom_call.1} parent=0
    #allocation2 [shape = 'u8[1536]{0}', space=smem, size = 0x600, scoped, tag = 'input window, operand 1, single buffered']
    #allocation3 [shape = 's32[2]{0}', space=sflag, size = 0x8, scoped, tag = 'scoped memory for tpu_custom_call.1']
    #allocation4 [shape = 's32[2]{0}', space=sflag, size = 0x8, scoped, tag = 'scoped memory for tpu_custom_call.1']
    #allocation5 [shape = 'u8[98304]{0}', space=vmem, size = 0x18000, scoped, tag = 'output window, operand 0']
    %7 = vsyncpa [#allocation4], 0
    %8 = vsyncpa [#allocation3], 0
    %s9 = scalar_lea.sflag [#allocation3], 1
    %10 = vsyncpa %s9, 0
    loop: start=0, step=1, limit=4
    $region2: #{tpu_custom_call.1} parent=1 // loop_pre_header
      _
    $region3: #{tpu_custom_call.1} parent=1 // loop_header
      %s12 = sphi 0, %s16
      %p13 = scmp.ge.s32.totalorder %s12, 4
      %s22 = sphi 0, %s24
      %s25 = sphi 0, %s22
      %s26 = sphi 0, %s25
      %s42 = sphi 0, %s26
      %s46 = sphi 0, %s46
      %s48 = sphi 0, %s46
      %s49 = sphi 0, %s48
      %s63 = sphi 0, %s49
      %s69 = sphi 0, %s71
      %s72 = sphi 0, %s69
      %s73 = sphi 0, %s72
      %s89 = sphi 0, %s73
    $region4: #{tpu_custom_call.1} parent=1 // loop_header_branch
      %15 = sbr.rel (%p13) target = $region8
    $region5: #{tpu_custom_call.1} parent=1 // loop_body
      %s17 = ssub.s32 %s12, 1
      %s18 = ssub.s32 %s12, 2
      %s19 = sadd.s32 %s12, 1
      %s20 = ssub.s32 %s12, %s19
      %p21 = scmp.eq.s32.totalorder %s20, 0
      %s23 = sadd.s32 %s22, 1
      %s24 = scalar_select %p21, %s22, %s23
      %p27 = pneg %p21
      %p28 = scmp.eq.s32.totalorder %s12, 1
      %p29 = por %p27, %p28
      %p30 = scmp.ne.s32.totalorder %s22, %s25
      %p31 = scmp.eq.s32.totalorder %s12, 0
      %p32 = por %p30, %p31
      %p33 = scmp.ne.s32.totalorder %s22, %s25
      %p34 = scmp.eq.s32.totalorder %s17, 1
      %p35 = por %p33, %p34
      %p36 = scmp.ne.s32.totalorder %s25, %s26
      %p37 = scmp.eq.s32.totalorder %s17, 0
      %p38 = por %p36, %p37
      %p39 = scmp.ne.s32.totalorder %s25, %s26
      %p40 = scmp.eq.s32.totalorder %s18, 1
      %p41 = por %p39, %p40
      %p43 = scmp.ne.s32.totalorder %s26, %s42
      %p44 = scmp.eq.s32.totalorder %s18, 0
      %p45 = por %p43, %p44
      %s47 = sadd.s32 %s46, 1
      %p50 = scmp.eq.s32.totalorder %s12, 1
      %p51 = scmp.ne.s32.totalorder %s46, %s48
      %p52 = scmp.eq.s32.totalorder %s12, 0
      %p53 = por %p51, %p52
      %p54 = scmp.ne.s32.totalorder %s46, %s48
      %p55 = scmp.eq.s32.totalorder %s17, 1
      %p56 = por %p54, %p55
      %p57 = scmp.ne.s32.totalorder %s48, %s49
      %p58 = scmp.eq.s32.totalorder %s17, 0
      %p59 = por %p57, %p58
      %p60 = scmp.ne.s32.totalorder %s48, %s49
      %p61 = scmp.eq.s32.totalorder %s18, 1
      %p62 = por %p60, %p61
      %p64 = scmp.ne.s32.totalorder %s49, %s63
      %p65 = scmp.eq.s32.totalorder %s18, 0
      %p66 = por %p64, %p65
      %s67 = ssub.s32 %s12, %s19
      %p68 = scmp.eq.s32.totalorder %s67, 0
      %s70 = sadd.s32 %s69, 1
      %s71 = scalar_select %p68, %s69, %s70
      %p74 = pneg %p68
      %p75 = scmp.eq.s32.totalorder %s12, 1
      %p76 = por %p74, %p75
      %p77 = scmp.ne.s32.totalorder %s69, %s72
      %p78 = scmp.eq.s32.totalorder %s12, 0
      %p79 = por %p77, %p78
      %p80 = scmp.ne.s32.totalorder %s69, %s72
      %p81 = scmp.eq.s32.totalorder %s17, 1
      %p82 = por %p80, %p81
      %p83 = scmp.ne.s32.totalorder %s72, %s73
      %p84 = scmp.eq.s32.totalorder %s17, 0
      %p85 = por %p83, %p84
      %p86 = scmp.ne.s32.totalorder %s72, %s73
      %p87 = scmp.eq.s32.totalorder %s18, 1
      %p88 = por %p86, %p87
      %p90 = scmp.ne.s32.totalorder %s73, %s89
      %p91 = scmp.eq.s32.totalorder %s18, 0
      %p92 = por %p90, %p91
      %p93 = scmp.le.s32.totalorder 1, %s12
      %p94 = scmp.lt.s32.totalorder %s12, 3
      %p95 = pnand %p93, %p94
      %p96 = pneg %p95
      // Predicated region
      $region9: #{tpu_custom_call.1} parent=5 // pred_check
        _
      $region10: #{tpu_custom_call.1} parent=5 // pred_check_branch
        %98 = sbr.rel (%p95) target = $region12
      $region11: #{tpu_custom_call.1} parent=5 // pred_region
        %s99 = ssub.s32 %s12, 1
        // Predicated region
        $region13: #{tpu_custom_call.1} parent=11 // pred_check
          %p100 = pneg %p59
        $region14: #{tpu_custom_call.1} parent=11 // pred_check_branch
          %102 = sbr.rel (%p100) target = $region16
        $region15: #{tpu_custom_call.1} parent=11 // pred_region
          %s104 = ssub.s32 48, 48
          %105 = vsyncadd [#allocation4], %s104
          %s107 = sshll.u32 %s1, 4
          %s108 = int_to_ptr.vmem [resolvable:$true] %s107
          %110 = dma.vmem_to_smem %s108, 48, [#allocation2], [#allocation4]
        $region16: #{tpu_custom_call.1} parent=11 // pred_fallthru
          _
      $region12: #{tpu_custom_call.1} parent=5 // pred_fallthru
        _
      %p111 = scmp.lt.s32.totalorder %s12, 2
      // Predicated region
      $region17: #{tpu_custom_call.1} parent=5 // pred_check
        %p112 = pneg %p111
      $region18: #{tpu_custom_call.1} parent=5 // pred_check_branch
        %114 = sbr.rel (%p112) target = $region20
      $region19: #{tpu_custom_call.1} parent=5 // pred_region
        // Predicated region
        $region21: #{tpu_custom_call.1} parent=19 // pred_check
          %p115 = pneg %p32
        $region22: #{tpu_custom_call.1} parent=19 // pred_check_branch
          %117 = sbr.rel (%p115) target = $region24
        $region23: #{tpu_custom_call.1} parent=19 // pred_region
          %p118 = scmp.lt.s32.totalorder %s12, 1
          %s119 = scalar_select %p118, %s12, 1
          %s120 = smul.addr %s119, 18
          %s121 = smul.addr %s120, 8
          %s122 = scalar_lea.vmem %s0, %s121
        $region24: #{tpu_custom_call.1} parent=19 // pred_fallthru
          _
      $region20: #{tpu_custom_call.1} parent=5 // pred_fallthru
        _
      %p123 = scmp.le.s32.totalorder 1, %s12
      %p124 = scmp.lt.s32.totalorder %s12, 3
      %p125 = pnand %p123, %p124
      %p126 = pneg %p125
      // Predicated region
      $region25: #{tpu_custom_call.1} parent=5 // pred_check
        _
      $region26: #{tpu_custom_call.1} parent=5 // pred_check_branch
        %128 = sbr.rel (%p125) target = $region28
      $region27: #{tpu_custom_call.1} parent=5 // pred_region
        %s129 = ssub.s32 %s12, 1
        // Predicated region
        $region29: #{tpu_custom_call.1} parent=27 // pred_check
          %p130 = pneg %p59
        $region30: #{tpu_custom_call.1} parent=27 // pred_check_branch
          %132 = sbr.rel (%p130) target = $region32
        $region31: #{tpu_custom_call.1} parent=27 // pred_region
          %133 = dma.done [#allocation4], 48
        $region32: #{tpu_custom_call.1} parent=27 // pred_fallthru
          _
        %134 = sfence
        %p135 = scmp.lt.s32.totalorder %s17, 1
        %s136 = scalar_select %p135, %s17, 1
        %s137 = smul.addr %s136, 18
        %s138 = smul.addr %s137, 8
        %s139 = scalar_lea.vmem %s0, %s138
        %p140 = pneg %p38
        %p141 = pneg %p35
        %p142 = pneg %p59
        %p143 = pneg %p56
        %p144 = pneg %p85
        %p145 = pneg %p82
        %s146 = sand.u32 %s72, 1
        %s147 = scalar_lea.sflag [#allocation3], %s146
        %s148 = sand.u32 %s72, 1
        %s149 = smul.addr %s148, 96
        %s150 = scalar_lea.vmem [#allocation5], %s149
        %p151 = scmp.lt.s32.totalorder %s17, 1
        %s152 = scalar_select %p151, %s17, 1
        %s153 = smul.addr %s152, 18
        %s154 = smul.addr %s153, 8
        %s155 = scalar_lea.vmem %s0, %s154
        %v156 = vld [vmem:[%s155] sm:$0xff]
        %v157 = vld [vmem:[%s155 + $0x8] sm:$0xff]
        %s158 = sld [smem:[#allocation2]]
        %v159 = vstv %s158
        %v160 = vmul.f32 %v159, %v156
        %v161 = vmul.f32 %v159, %v157
        %v162 = vadd.f32 %v160, 0.0
        %v163 = vadd.f32 %v161, 0.0
        %s164 = sld [smem:[#allocation2 + $0x4b]]
        %v165 = vstv %s164
        %v166 = vmul.f32 %v165, %v156
        %v167 = vmul.f32 %v165, %v157
        %v168 = vadd.f32 %v166, 0.0
        %v169 = vadd.f32 %v167, 0.0
        %s170 = sld [smem:[#allocation2 + $0x96]]
        %v171 = vstv %s170
        %v172 = vmul.f32 %v171, %v156
        %v173 = vmul.f32 %v171, %v157
        %v174 = vadd.f32 %v172, 0.0
        %v175 = vadd.f32 %v173, 0.0
        %s176 = sld [smem:[#allocation2 + $0xe1]]
        %v177 = vstv %s176
        %v178 = vmul.f32 %v177, %v156
        %v179 = vmul.f32 %v177, %v157
        %v180 = vadd.f32 %v178, 0.0
        %v181 = vadd.f32 %v179, 0.0
        %182 = vrot.lane.b32.xlu0 %v156, 127
        %v183 = vpop.permute.xlu0 %182
        %184 = vrot.lane.b32.xlu0 %v157, 127
        %v185 = vpop.permute.xlu0 %184
        %s186 = sld [smem:[#allocation2 + $0x1]]
        %v187 = vstv %s186
        %v188 = vmul.f32 %v187, %v183
        %v189 = vmul.f32 %v187, %v185
        %v190 = vadd.f32 %v162, %v188
        %v191 = vadd.f32 %v163, %v189
        %s192 = sld [smem:[#allocation2 + $0x4c]]
        %v193 = vstv %s192
        %v194 = vmul.f32 %v193, %v183
        %v195 = vmul.f32 %v193, %v185
        %v196 = vadd.f32 %v168, %v194
        %v197 = vadd.f32 %v169, %v195
        %s198 = sld [smem:[#allocation2 + $0x97]]
        %v199 = vstv %s198
        %v200 = vmul.f32 %v199, %v183
        %v201 = vmul.f32 %v199, %v185
        %v202 = vadd.f32 %v174, %v200
        %v203 = vadd.f32 %v175, %v201
        %s204 = sld [smem:[#allocation2 + $0xe2]]
        %v205 = vstv %s204
        %v206 = vmul.f32 %v205, %v183
        %v207 = vmul.f32 %v205, %v185
        %v208 = vadd.f32 %v180, %v206
        %v209 = vadd.f32 %v181, %v207
        %210 = vrot.lane.b32.xlu0 %v156, 126
        %v211 = vpop.permute.xlu0 %210
        %212 = vrot.lane.b32.xlu0 %v157, 126
        %v213 = vpop.permute.xlu0 %212
        %s214 = sld [smem:[#allocation2 + $0x2]]
        %v215 = vstv %s214
        %v216 = vmul.f32 %v215, %v211
        %v217 = vmul.f32 %v215, %v213
        %v218 = vadd.f32 %v190, %v216
        %v219 = vadd.f32 %v191, %v217
        %s220 = sld [smem:[#allocation2 + $0x4d]]
        %v221 = vstv %s220
        %v222 = vmul.f32 %v221, %v211
        %v223 = vmul.f32 %v221, %v213
        %v224 = vadd.f32 %v196, %v222
        %v225 = vadd.f32 %v197, %v223
        %s226 = sld [smem:[#allocation2 + $0x98]]
        %v227 = vstv %s226
        %v228 = vmul.f32 %v227, %v211
        %v229 = vmul.f32 %v227, %v213
        %v230 = vadd.f32 %v202, %v228
        %v231 = vadd.f32 %v203, %v229
        %s232 = sld [smem:[#allocation2 + $0xe3]]
        %v233 = vstv %s232
        %v234 = vmul.f32 %v233, %v211
        %v235 = vmul.f32 %v233, %v213
        %v236 = vadd.f32 %v208, %v234
        %v237 = vadd.f32 %v209, %v235
        %238 = vrot.lane.b32.xlu0 %v156, 125
        %v239 = vpop.permute.xlu0 %238
        %240 = vrot.lane.b32.xlu0 %v157, 125
        %v241 = vpop.permute.xlu0 %240
        %s242 = sld [smem:[#allocation2 + $0x3]]
        %v243 = vstv %s242
        %v244 = vmul.f32 %v243, %v239
        %v245 = vmul.f32 %v243, %v241
        %v246 = vadd.f32 %v218, %v244
        %v247 = vadd.f32 %v219, %v245
        %s248 = sld [smem:[#allocation2 + $0x4e]]
        %v249 = vstv %s248
        %v250 = vmul.f32 %v249, %v239
        %v251 = vmul.f32 %v249, %v241
        %v252 = vadd.f32 %v224, %v250
        %v253 = vadd.f32 %v225, %v251
        %s254 = sld [smem:[#allocation2 + $0x99]]
        %v255 = vstv %s254
        %v256 = vmul.f32 %v255, %v239
        %v257 = vmul.f32 %v255, %v241
        %v258 = vadd.f32 %v230, %v256
        %v259 = vadd.f32 %v231, %v257
        %s260 = sld [smem:[#allocation2 + $0xe4]]
        %v261 = vstv %s260
        %v262 = vmul.f32 %v261, %v239
        %v263 = vmul.f32 %v261, %v241
        %v264 = vadd.f32 %v236, %v262
        %v265 = vadd.f32 %v237, %v263
        %266 = vrot.lane.b32.xlu0 %v156, 124
        %v267 = vpop.permute.xlu0 %266
        %268 = vrot.lane.b32.xlu0 %v157, 124
        %v269 = vpop.permute.xlu0 %268
        %s270 = sld [smem:[#allocation2 + $0x4]]
        %v271 = vstv %s270
        %v272 = vmul.f32 %v271, %v267
        %v273 = vmul.f32 %v271, %v269
        %v274 = vadd.f32 %v246, %v272
        %v275 = vadd.f32 %v247, %v273
        %s276 = sld [smem:[#allocation2 + $0x4f]]
        %v277 = vstv %s276
        %v278 = vmul.f32 %v277, %v267
        %v279 = vmul.f32 %v277, %v269
        %v280 = vadd.f32 %v252, %v278
        %v281 = vadd.f32 %v253, %v279
        %s282 = sld [smem:[#allocation2 + $0x9a]]
        %v283 = vstv %s282
        %v284 = vmul.f32 %v283, %v267
        %v285 = vmul.f32 %v283, %v269
        %v286 = vadd.f32 %v258, %v284
        %v287 = vadd.f32 %v259, %v285
        %s288 = sld [smem:[#allocation2 + $0xe5]]
        %v289 = vstv %s288
        %v290 = vmul.f32 %v289, %v267
        %v291 = vmul.f32 %v289, %v269
        %v292 = vadd.f32 %v264, %v290
        %v293 = vadd.f32 %v265, %v291
        %v294 = vld [vmem:[%s155 + $0x1] sm:$0xff]
        %v295 = vld [vmem:[%s155 + $0x9] sm:$0xff]
        %s296 = sld [smem:[#allocation2 + $0x5]]
        %v297 = vstv %s296
        %v298 = vmul.f32 %v297, %v294
        %v299 = vmul.f32 %v297, %v295
        %v300 = vadd.f32 %v274, %v298
        %v301 = vadd.f32 %v275, %v299
        %s302 = sld [smem:[#allocation2 + $0x50]]
        %v303 = vstv %s302
        %v304 = vmul.f32 %v303, %v294
        %v305 = vmul.f32 %v303, %v295
        %v306 = vadd.f32 %v280, %v304
        %v307 = vadd.f32 %v281, %v305
        %s308 = sld [smem:[#allocation2 + $0x9b]]
        %v309 = vstv %s308
        %v310 = vmul.f32 %v309, %v294
        %v311 = vmul.f32 %v309, %v295
        %v312 = vadd.f32 %v286, %v310
        %v313 = vadd.f32 %v287, %v311
        %s314 = sld [smem:[#allocation2 + $0xe6]]
        %v315 = vstv %s314
        %v316 = vmul.f32 %v315, %v294
        %v317 = vmul.f32 %v315, %v295
        %v318 = vadd.f32 %v292, %v316
        %v319 = vadd.f32 %v293, %v317
        %320 = vrot.lane.b32.xlu0 %v294, 127
        %v321 = vpop.permute.xlu0 %320
        %322 = vrot.lane.b32.xlu0 %v295, 127
        %v323 = vpop.permute.xlu0 %322
        %s324 = sld [smem:[#allocation2 + $0x6]]
        %v325 = vstv %s324
        %v326 = vmul.f32 %v325, %v321
        %v327 = vmul.f32 %v325, %v323
        %v328 = vadd.f32 %v300, %v326
        %v329 = vadd.f32 %v301, %v327
        %s330 = sld [smem:[#allocation2 + $0x51]]
        %v331 = vstv %s330
        %v332 = vmul.f32 %v331, %v321
        %v333 = vmul.f32 %v331, %v323
        %v334 = vadd.f32 %v306, %v332
        %v335 = vadd.f32 %v307, %v333
        %s336 = sld [smem:[#allocation2 + $0x9c]]
        %v337 = vstv %s336
        %v338 = vmul.f32 %v337, %v321
        %v339 = vmul.f32 %v337, %v323
        %v340 = vadd.f32 %v312, %v338
        %v341 = vadd.f32 %v313, %v339
        %s342 = sld [smem:[#allocation2 + $0xe7]]
        %v343 = vstv %s342
        %v344 = vmul.f32 %v343, %v321
        %v345 = vmul.f32 %v343, %v323
        %v346 = vadd.f32 %v318, %v344
        %v347 = vadd.f32 %v319, %v345
        %348 = vrot.lane.b32.xlu0 %v294, 126
        %v349 = vpop.permute.xlu0 %348
        %350 = vrot.lane.b32.xlu0 %v295, 126
        %v351 = vpop.permute.xlu0 %350
        %s352 = sld [smem:[#allocation2 + $0x7]]
        %v353 = vstv %s352
        %v354 = vmul.f32 %v353, %v349
        %v355 = vmul.f32 %v353, %v351
        %v356 = vadd.f32 %v328, %v354
        %v357 = vadd.f32 %v329, %v355
        %s358 = sld [smem:[#allocation2 + $0x52]]
        %v359 = vstv %s358
        %v360 = vmul.f32 %v359, %v349
        %v361 = vmul.f32 %v359, %v351
        %v362 = vadd.f32 %v334, %v360
        %v363 = vadd.f32 %v335, %v361
        %s364 = sld [smem:[#allocation2 + $0x9d]]
        %v365 = vstv %s364
        %v366 = vmul.f32 %v365, %v349
        %v367 = vmul.f32 %v365, %v351
        %v368 = vadd.f32 %v340, %v366
        %v369 = vadd.f32 %v341, %v367
        %s370 = sld [smem:[#allocation2 + $0xe8]]
        %v371 = vstv %s370
        %v372 = vmul.f32 %v371, %v349
        %v373 = vmul.f32 %v371, %v351
        %v374 = vadd.f32 %v346, %v372
        %v375 = vadd.f32 %v347, %v373
        %376 = vrot.lane.b32.xlu0 %v294, 125
        %v377 = vpop.permute.xlu0 %376
        %378 = vrot.lane.b32.xlu0 %v295, 125
        %v379 = vpop.permute.xlu0 %378
        %s380 = sld [smem:[#allocation2 + $0x8]]
        %v381 = vstv %s380
        %v382 = vmul.f32 %v381, %v377
        %v383 = vmul.f32 %v381, %v379
        %v384 = vadd.f32 %v356, %v382
        %v385 = vadd.f32 %v357, %v383
        %s386 = sld [smem:[#allocation2 + $0x53]]
        %v387 = vstv %s386
        %v388 = vmul.f32 %v387, %v377
        %v389 = vmul.f32 %v387, %v379
        %v390 = vadd.f32 %v362, %v388
        %v391 = vadd.f32 %v363, %v389
        %s392 = sld [smem:[#allocation2 + $0x9e]]
        %v393 = vstv %s392
        %v394 = vmul.f32 %v393, %v377
        %v395 = vmul.f32 %v393, %v379
        %v396 = vadd.f32 %v368, %v394
        %v397 = vadd.f32 %v369, %v395
        %s398 = sld [smem:[#allocation2 + $0xe9]]
        %v399 = vstv %s398
        %v400 = vmul.f32 %v399, %v377
        %v401 = vmul.f32 %v399, %v379
        %v402 = vadd.f32 %v374, %v400
        %v403 = vadd.f32 %v375, %v401
        %404 = vrot.lane.b32.xlu0 %v294, 124
        %v405 = vpop.permute.xlu0 %404
        %406 = vrot.lane.b32.xlu0 %v295, 124
        %v407 = vpop.permute.xlu0 %406
        %s408 = sld [smem:[#allocation2 + $0x9]]
        %v409 = vstv %s408
        %v410 = vmul.f32 %v409, %v405
        %v411 = vmul.f32 %v409, %v407
        %v412 = vadd.f32 %v384, %v410
        %v413 = vadd.f32 %v385, %v411
        %s414 = sld [smem:[#allocation2 + $0x54]]
        %v415 = vstv %s414
        %v416 = vmul.f32 %v415, %v405
        %v417 = vmul.f32 %v415, %v407
        %v418 = vadd.f32 %v390, %v416
        %v419 = vadd.f32 %v391, %v417
        %s420 = sld [smem:[#allocation2 + $0x9f]]
        %v421 = vstv %s420
        %v422 = vmul.f32 %v421, %v405
        %v423 = vmul.f32 %v421, %v407
        %v424 = vadd.f32 %v396, %v422
        %v425 = vadd.f32 %v397, %v423
        %s426 = sld [smem:[#allocation2 + $0xea]]
        %v427 = vstv %s426
        %v428 = vmul.f32 %v427, %v405
        %v429 = vmul.f32 %v427, %v407
        %v430 = vadd.f32 %v402, %v428
        %v431 = vadd.f32 %v403, %v429
        %v432 = vld [vmem:[%s155 + $0x2] sm:$0xff]
        %v433 = vld [vmem:[%s155 + $0xa] sm:$0xff]
        %s434 = sld [smem:[#allocation2 + $0xa]]
        %v435 = vstv %s434
        %v436 = vmul.f32 %v435, %v432
        %v437 = vmul.f32 %v435, %v433
        %v438 = vadd.f32 %v412, %v436
        %v439 = vadd.f32 %v413, %v437
        %s440 = sld [smem:[#allocation2 + $0x55]]
        %v441 = vstv %s440
        %v442 = vmul.f32 %v441, %v432
        %v443 = vmul.f32 %v441, %v433
        %v444 = vadd.f32 %v418, %v442
        %v445 = vadd.f32 %v419, %v443
        %s446 = sld [smem:[#allocation2 + $0xa0]]
        %v447 = vstv %s446
        %v448 = vmul.f32 %v447, %v432
        %v449 = vmul.f32 %v447, %v433
        %v450 = vadd.f32 %v424, %v448
        %v451 = vadd.f32 %v425, %v449
        %s452 = sld [smem:[#allocation2 + $0xeb]]
        %v453 = vstv %s452
        %v454 = vmul.f32 %v453, %v432
        %v455 = vmul.f32 %v453, %v433
        %v456 = vadd.f32 %v430, %v454
        %v457 = vadd.f32 %v431, %v455
        %458 = vrot.lane.b32.xlu0 %v432, 127
        %v459 = vpop.permute.xlu0 %458
        %460 = vrot.lane.b32.xlu0 %v433, 127
        %v461 = vpop.permute.xlu0 %460
        %s462 = sld [smem:[#allocation2 + $0xb]]
        %v463 = vstv %s462
        %v464 = vmul.f32 %v463, %v459
        %v465 = vmul.f32 %v463, %v461
        %v466 = vadd.f32 %v438, %v464
        %v467 = vadd.f32 %v439, %v465
        %s468 = sld [smem:[#allocation2 + $0x56]]
        %v469 = vstv %s468
        %v470 = vmul.f32 %v469, %v459
        %v471 = vmul.f32 %v469, %v461
        %v472 = vadd.f32 %v444, %v470
        %v473 = vadd.f32 %v445, %v471
        %s474 = sld [smem:[#allocation2 + $0xa1]]
        %v475 = vstv %s474
        %v476 = vmul.f32 %v475, %v459
        %v477 = vmul.f32 %v475, %v461
        %v478 = vadd.f32 %v450, %v476
        %v479 = vadd.f32 %v451, %v477
        %s480 = sld [smem:[#allocation2 + $0xec]]
        %v481 = vstv %s480
        %v482 = vmul.f32 %v481, %v459
        %v483 = vmul.f32 %v481, %v461
        %v484 = vadd.f32 %v456, %v482
        %v485 = vadd.f32 %v457, %v483
        %486 = vrot.lane.b32.xlu0 %v432, 126
        %v487 = vpop.permute.xlu0 %486
        %488 = vrot.lane.b32.xlu0 %v433, 126
        %v489 = vpop.permute.xlu0 %488
        %s490 = sld [smem:[#allocation2 + $0xc]]
        %v491 = vstv %s490
        %v492 = vmul.f32 %v491, %v487
        %v493 = vmul.f32 %v491, %v489
        %v494 = vadd.f32 %v466, %v492
        %v495 = vadd.f32 %v467, %v493
        %s496 = sld [smem:[#allocation2 + $0x57]]
        %v497 = vstv %s496
        %v498 = vmul.f32 %v497, %v487
        %v499 = vmul.f32 %v497, %v489
        %v500 = vadd.f32 %v472, %v498
        %v501 = vadd.f32 %v473, %v499
        %s502 = sld [smem:[#allocation2 + $0xa2]]
        %v503 = vstv %s502
        %v504 = vmul.f32 %v503, %v487
        %v505 = vmul.f32 %v503, %v489
        %v506 = vadd.f32 %v478, %v504
        %v507 = vadd.f32 %v479, %v505
        %s508 = sld [smem:[#allocation2 + $0xed]]
        %v509 = vstv %s508
        %v510 = vmul.f32 %v509, %v487
        %v511 = vmul.f32 %v509, %v489
        %v512 = vadd.f32 %v484, %v510
        %v513 = vadd.f32 %v485, %v511
        %514 = vrot.lane.b32.xlu0 %v432, 125
        %v515 = vpop.permute.xlu0 %514
        %516 = vrot.lane.b32.xlu0 %v433, 125
        %v517 = vpop.permute.xlu0 %516
        %s518 = sld [smem:[#allocation2 + $0xd]]
        %v519 = vstv %s518
        %v520 = vmul.f32 %v519, %v515
        %v521 = vmul.f32 %v519, %v517
        %v522 = vadd.f32 %v494, %v520
        %v523 = vadd.f32 %v495, %v521
        %s524 = sld [smem:[#allocation2 + $0x58]]
        %v525 = vstv %s524
        %v526 = vmul.f32 %v525, %v515
        %v527 = vmul.f32 %v525, %v517
        %v528 = vadd.f32 %v500, %v526
        %v529 = vadd.f32 %v501, %v527
        %s530 = sld [smem:[#allocation2 + $0xa3]]
        %v531 = vstv %s530
        %v532 = vmul.f32 %v531, %v515
        %v533 = vmul.f32 %v531, %v517
        %v534 = vadd.f32 %v506, %v532
        %v535 = vadd.f32 %v507, %v533
        %s536 = sld [smem:[#allocation2 + $0xee]]
        %v537 = vstv %s536
        %v538 = vmul.f32 %v537, %v515
        %v539 = vmul.f32 %v537, %v517
        %v540 = vadd.f32 %v512, %v538
        %v541 = vadd.f32 %v513, %v539
        %542 = vrot.lane.b32.xlu0 %v432, 124
        %v543 = vpop.permute.xlu0 %542
        %544 = vrot.lane.b32.xlu0 %v433, 124
        %v545 = vpop.permute.xlu0 %544
        %s546 = sld [smem:[#allocation2 + $0xe]]
        %v547 = vstv %s546
        %v548 = vmul.f32 %v547, %v543
        %v549 = vmul.f32 %v547, %v545
        %v550 = vadd.f32 %v522, %v548
        %v551 = vadd.f32 %v523, %v549
        %s552 = sld [smem:[#allocation2 + $0x59]]
        %v553 = vstv %s552
        %v554 = vmul.f32 %v553, %v543
        %v555 = vmul.f32 %v553, %v545
        %v556 = vadd.f32 %v528, %v554
        %v557 = vadd.f32 %v529, %v555
        %s558 = sld [smem:[#allocation2 + $0xa4]]
        %v559 = vstv %s558
        %v560 = vmul.f32 %v559, %v543
        %v561 = vmul.f32 %v559, %v545
        %v562 = vadd.f32 %v534, %v560
        %v563 = vadd.f32 %v535, %v561
        %s564 = sld [smem:[#allocation2 + $0xef]]
        %v565 = vstv %s564
        %v566 = vmul.f32 %v565, %v543
        %v567 = vmul.f32 %v565, %v545
        %v568 = vadd.f32 %v540, %v566
        %v569 = vadd.f32 %v541, %v567
        %v570 = vld [vmem:[%s155 + $0x3] sm:$0xff]
        %v571 = vld [vmem:[%s155 + $0xb] sm:$0xff]
        %s572 = sld [smem:[#allocation2 + $0xf]]
        %v573 = vstv %s572
        %v574 = vmul.f32 %v573, %v570
        %v575 = vmul.f32 %v573, %v571
        %v576 = vadd.f32 %v550, %v574
        %v577 = vadd.f32 %v551, %v575
        %s578 = sld [smem:[#allocation2 + $0x5a]]
        %v579 = vstv %s578
        %v580 = vmul.f32 %v579, %v570
        %v581 = vmul.f32 %v579, %v571
        %v582 = vadd.f32 %v556, %v580
        %v583 = vadd.f32 %v557, %v581
        %s584 = sld [smem:[#allocation2 + $0xa5]]
        %v585 = vstv %s584
        %v586 = vmul.f32 %v585, %v570
        %v587 = vmul.f32 %v585, %v571
        %v588 = vadd.f32 %v562, %v586
        %v589 = vadd.f32 %v563, %v587
        %s590 = sld [smem:[#allocation2 + $0xf0]]
        %v591 = vstv %s590
        %v592 = vmul.f32 %v591, %v570
        %v593 = vmul.f32 %v591, %v571
        %v594 = vadd.f32 %v568, %v592
        %v595 = vadd.f32 %v569, %v593
        %596 = vrot.lane.b32.xlu0 %v570, 127
        %v597 = vpop.permute.xlu0 %596
        %598 = vrot.lane.b32.xlu0 %v571, 127
        %v599 = vpop.permute.xlu0 %598
        %s600 = sld [smem:[#allocation2 + $0x10]]
        %v601 = vstv %s600
        %v602 = vmul.f32 %v601, %v597
        %v603 = vmul.f32 %v601, %v599
        %v604 = vadd.f32 %v576, %v602
        %v605 = vadd.f32 %v577, %v603
        %s606 = sld [smem:[#allocation2 + $0x5b]]
        %v607 = vstv %s606
        %v608 = vmul.f32 %v607, %v597
        %v609 = vmul.f32 %v607, %v599
        %v610 = vadd.f32 %v582, %v608
        %v611 = vadd.f32 %v583, %v609
        %s612 = sld [smem:[#allocation2 + $0xa6]]
        %v613 = vstv %s612
        %v614 = vmul.f32 %v613, %v597
        %v615 = vmul.f32 %v613, %v599
        %v616 = vadd.f32 %v588, %v614
        %v617 = vadd.f32 %v589, %v615
        %s618 = sld [smem:[#allocation2 + $0xf1]]
        %v619 = vstv %s618
        %v620 = vmul.f32 %v619, %v597
        %v621 = vmul.f32 %v619, %v599
        %v622 = vadd.f32 %v594, %v620
        %v623 = vadd.f32 %v595, %v621
        %624 = vrot.lane.b32.xlu0 %v570, 126
        %v625 = vpop.permute.xlu0 %624
        %626 = vrot.lane.b32.xlu0 %v571, 126
        %v627 = vpop.permute.xlu0 %626
        %s628 = sld [smem:[#allocation2 + $0x11]]
        %v629 = vstv %s628
        %v630 = vmul.f32 %v629, %v625
        %v631 = vmul.f32 %v629, %v627
        %v632 = vadd.f32 %v604, %v630
        %v633 = vadd.f32 %v605, %v631
        %s634 = sld [smem:[#allocation2 + $0x5c]]
        %v635 = vstv %s634
        %v636 = vmul.f32 %v635, %v625
        %v637 = vmul.f32 %v635, %v627
        %v638 = vadd.f32 %v610, %v636
        %v639 = vadd.f32 %v611, %v637
        %s640 = sld [smem:[#allocation2 + $0xa7]]
        %v641 = vstv %s640
        %v642 = vmul.f32 %v641, %v625
        %v643 = vmul.f32 %v641, %v627
        %v644 = vadd.f32 %v616, %v642
        %v645 = vadd.f32 %v617, %v643
        %s646 = sld [smem:[#allocation2 + $0xf2]]
        %v647 = vstv %s646
        %v648 = vmul.f32 %v647, %v625
        %v649 = vmul.f32 %v647, %v627
        %v650 = vadd.f32 %v622, %v648
        %v651 = vadd.f32 %v623, %v649
        %652 = vrot.lane.b32.xlu0 %v570, 125
        %v653 = vpop.permute.xlu0 %652
        %654 = vrot.lane.b32.xlu0 %v571, 125
        %v655 = vpop.permute.xlu0 %654
        %s656 = sld [smem:[#allocation2 + $0x12]]
        %v657 = vstv %s656
        %v658 = vmul.f32 %v657, %v653
        %v659 = vmul.f32 %v657, %v655
        %v660 = vadd.f32 %v632, %v658
        %v661 = vadd.f32 %v633, %v659
        %s662 = sld [smem:[#allocation2 + $0x5d]]
        %v663 = vstv %s662
        %v664 = vmul.f32 %v663, %v653
        %v665 = vmul.f32 %v663, %v655
        %v666 = vadd.f32 %v638, %v664
        %v667 = vadd.f32 %v639, %v665
        %s668 = sld [smem:[#allocation2 + $0xa8]]
        %v669 = vstv %s668
        %v670 = vmul.f32 %v669, %v653
        %v671 = vmul.f32 %v669, %v655
        %v672 = vadd.f32 %v644, %v670
        %v673 = vadd.f32 %v645, %v671
        %s674 = sld [smem:[#allocation2 + $0xf3]]
        %v675 = vstv %s674
        %v676 = vmul.f32 %v675, %v653
        %v677 = vmul.f32 %v675, %v655
        %v678 = vadd.f32 %v650, %v676
        %v679 = vadd.f32 %v651, %v677
        %680 = vrot.lane.b32.xlu0 %v570, 124
        %v681 = vpop.permute.xlu0 %680
        %682 = vrot.lane.b32.xlu0 %v571, 124
        %v683 = vpop.permute.xlu0 %682
        %s684 = sld [smem:[#allocation2 + $0x13]]
        %v685 = vstv %s684
        %v686 = vmul.f32 %v685, %v681
        %v687 = vmul.f32 %v685, %v683
        %v688 = vadd.f32 %v660, %v686
        %v689 = vadd.f32 %v661, %v687
        %s690 = sld [smem:[#allocation2 + $0x5e]]
        %v691 = vstv %s690
        %v692 = vmul.f32 %v691, %v681
        %v693 = vmul.f32 %v691, %v683
        %v694 = vadd.f32 %v666, %v692
        %v695 = vadd.f32 %v667, %v693
        %s696 = sld [smem:[#allocation2 + $0xa9]]
        %v697 = vstv %s696
        %v698 = vmul.f32 %v697, %v681
        %v699 = vmul.f32 %v697, %v683
        %v700 = vadd.f32 %v672, %v698
        %v701 = vadd.f32 %v673, %v699
        %s702 = sld [smem:[#allocation2 + $0xf4]]
        %v703 = vstv %s702
        %v704 = vmul.f32 %v703, %v681
        %v705 = vmul.f32 %v703, %v683
        %v706 = vadd.f32 %v678, %v704
        %v707 = vadd.f32 %v679, %v705
        %v708 = vld [vmem:[%s155 + $0x4] sm:$0xff]
        %v709 = vld [vmem:[%s155 + $0xc] sm:$0xff]
        %s710 = sld [smem:[#allocation2 + $0x14]]
        %v711 = vstv %s710
        %v712 = vmul.f32 %v711, %v708
        %v713 = vmul.f32 %v711, %v709
        %v714 = vadd.f32 %v688, %v712
        %v715 = vadd.f32 %v689, %v713
        %s716 = sld [smem:[#allocation2 + $0x5f]]
        %v717 = vstv %s716
        %v718 = vmul.f32 %v717, %v708
        %v719 = vmul.f32 %v717, %v709
        %v720 = vadd.f32 %v694, %v718
        %v721 = vadd.f32 %v695, %v719
        %s722 = sld [smem:[#allocation2 + $0xaa]]
        %v723 = vstv %s722
        %v724 = vmul.f32 %v723, %v708
        %v725 = vmul.f32 %v723, %v709
        %v726 = vadd.f32 %v700, %v724
        %v727 = vadd.f32 %v701, %v725
        %s728 = sld [smem:[#allocation2 + $0xf5]]
        %v729 = vstv %s728
        %v730 = vmul.f32 %v729, %v708
        %v731 = vmul.f32 %v729, %v709
        %v732 = vadd.f32 %v706, %v730
        %v733 = vadd.f32 %v707, %v731
        %734 = vrot.lane.b32.xlu0 %v708, 127
        %v735 = vpop.permute.xlu0 %734
        %736 = vrot.lane.b32.xlu0 %v709, 127
        %v737 = vpop.permute.xlu0 %736
        %s738 = sld [smem:[#allocation2 + $0x15]]
        %v739 = vstv %s738
        %v740 = vmul.f32 %v739, %v735
        %v741 = vmul.f32 %v739, %v737
        %v742 = vadd.f32 %v714, %v740
        %v743 = vadd.f32 %v715, %v741
        %s744 = sld [smem:[#allocation2 + $0x60]]
        %v745 = vstv %s744
        %v746 = vmul.f32 %v745, %v735
        %v747 = vmul.f32 %v745, %v737
        %v748 = vadd.f32 %v720, %v746
        %v749 = vadd.f32 %v721, %v747
        %s750 = sld [smem:[#allocation2 + $0xab]]
        %v751 = vstv %s750
        %v752 = vmul.f32 %v751, %v735
        %v753 = vmul.f32 %v751, %v737
        %v754 = vadd.f32 %v726, %v752
        %v755 = vadd.f32 %v727, %v753
        %s756 = sld [smem:[#allocation2 + $0xf6]]
        %v757 = vstv %s756
        %v758 = vmul.f32 %v757, %v735
        %v759 = vmul.f32 %v757, %v737
        %v760 = vadd.f32 %v732, %v758
        %v761 = vadd.f32 %v733, %v759
        %762 = vrot.lane.b32.xlu0 %v708, 126
        %v763 = vpop.permute.xlu0 %762
        %764 = vrot.lane.b32.xlu0 %v709, 126
        %v765 = vpop.permute.xlu0 %764
        %s766 = sld [smem:[#allocation2 + $0x16]]
        %v767 = vstv %s766
        %v768 = vmul.f32 %v767, %v763
        %v769 = vmul.f32 %v767, %v765
        %v770 = vadd.f32 %v742, %v768
        %v771 = vadd.f32 %v743, %v769
        %s772 = sld [smem:[#allocation2 + $0x61]]
        %v773 = vstv %s772
        %v774 = vmul.f32 %v773, %v763
        %v775 = vmul.f32 %v773, %v765
        %v776 = vadd.f32 %v748, %v774
        %v777 = vadd.f32 %v749, %v775
        %s778 = sld [smem:[#allocation2 + $0xac]]
        %v779 = vstv %s778
        %v780 = vmul.f32 %v779, %v763
        %v781 = vmul.f32 %v779, %v765
        %v782 = vadd.f32 %v754, %v780
        %v783 = vadd.f32 %v755, %v781
        %s784 = sld [smem:[#allocation2 + $0xf7]]
        %v785 = vstv %s784
        %v786 = vmul.f32 %v785, %v763
        %v787 = vmul.f32 %v785, %v765
        %v788 = vadd.f32 %v760, %v786
        %v789 = vadd.f32 %v761, %v787
        %790 = vrot.lane.b32.xlu0 %v708, 125
        %v791 = vpop.permute.xlu0 %790
        %792 = vrot.lane.b32.xlu0 %v709, 125
        %v793 = vpop.permute.xlu0 %792
        %s794 = sld [smem:[#allocation2 + $0x17]]
        %v795 = vstv %s794
        %v796 = vmul.f32 %v795, %v791
        %v797 = vmul.f32 %v795, %v793
        %v798 = vadd.f32 %v770, %v796
        %v799 = vadd.f32 %v771, %v797
        %s800 = sld [smem:[#allocation2 + $0x62]]
        %v801 = vstv %s800
        %v802 = vmul.f32 %v801, %v791
        %v803 = vmul.f32 %v801, %v793
        %v804 = vadd.f32 %v776, %v802
        %v805 = vadd.f32 %v777, %v803
        %s806 = sld [smem:[#allocation2 + $0xad]]
        %v807 = vstv %s806
        %v808 = vmul.f32 %v807, %v791
        %v809 = vmul.f32 %v807, %v793
        %v810 = vadd.f32 %v782, %v808
        %v811 = vadd.f32 %v783, %v809
        %s812 = sld [smem:[#allocation2 + $0xf8]]
        %v813 = vstv %s812
        %v814 = vmul.f32 %v813, %v791
        %v815 = vmul.f32 %v813, %v793
        %v816 = vadd.f32 %v788, %v814
        %v817 = vadd.f32 %v789, %v815
        %818 = vrot.lane.b32.xlu0 %v708, 124
        %v819 = vpop.permute.xlu0 %818
        %820 = vrot.lane.b32.xlu0 %v709, 124
        %v821 = vpop.permute.xlu0 %820
        %s822 = sld [smem:[#allocation2 + $0x18]]
        %v823 = vstv %s822
        %v824 = vmul.f32 %v823, %v819
        %v825 = vmul.f32 %v823, %v821
        %v826 = vadd.f32 %v798, %v824
        %v827 = vadd.f32 %v799, %v825
        %s828 = sld [smem:[#allocation2 + $0x63]]
        %v829 = vstv %s828
        %v830 = vmul.f32 %v829, %v819
        %v831 = vmul.f32 %v829, %v821
        %v832 = vadd.f32 %v804, %v830
        %v833 = vadd.f32 %v805, %v831
        %s834 = sld [smem:[#allocation2 + $0xae]]
        %v835 = vstv %s834
        %v836 = vmul.f32 %v835, %v819
        %v837 = vmul.f32 %v835, %v821
        %v838 = vadd.f32 %v810, %v836
        %v839 = vadd.f32 %v811, %v837
        %s840 = sld [smem:[#allocation2 + $0xf9]]
        %v841 = vstv %s840
        %v842 = vmul.f32 %v841, %v819
        %v843 = vmul.f32 %v841, %v821
        %v844 = vadd.f32 %v816, %v842
        %v845 = vadd.f32 %v817, %v843
        %s846 = scalar_lea.vmem %s155, 24
        %v847 = vld [vmem:[%s846] sm:$0xff]
        %v848 = vld [vmem:[%s846 + $0x8] sm:$0xff]
        %s849 = sld [smem:[#allocation2 + $0x19]]
        %v850 = vstv %s849
        %v851 = vmul.f32 %v850, %v847
        %v852 = vmul.f32 %v850, %v848
        %v853 = vadd.f32 %v826, %v851
        %v854 = vadd.f32 %v827, %v852
        %s855 = sld [smem:[#allocation2 + $0x64]]
        %v856 = vstv %s855
        %v857 = vmul.f32 %v856, %v847
        %v858 = vmul.f32 %v856, %v848
        %v859 = vadd.f32 %v832, %v857
        %v860 = vadd.f32 %v833, %v858
        %s861 = sld [smem:[#allocation2 + $0xaf]]
        %v862 = vstv %s861
        %v863 = vmul.f32 %v862, %v847
        %v864 = vmul.f32 %v862, %v848
        %v865 = vadd.f32 %v838, %v863
        %v866 = vadd.f32 %v839, %v864
        %s867 = sld [smem:[#allocation2 + $0xfa]]
        %v868 = vstv %s867
        %v869 = vmul.f32 %v868, %v847
        %v870 = vmul.f32 %v868, %v848
        %v871 = vadd.f32 %v844, %v869
        %v872 = vadd.f32 %v845, %v870
        %873 = vrot.lane.b32.xlu0 %v847, 127
        %v874 = vpop.permute.xlu0 %873
        %875 = vrot.lane.b32.xlu0 %v848, 127
        %v876 = vpop.permute.xlu0 %875
        %s877 = sld [smem:[#allocation2 + $0x1a]]
        %v878 = vstv %s877
        %v879 = vmul.f32 %v878, %v874
        %v880 = vmul.f32 %v878, %v876
        %v881 = vadd.f32 %v853, %v879
        %v882 = vadd.f32 %v854, %v880
        %s883 = sld [smem:[#allocation2 + $0x65]]
        %v884 = vstv %s883
        %v885 = vmul.f32 %v884, %v874
        %v886 = vmul.f32 %v884, %v876
        %v887 = vadd.f32 %v859, %v885
        %v888 = vadd.f32 %v860, %v886
        %s889 = sld [smem:[#allocation2 + $0xb0]]
        %v890 = vstv %s889
        %v891 = vmul.f32 %v890, %v874
        %v892 = vmul.f32 %v890, %v876
        %v893 = vadd.f32 %v865, %v891
        %v894 = vadd.f32 %v866, %v892
        %s895 = sld [smem:[#allocation2 + $0xfb]]
        %v896 = vstv %s895
        %v897 = vmul.f32 %v896, %v874
        %v898 = vmul.f32 %v896, %v876
        %v899 = vadd.f32 %v871, %v897
        %v900 = vadd.f32 %v872, %v898
        %901 = vrot.lane.b32.xlu0 %v847, 126
        %v902 = vpop.permute.xlu0 %901
        %903 = vrot.lane.b32.xlu0 %v848, 126
        %v904 = vpop.permute.xlu0 %903
        %s905 = sld [smem:[#allocation2 + $0x1b]]
        %v906 = vstv %s905
        %v907 = vmul.f32 %v906, %v902
        %v908 = vmul.f32 %v906, %v904
        %v909 = vadd.f32 %v881, %v907
        %v910 = vadd.f32 %v882, %v908
        %s911 = sld [smem:[#allocation2 + $0x66]]
        %v912 = vstv %s911
        %v913 = vmul.f32 %v912, %v902
        %v914 = vmul.f32 %v912, %v904
        %v915 = vadd.f32 %v887, %v913
        %v916 = vadd.f32 %v888, %v914
        %s917 = sld [smem:[#allocation2 + $0xb1]]
        %v918 = vstv %s917
        %v919 = vmul.f32 %v918, %v902
        %v920 = vmul.f32 %v918, %v904
        %v921 = vadd.f32 %v893, %v919
        %v922 = vadd.f32 %v894, %v920
        %s923 = sld [smem:[#allocation2 + $0xfc]]
        %v924 = vstv %s923
        %v925 = vmul.f32 %v924, %v902
        %v926 = vmul.f32 %v924, %v904
        %v927 = vadd.f32 %v899, %v925
        %v928 = vadd.f32 %v900, %v926
        %929 = vrot.lane.b32.xlu0 %v847, 125
        %v930 = vpop.permute.xlu0 %929
        %931 = vrot.lane.b32.xlu0 %v848, 125
        %v932 = vpop.permute.xlu0 %931
        %s933 = sld [smem:[#allocation2 + $0x1c]]
        %v934 = vstv %s933
        %v935 = vmul.f32 %v934, %v930
        %v936 = vmul.f32 %v934, %v932
        %v937 = vadd.f32 %v909, %v935
        %v938 = vadd.f32 %v910, %v936
        %s939 = sld [smem:[#allocation2 + $0x67]]
        %v940 = vstv %s939
        %v941 = vmul.f32 %v940, %v930
        %v942 = vmul.f32 %v940, %v932
        %v943 = vadd.f32 %v915, %v941
        %v944 = vadd.f32 %v916, %v942
        %s945 = sld [smem:[#allocation2 + $0xb2]]
        %v946 = vstv %s945
        %v947 = vmul.f32 %v946, %v930
        %v948 = vmul.f32 %v946, %v932
        %v949 = vadd.f32 %v921, %v947
        %v950 = vadd.f32 %v922, %v948
        %s951 = sld [smem:[#allocation2 + $0xfd]]
        %v952 = vstv %s951
        %v953 = vmul.f32 %v952, %v930
        %v954 = vmul.f32 %v952, %v932
        %v955 = vadd.f32 %v927, %v953
        %v956 = vadd.f32 %v928, %v954
        %957 = vrot.lane.b32.xlu0 %v847, 124
        %v958 = vpop.permute.xlu0 %957
        %959 = vrot.lane.b32.xlu0 %v848, 124
        %v960 = vpop.permute.xlu0 %959
        %s961 = sld [smem:[#allocation2 + $0x1d]]
        %v962 = vstv %s961
        %v963 = vmul.f32 %v962, %v958
        %v964 = vmul.f32 %v962, %v960
        %v965 = vadd.f32 %v937, %v963
        %v966 = vadd.f32 %v938, %v964
        %s967 = sld [smem:[#allocation2 + $0x68]]
        %v968 = vstv %s967
        %v969 = vmul.f32 %v968, %v958
        %v970 = vmul.f32 %v968, %v960
        %v971 = vadd.f32 %v943, %v969
        %v972 = vadd.f32 %v944, %v970
        %s973 = sld [smem:[#allocation2 + $0xb3]]
        %v974 = vstv %s973
        %v975 = vmul.f32 %v974, %v958
        %v976 = vmul.f32 %v974, %v960
        %v977 = vadd.f32 %v949, %v975
        %v978 = vadd.f32 %v950, %v976
        %s979 = sld [smem:[#allocation2 + $0xfe]]
        %v980 = vstv %s979
        %v981 = vmul.f32 %v980, %v958
        %v982 = vmul.f32 %v980, %v960
        %v983 = vadd.f32 %v955, %v981
        %v984 = vadd.f32 %v956, %v982
        %v985 = vld [vmem:[%s846 + $0x1] sm:$0xff]
        %v986 = vld [vmem:[%s846 + $0x9] sm:$0xff]
        %s987 = sld [smem:[#allocation2 + $0x1e]]
        %v988 = vstv %s987
        %v989 = vmul.f32 %v988, %v985
        %v990 = vmul.f32 %v988, %v986
        %v991 = vadd.f32 %v965, %v989
        %v992 = vadd.f32 %v966, %v990
        %s993 = sld [smem:[#allocation2 + $0x69]]
        %v994 = vstv %s993
        %v995 = vmul.f32 %v994, %v985
        %v996 = vmul.f32 %v994, %v986
        %v997 = vadd.f32 %v971, %v995
        %v998 = vadd.f32 %v972, %v996
        %s999 = sld [smem:[#allocation2 + $0xb4]]
        %v1000 = vstv %s999
        %v1001 = vmul.f32 %v1000, %v985
        %v1002 = vmul.f32 %v1000, %v986
        %v1003 = vadd.f32 %v977, %v1001
        %v1004 = vadd.f32 %v978, %v1002
        %s1005 = sld [smem:[#allocation2 + $0xff]]
        %v1006 = vstv %s1005
        %v1007 = vmul.f32 %v1006, %v985
        %v1008 = vmul.f32 %v1006, %v986
        %v1009 = vadd.f32 %v983, %v1007
        %v1010 = vadd.f32 %v984, %v1008
        %1011 = vrot.lane.b32.xlu0 %v985, 127
        %v1012 = vpop.permute.xlu0 %1011
        %1013 = vrot.lane.b32.xlu0 %v986, 127
        %v1014 = vpop.permute.xlu0 %1013
        %s1015 = sld [smem:[#allocation2 + $0x1f]]
        %v1016 = vstv %s1015
        %v1017 = vmul.f32 %v1016, %v1012
        %v1018 = vmul.f32 %v1016, %v1014
        %v1019 = vadd.f32 %v991, %v1017
        %v1020 = vadd.f32 %v992, %v1018
        %s1021 = sld [smem:[#allocation2 + $0x6a]]
        %v1022 = vstv %s1021
        %v1023 = vmul.f32 %v1022, %v1012
        %v1024 = vmul.f32 %v1022, %v1014
        %v1025 = vadd.f32 %v997, %v1023
        %v1026 = vadd.f32 %v998, %v1024
        %s1027 = sld [smem:[#allocation2 + $0xb5]]
        %v1028 = vstv %s1027
        %v1029 = vmul.f32 %v1028, %v1012
        %v1030 = vmul.f32 %v1028, %v1014
        %v1031 = vadd.f32 %v1003, %v1029
        %v1032 = vadd.f32 %v1004, %v1030
        %s1033 = sld [smem:[#allocation2 + $0x100]]
        %v1034 = vstv %s1033
        %v1035 = vmul.f32 %v1034, %v1012
        %v1036 = vmul.f32 %v1034, %v1014
        %v1037 = vadd.f32 %v1009, %v1035
        %v1038 = vadd.f32 %v1010, %v1036
        %1039 = vrot.lane.b32.xlu0 %v985, 126
        %v1040 = vpop.permute.xlu0 %1039
        %1041 = vrot.lane.b32.xlu0 %v986, 126
        %v1042 = vpop.permute.xlu0 %1041
        %s1043 = sld [smem:[#allocation2 + $0x20]]
        %v1044 = vstv %s1043
        %v1045 = vmul.f32 %v1044, %v1040
        %v1046 = vmul.f32 %v1044, %v1042
        %v1047 = vadd.f32 %v1019, %v1045
        %v1048 = vadd.f32 %v1020, %v1046
        %s1049 = sld [smem:[#allocation2 + $0x6b]]
        %v1050 = vstv %s1049
        %v1051 = vmul.f32 %v1050, %v1040
        %v1052 = vmul.f32 %v1050, %v1042
        %v1053 = vadd.f32 %v1025, %v1051
        %v1054 = vadd.f32 %v1026, %v1052
        %s1055 = sld [smem:[#allocation2 + $0xb6]]
        %v1056 = vstv %s1055
        %v1057 = vmul.f32 %v1056, %v1040
        %v1058 = vmul.f32 %v1056, %v1042
        %v1059 = vadd.f32 %v1031, %v1057
        %v1060 = vadd.f32 %v1032, %v1058
        %s1061 = sld [smem:[#allocation2 + $0x101]]
        %v1062 = vstv %s1061
        %v1063 = vmul.f32 %v1062, %v1040
        %v1064 = vmul.f32 %v1062, %v1042
        %v1065 = vadd.f32 %v1037, %v1063
        %v1066 = vadd.f32 %v1038, %v1064
        %1067 = vrot.lane.b32.xlu0 %v985, 125
        %v1068 = vpop.permute.xlu0 %1067
        %1069 = vrot.lane.b32.xlu0 %v986, 125
        %v1070 = vpop.permute.xlu0 %1069
        %s1071 = sld [smem:[#allocation2 + $0x21]]
        %v1072 = vstv %s1071
        %v1073 = vmul.f32 %v1072, %v1068
        %v1074 = vmul.f32 %v1072, %v1070
        %v1075 = vadd.f32 %v1047, %v1073
        %v1076 = vadd.f32 %v1048, %v1074
        %s1077 = sld [smem:[#allocation2 + $0x6c]]
        %v1078 = vstv %s1077
        %v1079 = vmul.f32 %v1078, %v1068
        %v1080 = vmul.f32 %v1078, %v1070
        %v1081 = vadd.f32 %v1053, %v1079
        %v1082 = vadd.f32 %v1054, %v1080
        %s1083 = sld [smem:[#allocation2 + $0xb7]]
        %v1084 = vstv %s1083
        %v1085 = vmul.f32 %v1084, %v1068
        %v1086 = vmul.f32 %v1084, %v1070
        %v1087 = vadd.f32 %v1059, %v1085
        %v1088 = vadd.f32 %v1060, %v1086
        %s1089 = sld [smem:[#allocation2 + $0x102]]
        %v1090 = vstv %s1089
        %v1091 = vmul.f32 %v1090, %v1068
        %v1092 = vmul.f32 %v1090, %v1070
        %v1093 = vadd.f32 %v1065, %v1091
        %v1094 = vadd.f32 %v1066, %v1092
        %1095 = vrot.lane.b32.xlu0 %v985, 124
        %v1096 = vpop.permute.xlu0 %1095
        %1097 = vrot.lane.b32.xlu0 %v986, 124
        %v1098 = vpop.permute.xlu0 %1097
        %s1099 = sld [smem:[#allocation2 + $0x22]]
        %v1100 = vstv %s1099
        %v1101 = vmul.f32 %v1100, %v1096
        %v1102 = vmul.f32 %v1100, %v1098
        %v1103 = vadd.f32 %v1075, %v1101
        %v1104 = vadd.f32 %v1076, %v1102
        %s1105 = sld [smem:[#allocation2 + $0x6d]]
        %v1106 = vstv %s1105
        %v1107 = vmul.f32 %v1106, %v1096
        %v1108 = vmul.f32 %v1106, %v1098
        %v1109 = vadd.f32 %v1081, %v1107
        %v1110 = vadd.f32 %v1082, %v1108
        %s1111 = sld [smem:[#allocation2 + $0xb8]]
        %v1112 = vstv %s1111
        %v1113 = vmul.f32 %v1112, %v1096
        %v1114 = vmul.f32 %v1112, %v1098
        %v1115 = vadd.f32 %v1087, %v1113
        %v1116 = vadd.f32 %v1088, %v1114
        %s1117 = sld [smem:[#allocation2 + $0x103]]
        %v1118 = vstv %s1117
        %v1119 = vmul.f32 %v1118, %v1096
        %v1120 = vmul.f32 %v1118, %v1098
        %v1121 = vadd.f32 %v1093, %v1119
        %v1122 = vadd.f32 %v1094, %v1120
        %v1123 = vld [vmem:[%s846 + $0x2] sm:$0xff]
        %v1124 = vld [vmem:[%s846 + $0xa] sm:$0xff]
        %s1125 = sld [smem:[#allocation2 + $0x23]]
        %v1126 = vstv %s1125
        %v1127 = vmul.f32 %v1126, %v1123
        %v1128 = vmul.f32 %v1126, %v1124
        %v1129 = vadd.f32 %v1103, %v1127
        %v1130 = vadd.f32 %v1104, %v1128
        %s1131 = sld [smem:[#allocation2 + $0x6e]]
        %v1132 = vstv %s1131
        %v1133 = vmul.f32 %v1132, %v1123
        %v1134 = vmul.f32 %v1132, %v1124
        %v1135 = vadd.f32 %v1109, %v1133
        %v1136 = vadd.f32 %v1110, %v1134
        %s1137 = sld [smem:[#allocation2 + $0xb9]]
        %v1138 = vstv %s1137
        %v1139 = vmul.f32 %v1138, %v1123
        %v1140 = vmul.f32 %v1138, %v1124
        %v1141 = vadd.f32 %v1115, %v1139
        %v1142 = vadd.f32 %v1116, %v1140
        %s1143 = sld [smem:[#allocation2 + $0x104]]
        %v1144 = vstv %s1143
        %v1145 = vmul.f32 %v1144, %v1123
        %v1146 = vmul.f32 %v1144, %v1124
        %v1147 = vadd.f32 %v1121, %v1145
        %v1148 = vadd.f32 %v1122, %v1146
        %1149 = vrot.lane.b32.xlu0 %v1123, 127
        %v1150 = vpop.permute.xlu0 %1149
        %1151 = vrot.lane.b32.xlu0 %v1124, 127
        %v1152 = vpop.permute.xlu0 %1151
        %s1153 = sld [smem:[#allocation2 + $0x24]]
        %v1154 = vstv %s1153
        %v1155 = vmul.f32 %v1154, %v1150
        %v1156 = vmul.f32 %v1154, %v1152
        %v1157 = vadd.f32 %v1129, %v1155
        %v1158 = vadd.f32 %v1130, %v1156
        %s1159 = sld [smem:[#allocation2 + $0x6f]]
        %v1160 = vstv %s1159
        %v1161 = vmul.f32 %v1160, %v1150
        %v1162 = vmul.f32 %v1160, %v1152
        %v1163 = vadd.f32 %v1135, %v1161
        %v1164 = vadd.f32 %v1136, %v1162
        %s1165 = sld [smem:[#allocation2 + $0xba]]
        %v1166 = vstv %s1165
        %v1167 = vmul.f32 %v1166, %v1150
        %v1168 = vmul.f32 %v1166, %v1152
        %v1169 = vadd.f32 %v1141, %v1167
        %v1170 = vadd.f32 %v1142, %v1168
        %s1171 = sld [smem:[#allocation2 + $0x105]]
        %v1172 = vstv %s1171
        %v1173 = vmul.f32 %v1172, %v1150
        %v1174 = vmul.f32 %v1172, %v1152
        %v1175 = vadd.f32 %v1147, %v1173
        %v1176 = vadd.f32 %v1148, %v1174
        %1177 = vrot.lane.b32.xlu0 %v1123, 126
        %v1178 = vpop.permute.xlu0 %1177
        %1179 = vrot.lane.b32.xlu0 %v1124, 126
        %v1180 = vpop.permute.xlu0 %1179
        %s1181 = sld [smem:[#allocation2 + $0x25]]
        %v1182 = vstv %s1181
        %v1183 = vmul.f32 %v1182, %v1178
        %v1184 = vmul.f32 %v1182, %v1180
        %v1185 = vadd.f32 %v1157, %v1183
        %v1186 = vadd.f32 %v1158, %v1184
        %s1187 = sld [smem:[#allocation2 + $0x70]]
        %v1188 = vstv %s1187
        %v1189 = vmul.f32 %v1188, %v1178
        %v1190 = vmul.f32 %v1188, %v1180
        %v1191 = vadd.f32 %v1163, %v1189
        %v1192 = vadd.f32 %v1164, %v1190
        %s1193 = sld [smem:[#allocation2 + $0xbb]]
        %v1194 = vstv %s1193
        %v1195 = vmul.f32 %v1194, %v1178
        %v1196 = vmul.f32 %v1194, %v1180
        %v1197 = vadd.f32 %v1169, %v1195
        %v1198 = vadd.f32 %v1170, %v1196
        %s1199 = sld [smem:[#allocation2 + $0x106]]
        %v1200 = vstv %s1199
        %v1201 = vmul.f32 %v1200, %v1178
        %v1202 = vmul.f32 %v1200, %v1180
        %v1203 = vadd.f32 %v1175, %v1201
        %v1204 = vadd.f32 %v1176, %v1202
        %1205 = vrot.lane.b32.xlu0 %v1123, 125
        %v1206 = vpop.permute.xlu0 %1205
        %1207 = vrot.lane.b32.xlu0 %v1124, 125
        %v1208 = vpop.permute.xlu0 %1207
        %s1209 = sld [smem:[#allocation2 + $0x26]]
        %v1210 = vstv %s1209
        %v1211 = vmul.f32 %v1210, %v1206
        %v1212 = vmul.f32 %v1210, %v1208
        %v1213 = vadd.f32 %v1185, %v1211
        %v1214 = vadd.f32 %v1186, %v1212
        %s1215 = sld [smem:[#allocation2 + $0x71]]
        %v1216 = vstv %s1215
        %v1217 = vmul.f32 %v1216, %v1206
        %v1218 = vmul.f32 %v1216, %v1208
        %v1219 = vadd.f32 %v1191, %v1217
        %v1220 = vadd.f32 %v1192, %v1218
        %s1221 = sld [smem:[#allocation2 + $0xbc]]
        %v1222 = vstv %s1221
        %v1223 = vmul.f32 %v1222, %v1206
        %v1224 = vmul.f32 %v1222, %v1208
        %v1225 = vadd.f32 %v1197, %v1223
        %v1226 = vadd.f32 %v1198, %v1224
        %s1227 = sld [smem:[#allocation2 + $0x107]]
        %v1228 = vstv %s1227
        %v1229 = vmul.f32 %v1228, %v1206
        %v1230 = vmul.f32 %v1228, %v1208
        %v1231 = vadd.f32 %v1203, %v1229
        %v1232 = vadd.f32 %v1204, %v1230
        %1233 = vrot.lane.b32.xlu0 %v1123, 124
        %v1234 = vpop.permute.xlu0 %1233
        %1235 = vrot.lane.b32.xlu0 %v1124, 124
        %v1236 = vpop.permute.xlu0 %1235
        %s1237 = sld [smem:[#allocation2 + $0x27]]
        %v1238 = vstv %s1237
        %v1239 = vmul.f32 %v1238, %v1234
        %v1240 = vmul.f32 %v1238, %v1236
        %v1241 = vadd.f32 %v1213, %v1239
        %v1242 = vadd.f32 %v1214, %v1240
        %s1243 = sld [smem:[#allocation2 + $0x72]]
        %v1244 = vstv %s1243
        %v1245 = vmul.f32 %v1244, %v1234
        %v1246 = vmul.f32 %v1244, %v1236
        %v1247 = vadd.f32 %v1219, %v1245
        %v1248 = vadd.f32 %v1220, %v1246
        %s1249 = sld [smem:[#allocation2 + $0xbd]]
        %v1250 = vstv %s1249
        %v1251 = vmul.f32 %v1250, %v1234
        %v1252 = vmul.f32 %v1250, %v1236
        %v1253 = vadd.f32 %v1225, %v1251
        %v1254 = vadd.f32 %v1226, %v1252
        %s1255 = sld [smem:[#allocation2 + $0x108]]
        %v1256 = vstv %s1255
        %v1257 = vmul.f32 %v1256, %v1234
        %v1258 = vmul.f32 %v1256, %v1236
        %v1259 = vadd.f32 %v1231, %v1257
        %v1260 = vadd.f32 %v1232, %v1258
        %v1261 = vld [vmem:[%s846 + $0x3] sm:$0xff]
        %v1262 = vld [vmem:[%s846 + $0xb] sm:$0xff]
        %s1263 = sld [smem:[#allocation2 + $0x28]]
        %v1264 = vstv %s1263
        %v1265 = vmul.f32 %v1264, %v1261
        %v1266 = vmul.f32 %v1264, %v1262
        %v1267 = vadd.f32 %v1241, %v1265
        %v1268 = vadd.f32 %v1242, %v1266
        %s1269 = sld [smem:[#allocation2 + $0x73]]
        %v1270 = vstv %s1269
        %v1271 = vmul.f32 %v1270, %v1261
        %v1272 = vmul.f32 %v1270, %v1262
        %v1273 = vadd.f32 %v1247, %v1271
        %v1274 = vadd.f32 %v1248, %v1272
        %s1275 = sld [smem:[#allocation2 + $0xbe]]
        %v1276 = vstv %s1275
        %v1277 = vmul.f32 %v1276, %v1261
        %v1278 = vmul.f32 %v1276, %v1262
        %v1279 = vadd.f32 %v1253, %v1277
        %v1280 = vadd.f32 %v1254, %v1278
        %s1281 = sld [smem:[#allocation2 + $0x109]]
        %v1282 = vstv %s1281
        %v1283 = vmul.f32 %v1282, %v1261
        %v1284 = vmul.f32 %v1282, %v1262
        %v1285 = vadd.f32 %v1259, %v1283
        %v1286 = vadd.f32 %v1260, %v1284
        %1287 = vrot.lane.b32.xlu0 %v1261, 127
        %v1288 = vpop.permute.xlu0 %1287
        %1289 = vrot.lane.b32.xlu0 %v1262, 127
        %v1290 = vpop.permute.xlu0 %1289
        %s1291 = sld [smem:[#allocation2 + $0x29]]
        %v1292 = vstv %s1291
        %v1293 = vmul.f32 %v1292, %v1288
        %v1294 = vmul.f32 %v1292, %v1290
        %v1295 = vadd.f32 %v1267, %v1293
        %v1296 = vadd.f32 %v1268, %v1294
        %s1297 = sld [smem:[#allocation2 + $0x74]]
        %v1298 = vstv %s1297
        %v1299 = vmul.f32 %v1298, %v1288
        %v1300 = vmul.f32 %v1298, %v1290
        %v1301 = vadd.f32 %v1273, %v1299
        %v1302 = vadd.f32 %v1274, %v1300
        %s1303 = sld [smem:[#allocation2 + $0xbf]]
        %v1304 = vstv %s1303
        %v1305 = vmul.f32 %v1304, %v1288
        %v1306 = vmul.f32 %v1304, %v1290
        %v1307 = vadd.f32 %v1279, %v1305
        %v1308 = vadd.f32 %v1280, %v1306
        %s1309 = sld [smem:[#allocation2 + $0x10a]]
        %v1310 = vstv %s1309
        %v1311 = vmul.f32 %v1310, %v1288
        %v1312 = vmul.f32 %v1310, %v1290
        %v1313 = vadd.f32 %v1285, %v1311
        %v1314 = vadd.f32 %v1286, %v1312
        %1315 = vrot.lane.b32.xlu0 %v1261, 126
        %v1316 = vpop.permute.xlu0 %1315
        %1317 = vrot.lane.b32.xlu0 %v1262, 126
        %v1318 = vpop.permute.xlu0 %1317
        %s1319 = sld [smem:[#allocation2 + $0x2a]]
        %v1320 = vstv %s1319
        %v1321 = vmul.f32 %v1320, %v1316
        %v1322 = vmul.f32 %v1320, %v1318
        %v1323 = vadd.f32 %v1295, %v1321
        %v1324 = vadd.f32 %v1296, %v1322
        %s1325 = sld [smem:[#allocation2 + $0x75]]
        %v1326 = vstv %s1325
        %v1327 = vmul.f32 %v1326, %v1316
        %v1328 = vmul.f32 %v1326, %v1318
        %v1329 = vadd.f32 %v1301, %v1327
        %v1330 = vadd.f32 %v1302, %v1328
        %s1331 = sld [smem:[#allocation2 + $0xc0]]
        %v1332 = vstv %s1331
        %v1333 = vmul.f32 %v1332, %v1316
        %v1334 = vmul.f32 %v1332, %v1318
        %v1335 = vadd.f32 %v1307, %v1333
        %v1336 = vadd.f32 %v1308, %v1334
        %s1337 = sld [smem:[#allocation2 + $0x10b]]
        %v1338 = vstv %s1337
        %v1339 = vmul.f32 %v1338, %v1316
        %v1340 = vmul.f32 %v1338, %v1318
        %v1341 = vadd.f32 %v1313, %v1339
        %v1342 = vadd.f32 %v1314, %v1340
        %1343 = vrot.lane.b32.xlu0 %v1261, 125
        %v1344 = vpop.permute.xlu0 %1343
        %1345 = vrot.lane.b32.xlu0 %v1262, 125
        %v1346 = vpop.permute.xlu0 %1345
        %s1347 = sld [smem:[#allocation2 + $0x2b]]
        %v1348 = vstv %s1347
        %v1349 = vmul.f32 %v1348, %v1344
        %v1350 = vmul.f32 %v1348, %v1346
        %v1351 = vadd.f32 %v1323, %v1349
        %v1352 = vadd.f32 %v1324, %v1350
        %s1353 = sld [smem:[#allocation2 + $0x76]]
        %v1354 = vstv %s1353
        %v1355 = vmul.f32 %v1354, %v1344
        %v1356 = vmul.f32 %v1354, %v1346
        %v1357 = vadd.f32 %v1329, %v1355
        %v1358 = vadd.f32 %v1330, %v1356
        %s1359 = sld [smem:[#allocation2 + $0xc1]]
        %v1360 = vstv %s1359
        %v1361 = vmul.f32 %v1360, %v1344
        %v1362 = vmul.f32 %v1360, %v1346
        %v1363 = vadd.f32 %v1335, %v1361
        %v1364 = vadd.f32 %v1336, %v1362
        %s1365 = sld [smem:[#allocation2 + $0x10c]]
        %v1366 = vstv %s1365
        %v1367 = vmul.f32 %v1366, %v1344
        %v1368 = vmul.f32 %v1366, %v1346
        %v1369 = vadd.f32 %v1341, %v1367
        %v1370 = vadd.f32 %v1342, %v1368
        %1371 = vrot.lane.b32.xlu0 %v1261, 124
        %v1372 = vpop.permute.xlu0 %1371
        %1373 = vrot.lane.b32.xlu0 %v1262, 124
        %v1374 = vpop.permute.xlu0 %1373
        %s1375 = sld [smem:[#allocation2 + $0x2c]]
        %v1376 = vstv %s1375
        %v1377 = vmul.f32 %v1376, %v1372
        %v1378 = vmul.f32 %v1376, %v1374
        %v1379 = vadd.f32 %v1351, %v1377
        %v1380 = vadd.f32 %v1352, %v1378
        %s1381 = sld [smem:[#allocation2 + $0x77]]
        %v1382 = vstv %s1381
        %v1383 = vmul.f32 %v1382, %v1372
        %v1384 = vmul.f32 %v1382, %v1374
        %v1385 = vadd.f32 %v1357, %v1383
        %v1386 = vadd.f32 %v1358, %v1384
        %s1387 = sld [smem:[#allocation2 + $0xc2]]
        %v1388 = vstv %s1387
        %v1389 = vmul.f32 %v1388, %v1372
        %v1390 = vmul.f32 %v1388, %v1374
        %v1391 = vadd.f32 %v1363, %v1389
        %v1392 = vadd.f32 %v1364, %v1390
        %s1393 = sld [smem:[#allocation2 + $0x10d]]
        %v1394 = vstv %s1393
        %v1395 = vmul.f32 %v1394, %v1372
        %v1396 = vmul.f32 %v1394, %v1374
        %v1397 = vadd.f32 %v1369, %v1395
        %v1398 = vadd.f32 %v1370, %v1396
        %v1399 = vld [vmem:[%s846 + $0x4] sm:$0xff]
        %v1400 = vld [vmem:[%s846 + $0xc] sm:$0xff]
        %s1401 = sld [smem:[#allocation2 + $0x2d]]
        %v1402 = vstv %s1401
        %v1403 = vmul.f32 %v1402, %v1399
        %v1404 = vmul.f32 %v1402, %v1400
        %v1405 = vadd.f32 %v1379, %v1403
        %v1406 = vadd.f32 %v1380, %v1404
        %s1407 = sld [smem:[#allocation2 + $0x78]]
        %v1408 = vstv %s1407
        %v1409 = vmul.f32 %v1408, %v1399
        %v1410 = vmul.f32 %v1408, %v1400
        %v1411 = vadd.f32 %v1385, %v1409
        %v1412 = vadd.f32 %v1386, %v1410
        %s1413 = sld [smem:[#allocation2 + $0xc3]]
        %v1414 = vstv %s1413
        %v1415 = vmul.f32 %v1414, %v1399
        %v1416 = vmul.f32 %v1414, %v1400
        %v1417 = vadd.f32 %v1391, %v1415
        %v1418 = vadd.f32 %v1392, %v1416
        %s1419 = sld [smem:[#allocation2 + $0x10e]]
        %v1420 = vstv %s1419
        %v1421 = vmul.f32 %v1420, %v1399
        %v1422 = vmul.f32 %v1420, %v1400
        %v1423 = vadd.f32 %v1397, %v1421
        %v1424 = vadd.f32 %v1398, %v1422
        %1425 = vrot.lane.b32.xlu0 %v1399, 127
        %v1426 = vpop.permute.xlu0 %1425
        %1427 = vrot.lane.b32.xlu0 %v1400, 127
        %v1428 = vpop.permute.xlu0 %1427
        %s1429 = sld [smem:[#allocation2 + $0x2e]]
        %v1430 = vstv %s1429
        %v1431 = vmul.f32 %v1430, %v1426
        %v1432 = vmul.f32 %v1430, %v1428
        %v1433 = vadd.f32 %v1405, %v1431
        %v1434 = vadd.f32 %v1406, %v1432
        %s1435 = sld [smem:[#allocation2 + $0x79]]
        %v1436 = vstv %s1435
        %v1437 = vmul.f32 %v1436, %v1426
        %v1438 = vmul.f32 %v1436, %v1428
        %v1439 = vadd.f32 %v1411, %v1437
        %v1440 = vadd.f32 %v1412, %v1438
        %s1441 = sld [smem:[#allocation2 + $0xc4]]
        %v1442 = vstv %s1441
        %v1443 = vmul.f32 %v1442, %v1426
        %v1444 = vmul.f32 %v1442, %v1428
        %v1445 = vadd.f32 %v1417, %v1443
        %v1446 = vadd.f32 %v1418, %v1444
        %s1447 = sld [smem:[#allocation2 + $0x10f]]
        %v1448 = vstv %s1447
        %v1449 = vmul.f32 %v1448, %v1426
        %v1450 = vmul.f32 %v1448, %v1428
        %v1451 = vadd.f32 %v1423, %v1449
        %v1452 = vadd.f32 %v1424, %v1450
        %1453 = vrot.lane.b32.xlu0 %v1399, 126
        %v1454 = vpop.permute.xlu0 %1453
        %1455 = vrot.lane.b32.xlu0 %v1400, 126
        %v1456 = vpop.permute.xlu0 %1455
        %s1457 = sld [smem:[#allocation2 + $0x2f]]
        %v1458 = vstv %s1457
        %v1459 = vmul.f32 %v1458, %v1454
        %v1460 = vmul.f32 %v1458, %v1456
        %v1461 = vadd.f32 %v1433, %v1459
        %v1462 = vadd.f32 %v1434, %v1460
        %s1463 = sld [smem:[#allocation2 + $0x7a]]
        %v1464 = vstv %s1463
        %v1465 = vmul.f32 %v1464, %v1454
        %v1466 = vmul.f32 %v1464, %v1456
        %v1467 = vadd.f32 %v1439, %v1465
        %v1468 = vadd.f32 %v1440, %v1466
        %s1469 = sld [smem:[#allocation2 + $0xc5]]
        %v1470 = vstv %s1469
        %v1471 = vmul.f32 %v1470, %v1454
        %v1472 = vmul.f32 %v1470, %v1456
        %v1473 = vadd.f32 %v1445, %v1471
        %v1474 = vadd.f32 %v1446, %v1472
        %s1475 = sld [smem:[#allocation2 + $0x110]]
        %v1476 = vstv %s1475
        %v1477 = vmul.f32 %v1476, %v1454
        %v1478 = vmul.f32 %v1476, %v1456
        %v1479 = vadd.f32 %v1451, %v1477
        %v1480 = vadd.f32 %v1452, %v1478
        %1481 = vrot.lane.b32.xlu0 %v1399, 125
        %v1482 = vpop.permute.xlu0 %1481
        %1483 = vrot.lane.b32.xlu0 %v1400, 125
        %v1484 = vpop.permute.xlu0 %1483
        %s1485 = sld [smem:[#allocation2 + $0x30]]
        %v1486 = vstv %s1485
        %v1487 = vmul.f32 %v1486, %v1482
        %v1488 = vmul.f32 %v1486, %v1484
        %v1489 = vadd.f32 %v1461, %v1487
        %v1490 = vadd.f32 %v1462, %v1488
        %s1491 = sld [smem:[#allocation2 + $0x7b]]
        %v1492 = vstv %s1491
        %v1493 = vmul.f32 %v1492, %v1482
        %v1494 = vmul.f32 %v1492, %v1484
        %v1495 = vadd.f32 %v1467, %v1493
        %v1496 = vadd.f32 %v1468, %v1494
        %s1497 = sld [smem:[#allocation2 + $0xc6]]
        %v1498 = vstv %s1497
        %v1499 = vmul.f32 %v1498, %v1482
        %v1500 = vmul.f32 %v1498, %v1484
        %v1501 = vadd.f32 %v1473, %v1499
        %v1502 = vadd.f32 %v1474, %v1500
        %s1503 = sld [smem:[#allocation2 + $0x111]]
        %v1504 = vstv %s1503
        %v1505 = vmul.f32 %v1504, %v1482
        %v1506 = vmul.f32 %v1504, %v1484
        %v1507 = vadd.f32 %v1479, %v1505
        %v1508 = vadd.f32 %v1480, %v1506
        %1509 = vrot.lane.b32.xlu0 %v1399, 124
        %v1510 = vpop.permute.xlu0 %1509
        %1511 = vrot.lane.b32.xlu0 %v1400, 124
        %v1512 = vpop.permute.xlu0 %1511
        %s1513 = sld [smem:[#allocation2 + $0x31]]
        %v1514 = vstv %s1513
        %v1515 = vmul.f32 %v1514, %v1510
        %v1516 = vmul.f32 %v1514, %v1512
        %v1517 = vadd.f32 %v1489, %v1515
        %v1518 = vadd.f32 %v1490, %v1516
        %s1519 = sld [smem:[#allocation2 + $0x7c]]
        %v1520 = vstv %s1519
        %v1521 = vmul.f32 %v1520, %v1510
        %v1522 = vmul.f32 %v1520, %v1512
        %v1523 = vadd.f32 %v1495, %v1521
        %v1524 = vadd.f32 %v1496, %v1522
        %s1525 = sld [smem:[#allocation2 + $0xc7]]
        %v1526 = vstv %s1525
        %v1527 = vmul.f32 %v1526, %v1510
        %v1528 = vmul.f32 %v1526, %v1512
        %v1529 = vadd.f32 %v1501, %v1527
        %v1530 = vadd.f32 %v1502, %v1528
        %s1531 = sld [smem:[#allocation2 + $0x112]]
        %v1532 = vstv %s1531
        %v1533 = vmul.f32 %v1532, %v1510
        %v1534 = vmul.f32 %v1532, %v1512
        %v1535 = vadd.f32 %v1507, %v1533
        %v1536 = vadd.f32 %v1508, %v1534
        %s1537 = scalar_lea.vmem %s155, 48
        %v1538 = vld [vmem:[%s1537] sm:$0xff]
        %v1539 = vld [vmem:[%s1537 + $0x8] sm:$0xff]
        %s1540 = sld [smem:[#allocation2 + $0x32]]
        %v1541 = vstv %s1540
        %v1542 = vmul.f32 %v1541, %v1538
        %v1543 = vmul.f32 %v1541, %v1539
        %v1544 = vadd.f32 %v1517, %v1542
        %v1545 = vadd.f32 %v1518, %v1543
        %s1546 = sld [smem:[#allocation2 + $0x7d]]
        %v1547 = vstv %s1546
        %v1548 = vmul.f32 %v1547, %v1538
        %v1549 = vmul.f32 %v1547, %v1539
        %v1550 = vadd.f32 %v1523, %v1548
        %v1551 = vadd.f32 %v1524, %v1549
        %s1552 = sld [smem:[#allocation2 + $0xc8]]
        %v1553 = vstv %s1552
        %v1554 = vmul.f32 %v1553, %v1538
        %v1555 = vmul.f32 %v1553, %v1539
        %v1556 = vadd.f32 %v1529, %v1554
        %v1557 = vadd.f32 %v1530, %v1555
        %s1558 = sld [smem:[#allocation2 + $0x113]]
        %v1559 = vstv %s1558
        %v1560 = vmul.f32 %v1559, %v1538
        %v1561 = vmul.f32 %v1559, %v1539
        %v1562 = vadd.f32 %v1535, %v1560
        %v1563 = vadd.f32 %v1536, %v1561
        %1564 = vrot.lane.b32.xlu0 %v1538, 127
        %v1565 = vpop.permute.xlu0 %1564
        %1566 = vrot.lane.b32.xlu0 %v1539, 127
        %v1567 = vpop.permute.xlu0 %1566
        %s1568 = sld [smem:[#allocation2 + $0x33]]
        %v1569 = vstv %s1568
        %v1570 = vmul.f32 %v1569, %v1565
        %v1571 = vmul.f32 %v1569, %v1567
        %v1572 = vadd.f32 %v1544, %v1570
        %v1573 = vadd.f32 %v1545, %v1571
        %s1574 = sld [smem:[#allocation2 + $0x7e]]
        %v1575 = vstv %s1574
        %v1576 = vmul.f32 %v1575, %v1565
        %v1577 = vmul.f32 %v1575, %v1567
        %v1578 = vadd.f32 %v1550, %v1576
        %v1579 = vadd.f32 %v1551, %v1577
        %s1580 = sld [smem:[#allocation2 + $0xc9]]
        %v1581 = vstv %s1580
        %v1582 = vmul.f32 %v1581, %v1565
        %v1583 = vmul.f32 %v1581, %v1567
        %v1584 = vadd.f32 %v1556, %v1582
        %v1585 = vadd.f32 %v1557, %v1583
        %s1586 = sld [smem:[#allocation2 + $0x114]]
        %v1587 = vstv %s1586
        %v1588 = vmul.f32 %v1587, %v1565
        %v1589 = vmul.f32 %v1587, %v1567
        %v1590 = vadd.f32 %v1562, %v1588
        %v1591 = vadd.f32 %v1563, %v1589
        %1592 = vrot.lane.b32.xlu0 %v1538, 126
        %v1593 = vpop.permute.xlu0 %1592
        %1594 = vrot.lane.b32.xlu0 %v1539, 126
        %v1595 = vpop.permute.xlu0 %1594
        %s1596 = sld [smem:[#allocation2 + $0x34]]
        %v1597 = vstv %s1596
        %v1598 = vmul.f32 %v1597, %v1593
        %v1599 = vmul.f32 %v1597, %v1595
        %v1600 = vadd.f32 %v1572, %v1598
        %v1601 = vadd.f32 %v1573, %v1599
        %s1602 = sld [smem:[#allocation2 + $0x7f]]
        %v1603 = vstv %s1602
        %v1604 = vmul.f32 %v1603, %v1593
        %v1605 = vmul.f32 %v1603, %v1595
        %v1606 = vadd.f32 %v1578, %v1604
        %v1607 = vadd.f32 %v1579, %v1605
        %s1608 = sld [smem:[#allocation2 + $0xca]]
        %v1609 = vstv %s1608
        %v1610 = vmul.f32 %v1609, %v1593
        %v1611 = vmul.f32 %v1609, %v1595
        %v1612 = vadd.f32 %v1584, %v1610
        %v1613 = vadd.f32 %v1585, %v1611
        %s1614 = sld [smem:[#allocation2 + $0x115]]
        %v1615 = vstv %s1614
        %v1616 = vmul.f32 %v1615, %v1593
        %v1617 = vmul.f32 %v1615, %v1595
        %v1618 = vadd.f32 %v1590, %v1616
        %v1619 = vadd.f32 %v1591, %v1617
        %1620 = vrot.lane.b32.xlu0 %v1538, 125
        %v1621 = vpop.permute.xlu0 %1620
        %1622 = vrot.lane.b32.xlu0 %v1539, 125
        %v1623 = vpop.permute.xlu0 %1622
        %s1624 = sld [smem:[#allocation2 + $0x35]]
        %v1625 = vstv %s1624
        %v1626 = vmul.f32 %v1625, %v1621
        %v1627 = vmul.f32 %v1625, %v1623
        %v1628 = vadd.f32 %v1600, %v1626
        %v1629 = vadd.f32 %v1601, %v1627
        %s1630 = sld [smem:[#allocation2 + $0x80]]
        %v1631 = vstv %s1630
        %v1632 = vmul.f32 %v1631, %v1621
        %v1633 = vmul.f32 %v1631, %v1623
        %v1634 = vadd.f32 %v1606, %v1632
        %v1635 = vadd.f32 %v1607, %v1633
        %s1636 = sld [smem:[#allocation2 + $0xcb]]
        %v1637 = vstv %s1636
        %v1638 = vmul.f32 %v1637, %v1621
        %v1639 = vmul.f32 %v1637, %v1623
        %v1640 = vadd.f32 %v1612, %v1638
        %v1641 = vadd.f32 %v1613, %v1639
        %s1642 = sld [smem:[#allocation2 + $0x116]]
        %v1643 = vstv %s1642
        %v1644 = vmul.f32 %v1643, %v1621
        %v1645 = vmul.f32 %v1643, %v1623
        %v1646 = vadd.f32 %v1618, %v1644
        %v1647 = vadd.f32 %v1619, %v1645
        %1648 = vrot.lane.b32.xlu0 %v1538, 124
        %v1649 = vpop.permute.xlu0 %1648
        %1650 = vrot.lane.b32.xlu0 %v1539, 124
        %v1651 = vpop.permute.xlu0 %1650
        %s1652 = sld [smem:[#allocation2 + $0x36]]
        %v1653 = vstv %s1652
        %v1654 = vmul.f32 %v1653, %v1649
        %v1655 = vmul.f32 %v1653, %v1651
        %v1656 = vadd.f32 %v1628, %v1654
        %v1657 = vadd.f32 %v1629, %v1655
        %s1658 = sld [smem:[#allocation2 + $0x81]]
        %v1659 = vstv %s1658
        %v1660 = vmul.f32 %v1659, %v1649
        %v1661 = vmul.f32 %v1659, %v1651
        %v1662 = vadd.f32 %v1634, %v1660
        %v1663 = vadd.f32 %v1635, %v1661
        %s1664 = sld [smem:[#allocation2 + $0xcc]]
        %v1665 = vstv %s1664
        %v1666 = vmul.f32 %v1665, %v1649
        %v1667 = vmul.f32 %v1665, %v1651
        %v1668 = vadd.f32 %v1640, %v1666
        %v1669 = vadd.f32 %v1641, %v1667
        %s1670 = sld [smem:[#allocation2 + $0x117]]
        %v1671 = vstv %s1670
        %v1672 = vmul.f32 %v1671, %v1649
        %v1673 = vmul.f32 %v1671, %v1651
        %v1674 = vadd.f32 %v1646, %v1672
        %v1675 = vadd.f32 %v1647, %v1673
        %v1676 = vld [vmem:[%s1537 + $0x1] sm:$0xff]
        %v1677 = vld [vmem:[%s1537 + $0x9] sm:$0xff]
        %s1678 = sld [smem:[#allocation2 + $0x37]]
        %v1679 = vstv %s1678
        %v1680 = vmul.f32 %v1679, %v1676
        %v1681 = vmul.f32 %v1679, %v1677
        %v1682 = vadd.f32 %v1656, %v1680
        %v1683 = vadd.f32 %v1657, %v1681
        %s1684 = sld [smem:[#allocation2 + $0x82]]
        %v1685 = vstv %s1684
        %v1686 = vmul.f32 %v1685, %v1676
        %v1687 = vmul.f32 %v1685, %v1677
        %v1688 = vadd.f32 %v1662, %v1686
        %v1689 = vadd.f32 %v1663, %v1687
        %s1690 = sld [smem:[#allocation2 + $0xcd]]
        %v1691 = vstv %s1690
        %v1692 = vmul.f32 %v1691, %v1676
        %v1693 = vmul.f32 %v1691, %v1677
        %v1694 = vadd.f32 %v1668, %v1692
        %v1695 = vadd.f32 %v1669, %v1693
        %s1696 = sld [smem:[#allocation2 + $0x118]]
        %v1697 = vstv %s1696
        %v1698 = vmul.f32 %v1697, %v1676
        %v1699 = vmul.f32 %v1697, %v1677
        %v1700 = vadd.f32 %v1674, %v1698
        %v1701 = vadd.f32 %v1675, %v1699
        %1702 = vrot.lane.b32.xlu0 %v1676, 127
        %v1703 = vpop.permute.xlu0 %1702
        %1704 = vrot.lane.b32.xlu0 %v1677, 127
        %v1705 = vpop.permute.xlu0 %1704
        %s1706 = sld [smem:[#allocation2 + $0x38]]
        %v1707 = vstv %s1706
        %v1708 = vmul.f32 %v1707, %v1703
        %v1709 = vmul.f32 %v1707, %v1705
        %v1710 = vadd.f32 %v1682, %v1708
        %v1711 = vadd.f32 %v1683, %v1709
        %s1712 = sld [smem:[#allocation2 + $0x83]]
        %v1713 = vstv %s1712
        %v1714 = vmul.f32 %v1713, %v1703
        %v1715 = vmul.f32 %v1713, %v1705
        %v1716 = vadd.f32 %v1688, %v1714
        %v1717 = vadd.f32 %v1689, %v1715
        %s1718 = sld [smem:[#allocation2 + $0xce]]
        %v1719 = vstv %s1718
        %v1720 = vmul.f32 %v1719, %v1703
        %v1721 = vmul.f32 %v1719, %v1705
        %v1722 = vadd.f32 %v1694, %v1720
        %v1723 = vadd.f32 %v1695, %v1721
        %s1724 = sld [smem:[#allocation2 + $0x119]]
        %v1725 = vstv %s1724
        %v1726 = vmul.f32 %v1725, %v1703
        %v1727 = vmul.f32 %v1725, %v1705
        %v1728 = vadd.f32 %v1700, %v1726
        %v1729 = vadd.f32 %v1701, %v1727
        %1730 = vrot.lane.b32.xlu0 %v1676, 126
        %v1731 = vpop.permute.xlu0 %1730
        %1732 = vrot.lane.b32.xlu0 %v1677, 126
        %v1733 = vpop.permute.xlu0 %1732
        %s1734 = sld [smem:[#allocation2 + $0x39]]
        %v1735 = vstv %s1734
        %v1736 = vmul.f32 %v1735, %v1731
        %v1737 = vmul.f32 %v1735, %v1733
        %v1738 = vadd.f32 %v1710, %v1736
        %v1739 = vadd.f32 %v1711, %v1737
        %s1740 = sld [smem:[#allocation2 + $0x84]]
        %v1741 = vstv %s1740
        %v1742 = vmul.f32 %v1741, %v1731
        %v1743 = vmul.f32 %v1741, %v1733
        %v1744 = vadd.f32 %v1716, %v1742
        %v1745 = vadd.f32 %v1717, %v1743
        %s1746 = sld [smem:[#allocation2 + $0xcf]]
        %v1747 = vstv %s1746
        %v1748 = vmul.f32 %v1747, %v1731
        %v1749 = vmul.f32 %v1747, %v1733
        %v1750 = vadd.f32 %v1722, %v1748
        %v1751 = vadd.f32 %v1723, %v1749
        %s1752 = sld [smem:[#allocation2 + $0x11a]]
        %v1753 = vstv %s1752
        %v1754 = vmul.f32 %v1753, %v1731
        %v1755 = vmul.f32 %v1753, %v1733
        %v1756 = vadd.f32 %v1728, %v1754
        %v1757 = vadd.f32 %v1729, %v1755
        %1758 = vrot.lane.b32.xlu0 %v1676, 125
        %v1759 = vpop.permute.xlu0 %1758
        %1760 = vrot.lane.b32.xlu0 %v1677, 125
        %v1761 = vpop.permute.xlu0 %1760
        %s1762 = sld [smem:[#allocation2 + $0x3a]]
        %v1763 = vstv %s1762
        %v1764 = vmul.f32 %v1763, %v1759
        %v1765 = vmul.f32 %v1763, %v1761
        %v1766 = vadd.f32 %v1738, %v1764
        %v1767 = vadd.f32 %v1739, %v1765
        %s1768 = sld [smem:[#allocation2 + $0x85]]
        %v1769 = vstv %s1768
        %v1770 = vmul.f32 %v1769, %v1759
        %v1771 = vmul.f32 %v1769, %v1761
        %v1772 = vadd.f32 %v1744, %v1770
        %v1773 = vadd.f32 %v1745, %v1771
        %s1774 = sld [smem:[#allocation2 + $0xd0]]
        %v1775 = vstv %s1774
        %v1776 = vmul.f32 %v1775, %v1759
        %v1777 = vmul.f32 %v1775, %v1761
        %v1778 = vadd.f32 %v1750, %v1776
        %v1779 = vadd.f32 %v1751, %v1777
        %s1780 = sld [smem:[#allocation2 + $0x11b]]
        %v1781 = vstv %s1780
        %v1782 = vmul.f32 %v1781, %v1759
        %v1783 = vmul.f32 %v1781, %v1761
        %v1784 = vadd.f32 %v1756, %v1782
        %v1785 = vadd.f32 %v1757, %v1783
        %1786 = vrot.lane.b32.xlu0 %v1676, 124
        %v1787 = vpop.permute.xlu0 %1786
        %1788 = vrot.lane.b32.xlu0 %v1677, 124
        %v1789 = vpop.permute.xlu0 %1788
        %s1790 = sld [smem:[#allocation2 + $0x3b]]
        %v1791 = vstv %s1790
        %v1792 = vmul.f32 %v1791, %v1787
        %v1793 = vmul.f32 %v1791, %v1789
        %v1794 = vadd.f32 %v1766, %v1792
        %v1795 = vadd.f32 %v1767, %v1793
        %s1796 = sld [smem:[#allocation2 + $0x86]]
        %v1797 = vstv %s1796
        %v1798 = vmul.f32 %v1797, %v1787
        %v1799 = vmul.f32 %v1797, %v1789
        %v1800 = vadd.f32 %v1772, %v1798
        %v1801 = vadd.f32 %v1773, %v1799
        %s1802 = sld [smem:[#allocation2 + $0xd1]]
        %v1803 = vstv %s1802
        %v1804 = vmul.f32 %v1803, %v1787
        %v1805 = vmul.f32 %v1803, %v1789
        %v1806 = vadd.f32 %v1778, %v1804
        %v1807 = vadd.f32 %v1779, %v1805
        %s1808 = sld [smem:[#allocation2 + $0x11c]]
        %v1809 = vstv %s1808
        %v1810 = vmul.f32 %v1809, %v1787
        %v1811 = vmul.f32 %v1809, %v1789
        %v1812 = vadd.f32 %v1784, %v1810
        %v1813 = vadd.f32 %v1785, %v1811
        %v1814 = vld [vmem:[%s1537 + $0x2] sm:$0xff]
        %v1815 = vld [vmem:[%s1537 + $0xa] sm:$0xff]
        %s1816 = sld [smem:[#allocation2 + $0x3c]]
        %v1817 = vstv %s1816
        %v1818 = vmul.f32 %v1817, %v1814
        %v1819 = vmul.f32 %v1817, %v1815
        %v1820 = vadd.f32 %v1794, %v1818
        %v1821 = vadd.f32 %v1795, %v1819
        %s1822 = sld [smem:[#allocation2 + $0x87]]
        %v1823 = vstv %s1822
        %v1824 = vmul.f32 %v1823, %v1814
        %v1825 = vmul.f32 %v1823, %v1815
        %v1826 = vadd.f32 %v1800, %v1824
        %v1827 = vadd.f32 %v1801, %v1825
        %s1828 = sld [smem:[#allocation2 + $0xd2]]
        %v1829 = vstv %s1828
        %v1830 = vmul.f32 %v1829, %v1814
        %v1831 = vmul.f32 %v1829, %v1815
        %v1832 = vadd.f32 %v1806, %v1830
        %v1833 = vadd.f32 %v1807, %v1831
        %s1834 = sld [smem:[#allocation2 + $0x11d]]
        %v1835 = vstv %s1834
        %v1836 = vmul.f32 %v1835, %v1814
        %v1837 = vmul.f32 %v1835, %v1815
        %v1838 = vadd.f32 %v1812, %v1836
        %v1839 = vadd.f32 %v1813, %v1837
        %1840 = vrot.lane.b32.xlu0 %v1814, 127
        %v1841 = vpop.permute.xlu0 %1840
        %1842 = vrot.lane.b32.xlu0 %v1815, 127
        %v1843 = vpop.permute.xlu0 %1842
        %s1844 = sld [smem:[#allocation2 + $0x3d]]
        %v1845 = vstv %s1844
        %v1846 = vmul.f32 %v1845, %v1841
        %v1847 = vmul.f32 %v1845, %v1843
        %v1848 = vadd.f32 %v1820, %v1846
        %v1849 = vadd.f32 %v1821, %v1847
        %s1850 = sld [smem:[#allocation2 + $0x88]]
        %v1851 = vstv %s1850
        %v1852 = vmul.f32 %v1851, %v1841
        %v1853 = vmul.f32 %v1851, %v1843
        %v1854 = vadd.f32 %v1826, %v1852
        %v1855 = vadd.f32 %v1827, %v1853
        %s1856 = sld [smem:[#allocation2 + $0xd3]]
        %v1857 = vstv %s1856
        %v1858 = vmul.f32 %v1857, %v1841
        %v1859 = vmul.f32 %v1857, %v1843
        %v1860 = vadd.f32 %v1832, %v1858
        %v1861 = vadd.f32 %v1833, %v1859
        %s1862 = sld [smem:[#allocation2 + $0x11e]]
        %v1863 = vstv %s1862
        %v1864 = vmul.f32 %v1863, %v1841
        %v1865 = vmul.f32 %v1863, %v1843
        %v1866 = vadd.f32 %v1838, %v1864
        %v1867 = vadd.f32 %v1839, %v1865
        %1868 = vrot.lane.b32.xlu0 %v1814, 126
        %v1869 = vpop.permute.xlu0 %1868
        %1870 = vrot.lane.b32.xlu0 %v1815, 126
        %v1871 = vpop.permute.xlu0 %1870
        %s1872 = sld [smem:[#allocation2 + $0x3e]]
        %v1873 = vstv %s1872
        %v1874 = vmul.f32 %v1873, %v1869
        %v1875 = vmul.f32 %v1873, %v1871
        %v1876 = vadd.f32 %v1848, %v1874
        %v1877 = vadd.f32 %v1849, %v1875
        %s1878 = sld [smem:[#allocation2 + $0x89]]
        %v1879 = vstv %s1878
        %v1880 = vmul.f32 %v1879, %v1869
        %v1881 = vmul.f32 %v1879, %v1871
        %v1882 = vadd.f32 %v1854, %v1880
        %v1883 = vadd.f32 %v1855, %v1881
        %s1884 = sld [smem:[#allocation2 + $0xd4]]
        %v1885 = vstv %s1884
        %v1886 = vmul.f32 %v1885, %v1869
        %v1887 = vmul.f32 %v1885, %v1871
        %v1888 = vadd.f32 %v1860, %v1886
        %v1889 = vadd.f32 %v1861, %v1887
        %s1890 = sld [smem:[#allocation2 + $0x11f]]
        %v1891 = vstv %s1890
        %v1892 = vmul.f32 %v1891, %v1869
        %v1893 = vmul.f32 %v1891, %v1871
        %v1894 = vadd.f32 %v1866, %v1892
        %v1895 = vadd.f32 %v1867, %v1893
        %1896 = vrot.lane.b32.xlu0 %v1814, 125
        %v1897 = vpop.permute.xlu0 %1896
        %1898 = vrot.lane.b32.xlu0 %v1815, 125
        %v1899 = vpop.permute.xlu0 %1898
        %s1900 = sld [smem:[#allocation2 + $0x3f]]
        %v1901 = vstv %s1900
        %v1902 = vmul.f32 %v1901, %v1897
        %v1903 = vmul.f32 %v1901, %v1899
        %v1904 = vadd.f32 %v1876, %v1902
        %v1905 = vadd.f32 %v1877, %v1903
        %s1906 = sld [smem:[#allocation2 + $0x8a]]
        %v1907 = vstv %s1906
        %v1908 = vmul.f32 %v1907, %v1897
        %v1909 = vmul.f32 %v1907, %v1899
        %v1910 = vadd.f32 %v1882, %v1908
        %v1911 = vadd.f32 %v1883, %v1909
        %s1912 = sld [smem:[#allocation2 + $0xd5]]
        %v1913 = vstv %s1912
        %v1914 = vmul.f32 %v1913, %v1897
        %v1915 = vmul.f32 %v1913, %v1899
        %v1916 = vadd.f32 %v1888, %v1914
        %v1917 = vadd.f32 %v1889, %v1915
        %s1918 = sld [smem:[#allocation2 + $0x120]]
        %v1919 = vstv %s1918
        %v1920 = vmul.f32 %v1919, %v1897
        %v1921 = vmul.f32 %v1919, %v1899
        %v1922 = vadd.f32 %v1894, %v1920
        %v1923 = vadd.f32 %v1895, %v1921
        %1924 = vrot.lane.b32.xlu0 %v1814, 124
        %v1925 = vpop.permute.xlu0 %1924
        %1926 = vrot.lane.b32.xlu0 %v1815, 124
        %v1927 = vpop.permute.xlu0 %1926
        %s1928 = sld [smem:[#allocation2 + $0x40]]
        %v1929 = vstv %s1928
        %v1930 = vmul.f32 %v1929, %v1925
        %v1931 = vmul.f32 %v1929, %v1927
        %v1932 = vadd.f32 %v1904, %v1930
        %v1933 = vadd.f32 %v1905, %v1931
        %s1934 = sld [smem:[#allocation2 + $0x8b]]
        %v1935 = vstv %s1934
        %v1936 = vmul.f32 %v1935, %v1925
        %v1937 = vmul.f32 %v1935, %v1927
        %v1938 = vadd.f32 %v1910, %v1936
        %v1939 = vadd.f32 %v1911, %v1937
        %s1940 = sld [smem:[#allocation2 + $0xd6]]
        %v1941 = vstv %s1940
        %v1942 = vmul.f32 %v1941, %v1925
        %v1943 = vmul.f32 %v1941, %v1927
        %v1944 = vadd.f32 %v1916, %v1942
        %v1945 = vadd.f32 %v1917, %v1943
        %s1946 = sld [smem:[#allocation2 + $0x121]]
        %v1947 = vstv %s1946
        %v1948 = vmul.f32 %v1947, %v1925
        %v1949 = vmul.f32 %v1947, %v1927
        %v1950 = vadd.f32 %v1922, %v1948
        %v1951 = vadd.f32 %v1923, %v1949
        %v1952 = vld [vmem:[%s1537 + $0x3] sm:$0xff]
        %v1953 = vld [vmem:[%s1537 + $0xb] sm:$0xff]
        %s1954 = sld [smem:[#allocation2 + $0x41]]
        %v1955 = vstv %s1954
        %v1956 = vmul.f32 %v1955, %v1952
        %v1957 = vmul.f32 %v1955, %v1953
        %v1958 = vadd.f32 %v1932, %v1956
        %v1959 = vadd.f32 %v1933, %v1957
        %s1960 = sld [smem:[#allocation2 + $0x8c]]
        %v1961 = vstv %s1960
        %v1962 = vmul.f32 %v1961, %v1952
        %v1963 = vmul.f32 %v1961, %v1953
        %v1964 = vadd.f32 %v1938, %v1962
        %v1965 = vadd.f32 %v1939, %v1963
        %s1966 = sld [smem:[#allocation2 + $0xd7]]
        %v1967 = vstv %s1966
        %v1968 = vmul.f32 %v1967, %v1952
        %v1969 = vmul.f32 %v1967, %v1953
        %v1970 = vadd.f32 %v1944, %v1968
        %v1971 = vadd.f32 %v1945, %v1969
        %s1972 = sld [smem:[#allocation2 + $0x122]]
        %v1973 = vstv %s1972
        %v1974 = vmul.f32 %v1973, %v1952
        %v1975 = vmul.f32 %v1973, %v1953
        %v1976 = vadd.f32 %v1950, %v1974
        %v1977 = vadd.f32 %v1951, %v1975
        %1978 = vrot.lane.b32.xlu0 %v1952, 127
        %v1979 = vpop.permute.xlu0 %1978
        %1980 = vrot.lane.b32.xlu0 %v1953, 127
        %v1981 = vpop.permute.xlu0 %1980
        %s1982 = sld [smem:[#allocation2 + $0x42]]
        %v1983 = vstv %s1982
        %v1984 = vmul.f32 %v1983, %v1979
        %v1985 = vmul.f32 %v1983, %v1981
        %v1986 = vadd.f32 %v1958, %v1984
        %v1987 = vadd.f32 %v1959, %v1985
        %s1988 = sld [smem:[#allocation2 + $0x8d]]
        %v1989 = vstv %s1988
        %v1990 = vmul.f32 %v1989, %v1979
        %v1991 = vmul.f32 %v1989, %v1981
        %v1992 = vadd.f32 %v1964, %v1990
        %v1993 = vadd.f32 %v1965, %v1991
        %s1994 = sld [smem:[#allocation2 + $0xd8]]
        %v1995 = vstv %s1994
        %v1996 = vmul.f32 %v1995, %v1979
        %v1997 = vmul.f32 %v1995, %v1981
        %v1998 = vadd.f32 %v1970, %v1996
        %v1999 = vadd.f32 %v1971, %v1997
        %s2000 = sld [smem:[#allocation2 + $0x123]]
        %v2001 = vstv %s2000
        %v2002 = vmul.f32 %v2001, %v1979
        %v2003 = vmul.f32 %v2001, %v1981
        %v2004 = vadd.f32 %v1976, %v2002
        %v2005 = vadd.f32 %v1977, %v2003
        %2006 = vrot.lane.b32.xlu0 %v1952, 126
        %v2007 = vpop.permute.xlu0 %2006
        %2008 = vrot.lane.b32.xlu0 %v1953, 126
        %v2009 = vpop.permute.xlu0 %2008
        %s2010 = sld [smem:[#allocation2 + $0x43]]
        %v2011 = vstv %s2010
        %v2012 = vmul.f32 %v2011, %v2007
        %v2013 = vmul.f32 %v2011, %v2009
        %v2014 = vadd.f32 %v1986, %v2012
        %v2015 = vadd.f32 %v1987, %v2013
        %s2016 = sld [smem:[#allocation2 + $0x8e]]
        %v2017 = vstv %s2016
        %v2018 = vmul.f32 %v2017, %v2007
        %v2019 = vmul.f32 %v2017, %v2009
        %v2020 = vadd.f32 %v1992, %v2018
        %v2021 = vadd.f32 %v1993, %v2019
        %s2022 = sld [smem:[#allocation2 + $0xd9]]
        %v2023 = vstv %s2022
        %v2024 = vmul.f32 %v2023, %v2007
        %v2025 = vmul.f32 %v2023, %v2009
        %v2026 = vadd.f32 %v1998, %v2024
        %v2027 = vadd.f32 %v1999, %v2025
        %s2028 = sld [smem:[#allocation2 + $0x124]]
        %v2029 = vstv %s2028
        %v2030 = vmul.f32 %v2029, %v2007
        %v2031 = vmul.f32 %v2029, %v2009
        %v2032 = vadd.f32 %v2004, %v2030
        %v2033 = vadd.f32 %v2005, %v2031
        %2034 = vrot.lane.b32.xlu0 %v1952, 125
        %v2035 = vpop.permute.xlu0 %2034
        %2036 = vrot.lane.b32.xlu0 %v1953, 125
        %v2037 = vpop.permute.xlu0 %2036
        %s2038 = sld [smem:[#allocation2 + $0x44]]
        %v2039 = vstv %s2038
        %v2040 = vmul.f32 %v2039, %v2035
        %v2041 = vmul.f32 %v2039, %v2037
        %v2042 = vadd.f32 %v2014, %v2040
        %v2043 = vadd.f32 %v2015, %v2041
        %s2044 = sld [smem:[#allocation2 + $0x8f]]
        %v2045 = vstv %s2044
        %v2046 = vmul.f32 %v2045, %v2035
        %v2047 = vmul.f32 %v2045, %v2037
        %v2048 = vadd.f32 %v2020, %v2046
        %v2049 = vadd.f32 %v2021, %v2047
        %s2050 = sld [smem:[#allocation2 + $0xda]]
        %v2051 = vstv %s2050
        %v2052 = vmul.f32 %v2051, %v2035
        %v2053 = vmul.f32 %v2051, %v2037
        %v2054 = vadd.f32 %v2026, %v2052
        %v2055 = vadd.f32 %v2027, %v2053
        %s2056 = sld [smem:[#allocation2 + $0x125]]
        %v2057 = vstv %s2056
        %v2058 = vmul.f32 %v2057, %v2035
        %v2059 = vmul.f32 %v2057, %v2037
        %v2060 = vadd.f32 %v2032, %v2058
        %v2061 = vadd.f32 %v2033, %v2059
        %2062 = vrot.lane.b32.xlu0 %v1952, 124
        %v2063 = vpop.permute.xlu0 %2062
        %2064 = vrot.lane.b32.xlu0 %v1953, 124
        %v2065 = vpop.permute.xlu0 %2064
        %s2066 = sld [smem:[#allocation2 + $0x45]]
        %v2067 = vstv %s2066
        %v2068 = vmul.f32 %v2067, %v2063
        %v2069 = vmul.f32 %v2067, %v2065
        %v2070 = vadd.f32 %v2042, %v2068
        %v2071 = vadd.f32 %v2043, %v2069
        %s2072 = sld [smem:[#allocation2 + $0x90]]
        %v2073 = vstv %s2072
        %v2074 = vmul.f32 %v2073, %v2063
        %v2075 = vmul.f32 %v2073, %v2065
        %v2076 = vadd.f32 %v2048, %v2074
        %v2077 = vadd.f32 %v2049, %v2075
        %s2078 = sld [smem:[#allocation2 + $0xdb]]
        %v2079 = vstv %s2078
        %v2080 = vmul.f32 %v2079, %v2063
        %v2081 = vmul.f32 %v2079, %v2065
        %v2082 = vadd.f32 %v2054, %v2080
        %v2083 = vadd.f32 %v2055, %v2081
        %s2084 = sld [smem:[#allocation2 + $0x126]]
        %v2085 = vstv %s2084
        %v2086 = vmul.f32 %v2085, %v2063
        %v2087 = vmul.f32 %v2085, %v2065
        %v2088 = vadd.f32 %v2060, %v2086
        %v2089 = vadd.f32 %v2061, %v2087
        %v2090 = vld [vmem:[%s1537 + $0x4] sm:$0xff]
        %v2091 = vld [vmem:[%s1537 + $0xc] sm:$0xff]
        %s2092 = sld [smem:[#allocation2 + $0x46]]
        %v2093 = vstv %s2092
        %v2094 = vmul.f32 %v2093, %v2090
        %v2095 = vmul.f32 %v2093, %v2091
        %v2096 = vadd.f32 %v2070, %v2094
        %v2097 = vadd.f32 %v2071, %v2095
        %s2098 = sld [smem:[#allocation2 + $0x91]]
        %v2099 = vstv %s2098
        %v2100 = vmul.f32 %v2099, %v2090
        %v2101 = vmul.f32 %v2099, %v2091
        %v2102 = vadd.f32 %v2076, %v2100
        %v2103 = vadd.f32 %v2077, %v2101
        %s2104 = sld [smem:[#allocation2 + $0xdc]]
        %v2105 = vstv %s2104
        %v2106 = vmul.f32 %v2105, %v2090
        %v2107 = vmul.f32 %v2105, %v2091
        %v2108 = vadd.f32 %v2082, %v2106
        %v2109 = vadd.f32 %v2083, %v2107
        %s2110 = sld [smem:[#allocation2 + $0x127]]
        %v2111 = vstv %s2110
        %v2112 = vmul.f32 %v2111, %v2090
        %v2113 = vmul.f32 %v2111, %v2091
        %v2114 = vadd.f32 %v2088, %v2112
        %v2115 = vadd.f32 %v2089, %v2113
        %2116 = vrot.lane.b32.xlu0 %v2090, 127
        %v2117 = vpop.permute.xlu0 %2116
        %2118 = vrot.lane.b32.xlu0 %v2091, 127
        %v2119 = vpop.permute.xlu0 %2118
        %s2120 = sld [smem:[#allocation2 + $0x47]]
        %v2121 = vstv %s2120
        %v2122 = vmul.f32 %v2121, %v2117
        %v2123 = vmul.f32 %v2121, %v2119
        %v2124 = vadd.f32 %v2096, %v2122
        %v2125 = vadd.f32 %v2097, %v2123
        %s2126 = sld [smem:[#allocation2 + $0x92]]
        %v2127 = vstv %s2126
        %v2128 = vmul.f32 %v2127, %v2117
        %v2129 = vmul.f32 %v2127, %v2119
        %v2130 = vadd.f32 %v2102, %v2128
        %v2131 = vadd.f32 %v2103, %v2129
        %s2132 = sld [smem:[#allocation2 + $0xdd]]
        %v2133 = vstv %s2132
        %v2134 = vmul.f32 %v2133, %v2117
        %v2135 = vmul.f32 %v2133, %v2119
        %v2136 = vadd.f32 %v2108, %v2134
        %v2137 = vadd.f32 %v2109, %v2135
        %s2138 = sld [smem:[#allocation2 + $0x128]]
        %v2139 = vstv %s2138
        %v2140 = vmul.f32 %v2139, %v2117
        %v2141 = vmul.f32 %v2139, %v2119
        %v2142 = vadd.f32 %v2114, %v2140
        %v2143 = vadd.f32 %v2115, %v2141
        %2144 = vrot.lane.b32.xlu0 %v2090, 126
        %v2145 = vpop.permute.xlu0 %2144
        %2146 = vrot.lane.b32.xlu0 %v2091, 126
        %v2147 = vpop.permute.xlu0 %2146
        %s2148 = sld [smem:[#allocation2 + $0x48]]
        %v2149 = vstv %s2148
        %v2150 = vmul.f32 %v2149, %v2145
        %v2151 = vmul.f32 %v2149, %v2147
        %v2152 = vadd.f32 %v2124, %v2150
        %v2153 = vadd.f32 %v2125, %v2151
        %s2154 = sld [smem:[#allocation2 + $0x93]]
        %v2155 = vstv %s2154
        %v2156 = vmul.f32 %v2155, %v2145
        %v2157 = vmul.f32 %v2155, %v2147
        %v2158 = vadd.f32 %v2130, %v2156
        %v2159 = vadd.f32 %v2131, %v2157
        %s2160 = sld [smem:[#allocation2 + $0xde]]
        %v2161 = vstv %s2160
        %v2162 = vmul.f32 %v2161, %v2145
        %v2163 = vmul.f32 %v2161, %v2147
        %v2164 = vadd.f32 %v2136, %v2162
        %v2165 = vadd.f32 %v2137, %v2163
        %s2166 = sld [smem:[#allocation2 + $0x129]]
        %v2167 = vstv %s2166
        %v2168 = vmul.f32 %v2167, %v2145
        %v2169 = vmul.f32 %v2167, %v2147
        %v2170 = vadd.f32 %v2142, %v2168
        %v2171 = vadd.f32 %v2143, %v2169
        %2172 = vrot.lane.b32.xlu0 %v2090, 125
        %v2173 = vpop.permute.xlu0 %2172
        %2174 = vrot.lane.b32.xlu0 %v2091, 125
        %v2175 = vpop.permute.xlu0 %2174
        %s2176 = sld [smem:[#allocation2 + $0x49]]
        %v2177 = vstv %s2176
        %v2178 = vmul.f32 %v2177, %v2173
        %v2179 = vmul.f32 %v2177, %v2175
        %v2180 = vadd.f32 %v2152, %v2178
        %v2181 = vadd.f32 %v2153, %v2179
        %s2182 = sld [smem:[#allocation2 + $0x94]]
        %v2183 = vstv %s2182
        %v2184 = vmul.f32 %v2183, %v2173
        %v2185 = vmul.f32 %v2183, %v2175
        %v2186 = vadd.f32 %v2158, %v2184
        %v2187 = vadd.f32 %v2159, %v2185
        %s2188 = sld [smem:[#allocation2 + $0xdf]]
        %v2189 = vstv %s2188
        %v2190 = vmul.f32 %v2189, %v2173
        %v2191 = vmul.f32 %v2189, %v2175
        %v2192 = vadd.f32 %v2164, %v2190
        %v2193 = vadd.f32 %v2165, %v2191
        %s2194 = sld [smem:[#allocation2 + $0x12a]]
        %v2195 = vstv %s2194
        %v2196 = vmul.f32 %v2195, %v2173
        %v2197 = vmul.f32 %v2195, %v2175
        %v2198 = vadd.f32 %v2170, %v2196
        %v2199 = vadd.f32 %v2171, %v2197
        %2200 = vrot.lane.b32.xlu0 %v2090, 124
        %v2201 = vpop.permute.xlu0 %2200
        %2202 = vrot.lane.b32.xlu0 %v2091, 124
        %v2203 = vpop.permute.xlu0 %2202
        %s2204 = sld [smem:[#allocation2 + $0x4a]]
        %v2205 = vstv %s2204
        %v2206 = vmul.f32 %v2205, %v2201
        %v2207 = vmul.f32 %v2205, %v2203
        %v2208 = vadd.f32 %v2180, %v2206
        %v2209 = vadd.f32 %v2181, %v2207
        %s2210 = sld [smem:[#allocation2 + $0x95]]
        %v2211 = vstv %s2210
        %v2212 = vmul.f32 %v2211, %v2201
        %v2213 = vmul.f32 %v2211, %v2203
        %v2214 = vadd.f32 %v2186, %v2212
        %v2215 = vadd.f32 %v2187, %v2213
        %s2216 = sld [smem:[#allocation2 + $0xe0]]
        %v2217 = vstv %s2216
        %v2218 = vmul.f32 %v2217, %v2201
        %v2219 = vmul.f32 %v2217, %v2203
        %v2220 = vadd.f32 %v2192, %v2218
        %v2221 = vadd.f32 %v2193, %v2219
        %s2222 = sld [smem:[#allocation2 + $0x12b]]
        %v2223 = vstv %s2222
        %v2224 = vmul.f32 %v2223, %v2201
        %v2225 = vmul.f32 %v2223, %v2203
        %v2226 = vadd.f32 %v2198, %v2224
        %v2227 = vadd.f32 %v2199, %v2225
        %2228 = vst [vmem:[%s150] sm:$0xff] %v2208
        %2229 = vst [vmem:[%s150 + $0x8] sm:$0xff] %v2209
        %s2230 = scalar_lea.vmem %s150, 16 [#allocation5]
        %2231 = vst [vmem:[%s2230] sm:$0xff] %v2214
        %2232 = vst [vmem:[%s2230 + $0x8] sm:$0xff] %v2215
        %s2233 = scalar_lea.vmem %s150, 32 [#allocation5]
        %2234 = vst [vmem:[%s2233] sm:$0xff] %v2220
        %2235 = vst [vmem:[%s2233 + $0x8] sm:$0xff] %v2221
        %s2236 = scalar_lea.vmem %s150, 48 [#allocation5]
        %2237 = vst [vmem:[%s2236] sm:$0xff] %v2226
        %2238 = vst [vmem:[%s2236 + $0x8] sm:$0xff] %v2227
        %s2239 = scalar_lea.vmem %s155, 72
        %v2240 = vld [vmem:[%s2239 + $0x1] sm:$0xff]
        %v2241 = vld [vmem:[%s2239 + $0x9] sm:$0xff]
        %2242 = vrot.lane.b32.xlu0 %v2240, 127
        %v2243 = vpop.permute.xlu0 %2242
        %2244 = vrot.lane.b32.xlu0 %v2241, 127
        %v2245 = vpop.permute.xlu0 %2244
        %s2246 = sld [smem:[#allocation2 + $0x12c]]
        %v2247 = vstv %s2246
        %v2248 = vmul.f32 %v2247, %v2243
        %v2249 = vmul.f32 %v2247, %v2245
        %v2250 = vadd.f32 %v2248, 0.0
        %v2251 = vadd.f32 %v2249, 0.0
        %s2252 = sld [smem:[#allocation2 + $0x147]]
        %v2253 = vstv %s2252
        %v2254 = vmul.f32 %v2253, %v2243
        %v2255 = vmul.f32 %v2253, %v2245
        %v2256 = vadd.f32 %v2254, 0.0
        %v2257 = vadd.f32 %v2255, 0.0
        %2258 = vrot.lane.b32.xlu0 %v2240, 126
        %v2259 = vpop.permute.xlu0 %2258
        %2260 = vrot.lane.b32.xlu0 %v2241, 126
        %v2261 = vpop.permute.xlu0 %2260
        %s2262 = sld [smem:[#allocation2 + $0x12d]]
        %v2263 = vstv %s2262
        %v2264 = vmul.f32 %v2263, %v2259
        %v2265 = vmul.f32 %v2263, %v2261
        %v2266 = vadd.f32 %v2250, %v2264
        %v2267 = vadd.f32 %v2251, %v2265
        %s2268 = sld [smem:[#allocation2 + $0x148]]
        %v2269 = vstv %s2268
        %v2270 = vmul.f32 %v2269, %v2259
        %v2271 = vmul.f32 %v2269, %v2261
        %v2272 = vadd.f32 %v2256, %v2270
        %v2273 = vadd.f32 %v2257, %v2271
        %2274 = vrot.lane.b32.xlu0 %v2240, 125
        %v2275 = vpop.permute.xlu0 %2274
        %2276 = vrot.lane.b32.xlu0 %v2241, 125
        %v2277 = vpop.permute.xlu0 %2276
        %s2278 = sld [smem:[#allocation2 + $0x12e]]
        %v2279 = vstv %s2278
        %v2280 = vmul.f32 %v2279, %v2275
        %v2281 = vmul.f32 %v2279, %v2277
        %v2282 = vadd.f32 %v2266, %v2280
        %v2283 = vadd.f32 %v2267, %v2281
        %s2284 = sld [smem:[#allocation2 + $0x149]]
        %v2285 = vstv %s2284
        %v2286 = vmul.f32 %v2285, %v2275
        %v2287 = vmul.f32 %v2285, %v2277
        %v2288 = vadd.f32 %v2272, %v2286
        %v2289 = vadd.f32 %v2273, %v2287
        %v2290 = vld [vmem:[%s2239 + $0x2] sm:$0xff]
        %v2291 = vld [vmem:[%s2239 + $0xa] sm:$0xff]
        %2292 = vrot.lane.b32.xlu0 %v2290, 127
        %v2293 = vpop.permute.xlu0 %2292
        %2294 = vrot.lane.b32.xlu0 %v2291, 127
        %v2295 = vpop.permute.xlu0 %2294
        %s2296 = sld [smem:[#allocation2 + $0x12f]]
        %v2297 = vstv %s2296
        %v2298 = vmul.f32 %v2297, %v2293
        %v2299 = vmul.f32 %v2297, %v2295
        %v2300 = vadd.f32 %v2282, %v2298
        %v2301 = vadd.f32 %v2283, %v2299
        %s2302 = sld [smem:[#allocation2 + $0x14a]]
        %v2303 = vstv %s2302
        %v2304 = vmul.f32 %v2303, %v2293
        %v2305 = vmul.f32 %v2303, %v2295
        %v2306 = vadd.f32 %v2288, %v2304
        %v2307 = vadd.f32 %v2289, %v2305
        %2308 = vrot.lane.b32.xlu0 %v2290, 126
        %v2309 = vpop.permute.xlu0 %2308
        %2310 = vrot.lane.b32.xlu0 %v2291, 126
        %v2311 = vpop.permute.xlu0 %2310
        %s2312 = sld [smem:[#allocation2 + $0x130]]
        %v2313 = vstv %s2312
        %v2314 = vmul.f32 %v2313, %v2309
        %v2315 = vmul.f32 %v2313, %v2311
        %v2316 = vadd.f32 %v2300, %v2314
        %v2317 = vadd.f32 %v2301, %v2315
        %s2318 = sld [smem:[#allocation2 + $0x14b]]
        %v2319 = vstv %s2318
        %v2320 = vmul.f32 %v2319, %v2309
        %v2321 = vmul.f32 %v2319, %v2311
        %v2322 = vadd.f32 %v2306, %v2320
        %v2323 = vadd.f32 %v2307, %v2321
        %2324 = vrot.lane.b32.xlu0 %v2290, 125
        %v2325 = vpop.permute.xlu0 %2324
        %2326 = vrot.lane.b32.xlu0 %v2291, 125
        %v2327 = vpop.permute.xlu0 %2326
        %s2328 = sld [smem:[#allocation2 + $0x131]]
        %v2329 = vstv %s2328
        %v2330 = vmul.f32 %v2329, %v2325
        %v2331 = vmul.f32 %v2329, %v2327
        %v2332 = vadd.f32 %v2316, %v2330
        %v2333 = vadd.f32 %v2317, %v2331
        %s2334 = sld [smem:[#allocation2 + $0x14c]]
        %v2335 = vstv %s2334
        %v2336 = vmul.f32 %v2335, %v2325
        %v2337 = vmul.f32 %v2335, %v2327
        %v2338 = vadd.f32 %v2322, %v2336
        %v2339 = vadd.f32 %v2323, %v2337
        %v2340 = vld [vmem:[%s2239 + $0x3] sm:$0xff]
        %v2341 = vld [vmem:[%s2239 + $0xb] sm:$0xff]
        %2342 = vrot.lane.b32.xlu0 %v2340, 127
        %v2343 = vpop.permute.xlu0 %2342
        %2344 = vrot.lane.b32.xlu0 %v2341, 127
        %v2345 = vpop.permute.xlu0 %2344
        %s2346 = sld [smem:[#allocation2 + $0x132]]
        %v2347 = vstv %s2346
        %v2348 = vmul.f32 %v2347, %v2343
        %v2349 = vmul.f32 %v2347, %v2345
        %v2350 = vadd.f32 %v2332, %v2348
        %v2351 = vadd.f32 %v2333, %v2349
        %s2352 = sld [smem:[#allocation2 + $0x14d]]
        %v2353 = vstv %s2352
        %v2354 = vmul.f32 %v2353, %v2343
        %v2355 = vmul.f32 %v2353, %v2345
        %v2356 = vadd.f32 %v2338, %v2354
        %v2357 = vadd.f32 %v2339, %v2355
        %2358 = vrot.lane.b32.xlu0 %v2340, 126
        %v2359 = vpop.permute.xlu0 %2358
        %2360 = vrot.lane.b32.xlu0 %v2341, 126
        %v2361 = vpop.permute.xlu0 %2360
        %s2362 = sld [smem:[#allocation2 + $0x133]]
        %v2363 = vstv %s2362
        %v2364 = vmul.f32 %v2363, %v2359
        %v2365 = vmul.f32 %v2363, %v2361
        %v2366 = vadd.f32 %v2350, %v2364
        %v2367 = vadd.f32 %v2351, %v2365
        %s2368 = sld [smem:[#allocation2 + $0x14e]]
        %v2369 = vstv %s2368
        %v2370 = vmul.f32 %v2369, %v2359
        %v2371 = vmul.f32 %v2369, %v2361
        %v2372 = vadd.f32 %v2356, %v2370
        %v2373 = vadd.f32 %v2357, %v2371
        %2374 = vrot.lane.b32.xlu0 %v2340, 125
        %v2375 = vpop.permute.xlu0 %2374
        %2376 = vrot.lane.b32.xlu0 %v2341, 125
        %v2377 = vpop.permute.xlu0 %2376
        %s2378 = sld [smem:[#allocation2 + $0x134]]
        %v2379 = vstv %s2378
        %v2380 = vmul.f32 %v2379, %v2375
        %v2381 = vmul.f32 %v2379, %v2377
        %v2382 = vadd.f32 %v2366, %v2380
        %v2383 = vadd.f32 %v2367, %v2381
        %s2384 = sld [smem:[#allocation2 + $0x14f]]
        %v2385 = vstv %s2384
        %v2386 = vmul.f32 %v2385, %v2375
        %v2387 = vmul.f32 %v2385, %v2377
        %v2388 = vadd.f32 %v2372, %v2386
        %v2389 = vadd.f32 %v2373, %v2387
        %s2390 = scalar_lea.vmem %s155, 96
        %v2391 = vld [vmem:[%s2390 + $0x1] sm:$0xff]
        %v2392 = vld [vmem:[%s2390 + $0x9] sm:$0xff]
        %2393 = vrot.lane.b32.xlu0 %v2391, 127
        %v2394 = vpop.permute.xlu0 %2393
        %2395 = vrot.lane.b32.xlu0 %v2392, 127
        %v2396 = vpop.permute.xlu0 %2395
        %s2397 = sld [smem:[#allocation2 + $0x135]]
        %v2398 = vstv %s2397
        %v2399 = vmul.f32 %v2398, %v2394
        %v2400 = vmul.f32 %v2398, %v2396
        %v2401 = vadd.f32 %v2382, %v2399
        %v2402 = vadd.f32 %v2383, %v2400
        %s2403 = sld [smem:[#allocation2 + $0x150]]
        %v2404 = vstv %s2403
        %v2405 = vmul.f32 %v2404, %v2394
        %v2406 = vmul.f32 %v2404, %v2396
        %v2407 = vadd.f32 %v2388, %v2405
        %v2408 = vadd.f32 %v2389, %v2406
        %2409 = vrot.lane.b32.xlu0 %v2391, 126
        %v2410 = vpop.permute.xlu0 %2409
        %2411 = vrot.lane.b32.xlu0 %v2392, 126
        %v2412 = vpop.permute.xlu0 %2411
        %s2413 = sld [smem:[#allocation2 + $0x136]]
        %v2414 = vstv %s2413
        %v2415 = vmul.f32 %v2414, %v2410
        %v2416 = vmul.f32 %v2414, %v2412
        %v2417 = vadd.f32 %v2401, %v2415
        %v2418 = vadd.f32 %v2402, %v2416
        %s2419 = sld [smem:[#allocation2 + $0x151]]
        %v2420 = vstv %s2419
        %v2421 = vmul.f32 %v2420, %v2410
        %v2422 = vmul.f32 %v2420, %v2412
        %v2423 = vadd.f32 %v2407, %v2421
        %v2424 = vadd.f32 %v2408, %v2422
        %2425 = vrot.lane.b32.xlu0 %v2391, 125
        %v2426 = vpop.permute.xlu0 %2425
        %2427 = vrot.lane.b32.xlu0 %v2392, 125
        %v2428 = vpop.permute.xlu0 %2427
        %s2429 = sld [smem:[#allocation2 + $0x137]]
        %v2430 = vstv %s2429
        %v2431 = vmul.f32 %v2430, %v2426
        %v2432 = vmul.f32 %v2430, %v2428
        %v2433 = vadd.f32 %v2417, %v2431
        %v2434 = vadd.f32 %v2418, %v2432
        %s2435 = sld [smem:[#allocation2 + $0x152]]
        %v2436 = vstv %s2435
        %v2437 = vmul.f32 %v2436, %v2426
        %v2438 = vmul.f32 %v2436, %v2428
        %v2439 = vadd.f32 %v2423, %v2437
        %v2440 = vadd.f32 %v2424, %v2438
        %v2441 = vld [vmem:[%s2390 + $0x2] sm:$0xff]
        %v2442 = vld [vmem:[%s2390 + $0xa] sm:$0xff]
        %2443 = vrot.lane.b32.xlu0 %v2441, 127
        %v2444 = vpop.permute.xlu0 %2443
        %2445 = vrot.lane.b32.xlu0 %v2442, 127
        %v2446 = vpop.permute.xlu0 %2445
        %s2447 = sld [smem:[#allocation2 + $0x138]]
        %v2448 = vstv %s2447
        %v2449 = vmul.f32 %v2448, %v2444
        %v2450 = vmul.f32 %v2448, %v2446
        %v2451 = vadd.f32 %v2433, %v2449
        %v2452 = vadd.f32 %v2434, %v2450
        %s2453 = sld [smem:[#allocation2 + $0x153]]
        %v2454 = vstv %s2453
        %v2455 = vmul.f32 %v2454, %v2444
        %v2456 = vmul.f32 %v2454, %v2446
        %v2457 = vadd.f32 %v2439, %v2455
        %v2458 = vadd.f32 %v2440, %v2456
        %2459 = vrot.lane.b32.xlu0 %v2441, 126
        %v2460 = vpop.permute.xlu0 %2459
        %2461 = vrot.lane.b32.xlu0 %v2442, 126
        %v2462 = vpop.permute.xlu0 %2461
        %s2463 = sld [smem:[#allocation2 + $0x139]]
        %v2464 = vstv %s2463
        %v2465 = vmul.f32 %v2464, %v2460
        %v2466 = vmul.f32 %v2464, %v2462
        %v2467 = vadd.f32 %v2451, %v2465
        %v2468 = vadd.f32 %v2452, %v2466
        %s2469 = sld [smem:[#allocation2 + $0x154]]
        %v2470 = vstv %s2469
        %v2471 = vmul.f32 %v2470, %v2460
        %v2472 = vmul.f32 %v2470, %v2462
        %v2473 = vadd.f32 %v2457, %v2471
        %v2474 = vadd.f32 %v2458, %v2472
        %2475 = vrot.lane.b32.xlu0 %v2441, 125
        %v2476 = vpop.permute.xlu0 %2475
        %2477 = vrot.lane.b32.xlu0 %v2442, 125
        %v2478 = vpop.permute.xlu0 %2477
        %s2479 = sld [smem:[#allocation2 + $0x13a]]
        %v2480 = vstv %s2479
        %v2481 = vmul.f32 %v2480, %v2476
        %v2482 = vmul.f32 %v2480, %v2478
        %v2483 = vadd.f32 %v2467, %v2481
        %v2484 = vadd.f32 %v2468, %v2482
        %s2485 = sld [smem:[#allocation2 + $0x155]]
        %v2486 = vstv %s2485
        %v2487 = vmul.f32 %v2486, %v2476
        %v2488 = vmul.f32 %v2486, %v2478
        %v2489 = vadd.f32 %v2473, %v2487
        %v2490 = vadd.f32 %v2474, %v2488
        %v2491 = vld [vmem:[%s2390 + $0x3] sm:$0xff]
        %v2492 = vld [vmem:[%s2390 + $0xb] sm:$0xff]
        %2493 = vrot.lane.b32.xlu0 %v2491, 127
        %v2494 = vpop.permute.xlu0 %2493
        %2495 = vrot.lane.b32.xlu0 %v2492, 127
        %v2496 = vpop.permute.xlu0 %2495
        %s2497 = sld [smem:[#allocation2 + $0x13b]]
        %v2498 = vstv %s2497
        %v2499 = vmul.f32 %v2498, %v2494
        %v2500 = vmul.f32 %v2498, %v2496
        %v2501 = vadd.f32 %v2483, %v2499
        %v2502 = vadd.f32 %v2484, %v2500
        %s2503 = sld [smem:[#allocation2 + $0x156]]
        %v2504 = vstv %s2503
        %v2505 = vmul.f32 %v2504, %v2494
        %v2506 = vmul.f32 %v2504, %v2496
        %v2507 = vadd.f32 %v2489, %v2505
        %v2508 = vadd.f32 %v2490, %v2506
        %2509 = vrot.lane.b32.xlu0 %v2491, 126
        %v2510 = vpop.permute.xlu0 %2509
        %2511 = vrot.lane.b32.xlu0 %v2492, 126
        %v2512 = vpop.permute.xlu0 %2511
        %s2513 = sld [smem:[#allocation2 + $0x13c]]
        %v2514 = vstv %s2513
        %v2515 = vmul.f32 %v2514, %v2510
        %v2516 = vmul.f32 %v2514, %v2512
        %v2517 = vadd.f32 %v2501, %v2515
        %v2518 = vadd.f32 %v2502, %v2516
        %s2519 = sld [smem:[#allocation2 + $0x157]]
        %v2520 = vstv %s2519
        %v2521 = vmul.f32 %v2520, %v2510
        %v2522 = vmul.f32 %v2520, %v2512
        %v2523 = vadd.f32 %v2507, %v2521
        %v2524 = vadd.f32 %v2508, %v2522
        %2525 = vrot.lane.b32.xlu0 %v2491, 125
        %v2526 = vpop.permute.xlu0 %2525
        %2527 = vrot.lane.b32.xlu0 %v2492, 125
        %v2528 = vpop.permute.xlu0 %2527
        %s2529 = sld [smem:[#allocation2 + $0x13d]]
        %v2530 = vstv %s2529
        %v2531 = vmul.f32 %v2530, %v2526
        %v2532 = vmul.f32 %v2530, %v2528
        %v2533 = vadd.f32 %v2517, %v2531
        %v2534 = vadd.f32 %v2518, %v2532
        %s2535 = sld [smem:[#allocation2 + $0x158]]
        %v2536 = vstv %s2535
        %v2537 = vmul.f32 %v2536, %v2526
        %v2538 = vmul.f32 %v2536, %v2528
        %v2539 = vadd.f32 %v2523, %v2537
        %v2540 = vadd.f32 %v2524, %v2538
        %s2541 = scalar_lea.vmem %s155, 120
        %v2542 = vld [vmem:[%s2541 + $0x1] sm:$0xff]
        %v2543 = vld [vmem:[%s2541 + $0x9] sm:$0xff]
        %2544 = vrot.lane.b32.xlu0 %v2542, 127
        %v2545 = vpop.permute.xlu0 %2544
        %2546 = vrot.lane.b32.xlu0 %v2543, 127
        %v2547 = vpop.permute.xlu0 %2546
        %s2548 = sld [smem:[#allocation2 + $0x13e]]
        %v2549 = vstv %s2548
        %v2550 = vmul.f32 %v2549, %v2545
        %v2551 = vmul.f32 %v2549, %v2547
        %v2552 = vadd.f32 %v2533, %v2550
        %v2553 = vadd.f32 %v2534, %v2551
        %s2554 = sld [smem:[#allocation2 + $0x159]]
        %v2555 = vstv %s2554
        %v2556 = vmul.f32 %v2555, %v2545
        %v2557 = vmul.f32 %v2555, %v2547
        %v2558 = vadd.f32 %v2539, %v2556
        %v2559 = vadd.f32 %v2540, %v2557
        %2560 = vrot.lane.b32.xlu0 %v2542, 126
        %v2561 = vpop.permute.xlu0 %2560
        %2562 = vrot.lane.b32.xlu0 %v2543, 126
        %v2563 = vpop.permute.xlu0 %2562
        %s2564 = sld [smem:[#allocation2 + $0x13f]]
        %v2565 = vstv %s2564
        %v2566 = vmul.f32 %v2565, %v2561
        %v2567 = vmul.f32 %v2565, %v2563
        %v2568 = vadd.f32 %v2552, %v2566
        %v2569 = vadd.f32 %v2553, %v2567
        %s2570 = sld [smem:[#allocation2 + $0x15a]]
        %v2571 = vstv %s2570
        %v2572 = vmul.f32 %v2571, %v2561
        %v2573 = vmul.f32 %v2571, %v2563
        %v2574 = vadd.f32 %v2558, %v2572
        %v2575 = vadd.f32 %v2559, %v2573
        %2576 = vrot.lane.b32.xlu0 %v2542, 125
        %v2577 = vpop.permute.xlu0 %2576
        %2578 = vrot.lane.b32.xlu0 %v2543, 125
        %v2579 = vpop.permute.xlu0 %2578
        %s2580 = sld [smem:[#allocation2 + $0x140]]
        %v2581 = vstv %s2580
        %v2582 = vmul.f32 %v2581, %v2577
        %v2583 = vmul.f32 %v2581, %v2579
        %v2584 = vadd.f32 %v2568, %v2582
        %v2585 = vadd.f32 %v2569, %v2583
        %s2586 = sld [smem:[#allocation2 + $0x15b]]
        %v2587 = vstv %s2586
        %v2588 = vmul.f32 %v2587, %v2577
        %v2589 = vmul.f32 %v2587, %v2579
        %v2590 = vadd.f32 %v2574, %v2588
        %v2591 = vadd.f32 %v2575, %v2589
        %v2592 = vld [vmem:[%s2541 + $0x2] sm:$0xff]
        %v2593 = vld [vmem:[%s2541 + $0xa] sm:$0xff]
        %2594 = vrot.lane.b32.xlu0 %v2592, 127
        %v2595 = vpop.permute.xlu0 %2594
        %2596 = vrot.lane.b32.xlu0 %v2593, 127
        %v2597 = vpop.permute.xlu0 %2596
        %s2598 = sld [smem:[#allocation2 + $0x141]]
        %v2599 = vstv %s2598
        %v2600 = vmul.f32 %v2599, %v2595
        %v2601 = vmul.f32 %v2599, %v2597
        %v2602 = vadd.f32 %v2584, %v2600
        %v2603 = vadd.f32 %v2585, %v2601
        %s2604 = sld [smem:[#allocation2 + $0x15c]]
        %v2605 = vstv %s2604
        %v2606 = vmul.f32 %v2605, %v2595
        %v2607 = vmul.f32 %v2605, %v2597
        %v2608 = vadd.f32 %v2590, %v2606
        %v2609 = vadd.f32 %v2591, %v2607
        %2610 = vrot.lane.b32.xlu0 %v2592, 126
        %v2611 = vpop.permute.xlu0 %2610
        %2612 = vrot.lane.b32.xlu0 %v2593, 126
        %v2613 = vpop.permute.xlu0 %2612
        %s2614 = sld [smem:[#allocation2 + $0x142]]
        %v2615 = vstv %s2614
        %v2616 = vmul.f32 %v2615, %v2611
        %v2617 = vmul.f32 %v2615, %v2613
        %v2618 = vadd.f32 %v2602, %v2616
        %v2619 = vadd.f32 %v2603, %v2617
        %s2620 = sld [smem:[#allocation2 + $0x15d]]
        %v2621 = vstv %s2620
        %v2622 = vmul.f32 %v2621, %v2611
        %v2623 = vmul.f32 %v2621, %v2613
        %v2624 = vadd.f32 %v2608, %v2622
        %v2625 = vadd.f32 %v2609, %v2623
        %2626 = vrot.lane.b32.xlu0 %v2592, 125
        %v2627 = vpop.permute.xlu0 %2626
        %2628 = vrot.lane.b32.xlu0 %v2593, 125
        %v2629 = vpop.permute.xlu0 %2628
        %s2630 = sld [smem:[#allocation2 + $0x143]]
        %v2631 = vstv %s2630
        %v2632 = vmul.f32 %v2631, %v2627
        %v2633 = vmul.f32 %v2631, %v2629
        %v2634 = vadd.f32 %v2618, %v2632
        %v2635 = vadd.f32 %v2619, %v2633
        %s2636 = sld [smem:[#allocation2 + $0x15e]]
        %v2637 = vstv %s2636
        %v2638 = vmul.f32 %v2637, %v2627
        %v2639 = vmul.f32 %v2637, %v2629
        %v2640 = vadd.f32 %v2624, %v2638
        %v2641 = vadd.f32 %v2625, %v2639
        %v2642 = vld [vmem:[%s2541 + $0x3] sm:$0xff]
        %v2643 = vld [vmem:[%s2541 + $0xb] sm:$0xff]
        %2644 = vrot.lane.b32.xlu0 %v2642, 127
        %v2645 = vpop.permute.xlu0 %2644
        %2646 = vrot.lane.b32.xlu0 %v2643, 127
        %v2647 = vpop.permute.xlu0 %2646
        %s2648 = sld [smem:[#allocation2 + $0x144]]
        %v2649 = vstv %s2648
        %v2650 = vmul.f32 %v2649, %v2645
        %v2651 = vmul.f32 %v2649, %v2647
        %v2652 = vadd.f32 %v2634, %v2650
        %v2653 = vadd.f32 %v2635, %v2651
        %s2654 = sld [smem:[#allocation2 + $0x15f]]
        %v2655 = vstv %s2654
        %v2656 = vmul.f32 %v2655, %v2645
        %v2657 = vmul.f32 %v2655, %v2647
        %v2658 = vadd.f32 %v2640, %v2656
        %v2659 = vadd.f32 %v2641, %v2657
        %2660 = vrot.lane.b32.xlu0 %v2642, 126
        %v2661 = vpop.permute.xlu0 %2660
        %2662 = vrot.lane.b32.xlu0 %v2643, 126
        %v2663 = vpop.permute.xlu0 %2662
        %s2664 = sld [smem:[#allocation2 + $0x145]]
        %v2665 = vstv %s2664
        %v2666 = vmul.f32 %v2665, %v2661
        %v2667 = vmul.f32 %v2665, %v2663
        %v2668 = vadd.f32 %v2652, %v2666
        %v2669 = vadd.f32 %v2653, %v2667
        %s2670 = sld [smem:[#allocation2 + $0x160]]
        %v2671 = vstv %s2670
        %v2672 = vmul.f32 %v2671, %v2661
        %v2673 = vmul.f32 %v2671, %v2663
        %v2674 = vadd.f32 %v2658, %v2672
        %v2675 = vadd.f32 %v2659, %v2673
        %2676 = vrot.lane.b32.xlu0 %v2642, 125
        %v2677 = vpop.permute.xlu0 %2676
        %2678 = vrot.lane.b32.xlu0 %v2643, 125
        %v2679 = vpop.permute.xlu0 %2678
        %s2680 = sld [smem:[#allocation2 + $0x146]]
        %v2681 = vstv %s2680
        %v2682 = vmul.f32 %v2681, %v2677
        %v2683 = vmul.f32 %v2681, %v2679
        %v2684 = vadd.f32 %v2668, %v2682
        %v2685 = vadd.f32 %v2669, %v2683
        %s2686 = sld [smem:[#allocation2 + $0x161]]
        %v2687 = vstv %s2686
        %v2688 = vmul.f32 %v2687, %v2677
        %v2689 = vmul.f32 %v2687, %v2679
        %v2690 = vadd.f32 %v2674, %v2688
        %v2691 = vadd.f32 %v2675, %v2689
        %s2692 = scalar_lea.vmem %s150, 64 [#allocation5]
        %2693 = vst [vmem:[%s2692] sm:$0xff] %v2684
        %2694 = vst [vmem:[%s2692 + $0x8] sm:$0xff] %v2685
        %s2695 = scalar_lea.vmem %s150, 80 [#allocation5]
        %2696 = vst [vmem:[%s2695] sm:$0xff] %v2690
        %2697 = vst [vmem:[%s2695 + $0x8] sm:$0xff] %v2691
        %s2698 = sand.u32 %s72, 1
        %s2699 = scalar_lea.sflag [#allocation3], %s2698
        %s2700 = sand.u32 %s72, 1
        %s2701 = smul.addr %s2700, 96
        %s2702 = scalar_lea.vmem [#allocation5], %s2701
        // Predicated region
        $region33: #{tpu_custom_call.1} parent=27 // pred_check
          %p2703 = pneg %p82
        $region34: #{tpu_custom_call.1} parent=27 // pred_check_branch
          %2705 = sbr.rel (%p2703) target = $region36
        $region35: #{tpu_custom_call.1} parent=27 // pred_region
          %s2707 = ssub.s32 1536, 1536
          %2708 = vsyncadd %s2699, %s2707
          %s2709 = smul.addr %s17, 12
          %s2710 = smul.addr %s2709, 128
          %s2711 = scalar_lea.hbm %s2, %s2710
          %s2712 = sshll.u32 %s2702, 4
          %s2713 = int_to_ptr.vmem [resolvable:$true] %s2712
          %2718 = dma.vmem_to_hbm [thread:$0]  %s2713, 1536, %s2711, %s2699, 128, 128, 8
        $region36: #{tpu_custom_call.1} parent=27 // pred_fallthru
          _
      $region28: #{tpu_custom_call.1} parent=5 // pred_fallthru
        _
      %p2719 = scmp.le.s32.totalorder 2, %s12
      // Predicated region
      $region37: #{tpu_custom_call.1} parent=5 // pred_check
        %p2720 = pneg %p2719
      $region38: #{tpu_custom_call.1} parent=5 // pred_check_branch
        %2722 = sbr.rel (%p2720) target = $region40
      $region39: #{tpu_custom_call.1} parent=5 // pred_region
        %s2723 = ssub.s32 %s12, 2
        // Predicated region
        $region41: #{tpu_custom_call.1} parent=39 // pred_check
          %p2724 = pneg %p88
        $region42: #{tpu_custom_call.1} parent=39 // pred_check_branch
          %2726 = sbr.rel (%p2724) target = $region44
        $region43: #{tpu_custom_call.1} parent=39 // pred_region
          %s2727 = sand.u32 %s73, 1
          %s2728 = scalar_lea.sflag [#allocation3], %s2727
          %s2729 = sand.u32 %s73, 1
          %s2730 = smul.addr %s2729, 96
          %s2731 = scalar_lea.vmem [#allocation5], %s2730
          %2732 = dma.done %s2728, 1536
        $region44: #{tpu_custom_call.1} parent=39 // pred_fallthru
          _
      $region40: #{tpu_custom_call.1} parent=5 // pred_fallthru
        _
    $region6: #{tpu_custom_call.1} parent=1 // loop_footer
      %s16 = sadd.s32 1, %s12
    $region7: #{tpu_custom_call.1} parent=1 // loop_footer_branch
      %11 = sbr.rel target = $region3
    $region8: #{tpu_custom_call.1} parent=1 // loop_exit
      _
    %2733 = vsyncpa [#allocation3], 1
    %s2734 = scalar_lea.sflag [#allocation3], 1
    %2735 = vsyncpa %s2734, 1
    %2736 = vsyncpa [#allocation4], 1
    %s2737 = scalar_lea.sflag [#allocation4], 1
    %2738 = vsyncpa %s2737, 1

</llo_original>
